<compile_context>
chip_gen: v7x
topology: tpu7x:2x2x1
jax: 0.10.0
libtpu: 0.0.40
codegen_flags: <defaults>
</compile_context>

<pallas_src>
import math

import jax
import jax.numpy as jnp
import numpy as np
from jax import lax
from jax.experimental import pallas as pl
from jax.experimental.pallas import tpu as pltpu


# ----------------------------------------------------------------------------
# Kernel 1: multi-part projection   out[d] = sum_p x[p] @ w[p, d] + b[d]
#
# Used for the per-layer input projection (P input parts = 1 for the raw input
# layer, 2 for the fwd/bwd halves of a previous layer's output; D = 2 output
# directions) and for the final Linear (P = 2, D = 1).
# ----------------------------------------------------------------------------
def proj_kernel(x_ref, w_ref, b_ref, o_ref):
    # x_ref: (P, rt, F) bf16 | w_ref: (P, F, O) bf16 (output-direction squeezed)
    # b_ref: (1, O) f32      | o_ref: (rt, O)
    acc = jnp.dot(x_ref[0], w_ref[0], preferred_element_type=jnp.float32)
    for p in range(1, x_ref.shape[0]):
        acc = acc + jnp.dot(x_ref[p], w_ref[p], preferred_element_type=jnp.float32)
    o_ref[...] = (acc + b_ref[...]).astype(o_ref.dtype)


def proj(x_parts, w, b, *, out_dtype, row_tile=512):
    """x_parts: (P, N, F), w: (P, D, F, O), b: (D, 1, O)  ->  (D, N, O)."""
    P, N, F = x_parts.shape
    D, O = w.shape[1], w.shape[3]
    rt = min(row_tile, N)
    grid = (D, pl.cdiv(N, rt))          # rows innermost: x block reused per d
    return pl.pallas_call(
        proj_kernel,
        out_shape=jax.ShapeDtypeStruct((D, N, O), out_dtype),
        grid=grid,
        in_specs=[
            pl.BlockSpec((P, rt, F), lambda d, i: (0, i, 0)),
            pl.BlockSpec((P, None, F, O), lambda d, i: (0, d, 0, 0)),
            pl.BlockSpec((None, 1, O), lambda d, i: (d, 0, 0)),
        ],
        out_specs=pl.BlockSpec((None, rt, O), lambda d, i: (d, i, 0)),
        compiler_params=pltpu.CompilerParams(
            dimension_semantics=("parallel", "parallel"),
            vmem_limit_bytes=64 * 1024 * 1024,
        ),
    )(x_parts, w, b)


# ----------------------------------------------------------------------------
# Kernel 2: single-direction GRU recurrence over the full sequence.
# Grid axis 0 = direction (parallel): on v7x the two directions land on the
# two TensorCores; the backward direction simply walks time T-1 .. 0.
# ----------------------------------------------------------------------------
def gru_recurrence_kernel(ig_ref, whh_ref, bhn_ref, out_ref):
    # ig_ref : (T, B, 3H) bf16  precomputed input gates [r|z|n]; r/z lanes
    #                           already hold b_ih + b_hh, n lanes hold b_in.
    # whh_ref: (H, 3H) f32      recurrent weights [W_hr | W_hz | W_hn].
    # bhn_ref: (1, H)  f32      b_hn (stays inside the loop, scaled by r).
    # out_ref: (T, B, H)        hidden state at every timestep.
    T, B, G3 = ig_ref.shape
    H = G3 // 3
    d = pl.program_id(0)            # 0 = forward, 1 = backward
    whh = whh_ref[...]              # hoisted: loaded once, not per step
    bhn = bhn_ref[...]
    base = d * (T - 1)              # first time index for this direction
    sign = 1 - 2 * d                # +1 (fwd) / -1 (bwd)

    def step(t, h):                 # h: (B, H) f32 carried state
        idx = base + sign * t
        ig = ig_ref[idx].astype(jnp.float32)                          # (B, 3H)
        hg = jnp.dot(h, whh, preferred_element_type=jnp.float32)      # (B, 3H)
        r = jax.nn.sigmoid(ig[:, 0:H] + hg[:, 0:H])
        z = jax.nn.sigmoid(ig[:, H:2 * H] + hg[:, H:2 * H])
        # b_hn only touches the n-gate lanes (kept off the r/z path).
        n = jnp.tanh(ig[:, 2 * H:] + r * (hg[:, 2 * H:] + bhn))
        h_new = (1.0 - z) * n + z * h
        out_ref[idx] = h_new.astype(out_ref.dtype)
        return h_new

    h0 = jnp.zeros((B, H), jnp.float32)
    if T <= 16:
        # Small sequences: full static unroll for scheduler visibility.
        h = h0
        for t in range(T):
            h = step(t, h)
    else:
        lax.fori_loop(0, T, step, h0, unroll=8)


def birnn_recurrence(ig, whh, bhn, *, out_dtype=jnp.bfloat16):
    """ig: (2,T,B,3H), whh: (2,H,3H), bhn: (2,1,H)  ->  (2,T,B,H)."""
    _, T, B, G3 = ig.shape
    H = G3 // 3
    return pl.pallas_call(
        gru_recurrence_kernel,
        out_shape=jax.ShapeDtypeStruct((2, T, B, H), out_dtype),
        grid=(2,),
        in_specs=[
            pl.BlockSpec((None, T, B, G3), lambda d: (d, 0, 0, 0)),
            pl.BlockSpec((None, H, G3), lambda d: (d, 0, 0)),
            pl.BlockSpec((None, 1, H), lambda d: (d, 0, 0)),
        ],
        out_specs=pl.BlockSpec((None, T, B, H), lambda d: (d, 0, 0, 0)),
        compiler_params=pltpu.CompilerParams(
            dimension_semantics=("parallel",),
            vmem_limit_bytes=64 * 1024 * 1024,
        ),
    )(ig, whh, bhn)


# ----------------------------------------------------------------------------
# Parameter packing (plain JAX, cheap, done per forward call)
# ----------------------------------------------------------------------------
def pack_layer(layer, num_in_parts):
    """Direction-major, gate-fused ([r|z|n]) packing of one GRU layer.

    Returns:
      w_proj: (P, 2, In/P, 3H) bf16 — input projection weights per part / dir
      b_proj: (2, 1, 3H) f32        — r,z lanes: b_ih + b_hh; n lanes: b_in
      whh   : (2, H, 3H) f32        — recurrent weights per direction
      bhn   : (2, 1, H)  f32        — b_hn per direction
    """
    dirs = (layer["fwd"], layer["bwd"])
    H = dirs[0][1].shape[-1]
    In = dirs[0][0].shape[1]
    P = num_in_parts
    Fp = In // P

    w_proj = jnp.stack([
        jnp.stack([
            jnp.concatenate([wih[g][p * Fp:(p + 1) * Fp] for g in range(3)], axis=1)
            for (wih, _, _, _) in dirs
        ], axis=0)
        for p in range(P)
    ], axis=0).astype(jnp.bfloat16)                                  # (P,2,Fp,3H)

    b_proj = jnp.stack([
        jnp.concatenate([bih[0] + bhh[0], bih[1] + bhh[1], bih[2]])
        for (_, _, bih, bhh) in dirs
    ], axis=0).reshape(2, 1, 3 * H).astype(jnp.float32)

    whh_p = jnp.stack([
        jnp.concatenate([whh[0], whh[1], whh[2]], axis=1)
        for (_, whh, _, _) in dirs
    ], axis=0).astype(jnp.float32)                                   # (2,H,3H)

    bhn = jnp.stack([bhh[2] for (_, _, _, bhh) in dirs], axis=0
                    ).reshape(2, 1, H).astype(jnp.float32)
    return w_proj, b_proj, whh_p, bhn


def pack_linear(W, b, H):
    """W: (2H, O), b: (1, O) -> w: (2, 1, H, O) bf16, b: (1, 1, O) f32."""
    w = jnp.stack([W[0:H], W[H:2 * H]], axis=0)[:, None].astype(jnp.bfloat16)
    return w, b.reshape(1, 1, -1).astype(jnp.float32)


# ----------------------------------------------------------------------------
# Forward pass (matches RealGRU.forward): (B, input_size, S) -> (B, out, S)
# ----------------------------------------------------------------------------
def real_gru_forward(x, params, *, row_tile=512):
    B, C, S = x.shape
    T, N = S, S * B
    # (B, C, S) -> (T, B, C) -> (1, T*B, C); bf16 operands for the MXU.
    h = jnp.transpose(x, (2, 0, 1)).astype(jnp.bfloat16).reshape(1, N, C)

    for layer in params["gru"]:
        P = h.shape[0]
        w_proj, b_proj, whh, bhn = pack_layer(layer, P)
        H = whh.shape[1]
        # One lane-dense projection over all timesteps for both directions.
        ig = proj(h, w_proj, b_proj, out_dtype=jnp.bfloat16,
                  row_tile=row_tile)                                  # (2,N,3H)
        # Serial recurrence: fwd / bwd split over the grid (2 TCs on v7x).
        out = birnn_recurrence(ig.reshape(2, T, B, 3 * H), whh, bhn)  # (2,T,B,H)
        h = out.reshape(2, N, H)

    W, b = params["linear"]
    H = h.shape[-1]
    w_lin, b_lin = pack_linear(W, b, H)
    y = proj(h, w_lin, b_lin, out_dtype=jnp.float32,
             row_tile=row_tile)                                       # (1,N,O)
    return jnp.transpose(y.reshape(T, B, -1), (1, 2, 0))              # (B,O,S)


# ----------------------------------------------------------------------------
# Deterministic parameter init (PyTorch-style uniform(-1/sqrt(fan), 1/sqrt(fan)))
# ----------------------------------------------------------------------------
def init_params(key, input_size, output_size, num_layers):
    H = input_size // 2
    kg = 1.0 / math.sqrt(H)
    layers = []
    for _ in range(num_layers):
        layer = {}
        for d in ("fwd", "bwd"):
            key, k1, k2, k3, k4 = jax.random.split(key, 5)
            layer[d] = (
                jax.random.uniform(k1, (3, input_size, H), jnp.float32, -kg, kg),
                jax.random.uniform(k2, (3, H, H), jnp.float32, -kg, kg),
                jax.random.uniform(k3, (3, H), jnp.float32, -kg, kg),
                jax.random.uniform(k4, (3, H), jnp.float32, -kg, kg),
            )
        layers.append(layer)
    key, kw, kb = jax.random.split(key, 3)
    kl = 1.0 / math.sqrt(input_size)
    W = jax.random.uniform(kw, (input_size, output_size), jnp.float32, -kl, kl)
    b = jax.random.uniform(kb, (1, output_size), jnp.float32, -kl, kl)
    return {"gru": layers, "linear": (W, b)}


# ----------------------------------------------------------------------------
# Pure-JAX f32 reference (PyTorch GRU semantics) for correctness check
# ----------------------------------------------------------------------------
def _gru_dir_ref(x_seq, wih, whh, bih, bhh):
    B = x_seq.shape[1]
    H = whh.shape[-1]

    def step(h, x_t):
        i_r = x_t @ wih[0] + bih[0]
        i_z = x_t @ wih[1] + bih[1]
        i_n = x_t @ wih[2] + bih[2]
        h_r = h @ whh[0] + bhh[0]
        h_z = h @ whh[1] + bhh[1]
        h_n = h @ whh[2] + bhh[2]
        r = jax.nn.sigmoid(i_r + h_r)
        z = jax.nn.sigmoid(i_z + h_z)
        n = jnp.tanh(i_n + r * h_n)
        h_new = (1.0 - z) * n + z * h
        return h_new, h_new

    _, hs = lax.scan(step, jnp.zeros((B, H), jnp.float32), x_seq)
    return hs


def real_gru_reference(x, params):
    B, C, S = x.shape
    h = jnp.transpose(x, (2, 0, 1)).astype(jnp.float32)
    for layer in params["gru"]:
        fwd = _gru_dir_ref(h, *layer["fwd"])
        bwd = jnp.flip(_gru_dir_ref(jnp.flip(h, axis=0), *layer["bwd"]), axis=0)
        h = jnp.concatenate([fwd, bwd], axis=-1)
    W, b = params["linear"]
    out = (h.reshape(S * B, -1) @ W + b).reshape(S, B, -1)
    return jnp.transpose(out, (1, 2, 0))


# ----------------------------------------------------------------------------
if __name__ == "__main__":
    input_size, output_size, num_layers = 16, 8, 2

    key = jax.random.PRNGKey(0)
    key, kx1, kx2 = jax.random.split(key, 3)
    params = init_params(key, input_size, output_size, num_layers)

    # Case 1: small shapes -> fully unrolled recurrence, single row tile.
    x1 = jax.random.normal(kx1, (2, input_size, 16), jnp.float32)
    # Case 2: longer sequence -> fori_loop recurrence path; row_tile=64 with
    # N = 3*72 = 216 exercises the multi-tile + partial-boundary matmul path.
    x2 = jax.random.normal(kx2, (3, input_size, 72), jnp.float32)

    fwd1 = jax.jit(lambda x, p: real_gru_forward(x, p, row_tile=512))
    fwd2 = jax.jit(lambda x, p: real_gru_forward(x, p, row_tile=64))

    for x, fwd in ((x1, fwd1), (x2, fwd2)):
        out = jax.block_until_ready(fwd(x, params))
        ref = jax.block_until_ready(real_gru_reference(x, params))
        assert out.shape == ref.shape, (out.shape, ref.shape)
        # bf16 operands / bf16 ig storage (f32 accumulation) => relaxed tol.
        np.testing.assert_allclose(np.asarray(out), np.asarray(ref),
                                   atol=3e-2, rtol=3e-2)

    print("KERNEL_OK")
</pallas_src>

<mosaic_0001>
module attributes {stable_mosaic.version = 11 : i64} {
  func.func @proj_kernel(%arg0: i32, %arg1: i32, %arg2: memref<1x32x16xbf16, #tpu.memory_space<vmem>>, %arg3: memref<1x1x16x24xbf16, #tpu.memory_space<vmem>>, %arg4: memref<1x1x24xf32, #tpu.memory_space<vmem>>, %arg5: memref<1x32x24xbf16, #tpu.memory_space<vmem>>) attributes {dimension_semantics = [#tpu.dimension_semantics<parallel>, #tpu.dimension_semantics<parallel>], iteration_bounds = array<i64: 2, 1>, scalar_prefetch = 0 : i64, scratch_operands = 0 : i64, tpu.core_type = #tpu.core_type<tc>, window_params = [{transform_indices = @transform_0, window_bounds = array<i64: 1, 32, 16>}, {transform_indices = @transform_1, window_bounds = array<i64: 1, 1, 16, 24>}, {transform_indices = @transform_2, window_bounds = array<i64: 1, 1, 24>}, {transform_indices = @transform_3, window_bounds = array<i64: 1, 32, 24>}]} {
    %c0 = arith.constant 0 : index
    %c0_0 = arith.constant 0 : index
    %c0_1 = arith.constant 0 : index
    %0 = vector.load %arg2[%c0, %c0_0, %c0_1] : memref<1x32x16xbf16, #tpu.memory_space<vmem>>, vector<1x32x16xbf16>
    %1 = vector.shape_cast %0 : vector<1x32x16xbf16> to vector<32x16xbf16>
    %c0_2 = arith.constant 0 : index
    %c0_3 = arith.constant 0 : index
    %c0_4 = arith.constant 0 : index
    %c0_5 = arith.constant 0 : index
    %2 = vector.load %arg3[%c0_2, %c0_3, %c0_4, %c0_5] : memref<1x1x16x24xbf16, #tpu.memory_space<vmem>>, vector<1x1x16x24xbf16>
    %3 = vector.shape_cast %2 : vector<1x1x16x24xbf16> to vector<16x24xbf16>
    %cst = arith.constant dense<0.000000e+00> : vector<32x24xf32>
    %4 = tpu.matmul %1, %3, %cst {dimension_numbers = #tpu.dot_dimension_numbers<[1], [0], [0], [1], [0, 0, 1, 1], [], []>} : vector<32x16xbf16>, vector<16x24xbf16>, vector<32x24xf32> -> vector<32x24xf32>
    %c0_6 = arith.constant 0 : index
    %c0_7 = arith.constant 0 : index
    %c0_8 = arith.constant 0 : index
    %5 = vector.load %arg4[%c0_6, %c0_7, %c0_8] : memref<1x1x24xf32, #tpu.memory_space<vmem>>, vector<1x1x24xf32>
    %6 = vector.shape_cast %5 : vector<1x1x24xf32> to vector<1x24xf32>
    %7 = vector.broadcast %6 : vector<1x24xf32> to vector<32x24xf32>
    %8 = arith.addf %4, %7 : vector<32x24xf32>
    %9 = arith.truncf %8 : vector<32x24xf32> to vector<32x24xbf16>
    %c0_9 = arith.constant 0 : index
    %c0_10 = arith.constant 0 : index
    %c0_11 = arith.constant 0 : index
    %10 = vector.load %arg5[%c0_9, %c0_10, %c0_11] : memref<1x32x24xbf16, #tpu.memory_space<vmem>>, vector<1x32x24xbf16>
    %11 = vector.shape_cast %10 : vector<1x32x24xbf16> to vector<32x24xbf16>
    %12 = vector.shape_cast %9 : vector<32x24xbf16> to vector<1x32x24xbf16>
    tpu.vector_store %arg5[%c0_9, %c0_10, %c0_11], %12 {strides = array<i32>} : memref<1x32x24xbf16, #tpu.memory_space<vmem>>, vector<1x32x24xbf16>,
    return
  }
  func.func @transform_0(%arg0: i32, %arg1: i32) -> (i32, i32, i32) {
    %c0_i32 = arith.constant 0 : i32
    %c0_i32_0 = arith.constant 0 : i32
    %c0_i32_1 = arith.constant 0 : i32
    return %c0_i32, %arg1, %c0_i32_0 : i32, i32, i32
  }
  func.func @transform_1(%arg0: i32, %arg1: i32) -> (i32, i32, i32, i32) {
    %c0_i32 = arith.constant 0 : i32
    %c0_i32_0 = arith.constant 0 : i32
    %c0_i32_1 = arith.constant 0 : i32
    %c0_i32_2 = arith.constant 0 : i32
    return %c0_i32, %arg0, %c0_i32_0, %c0_i32_1 : i32, i32, i32, i32
  }
  func.func @transform_2(%arg0: i32, %arg1: i32) -> (i32, i32, i32) {
    %c0_i32 = arith.constant 0 : i32
    %c0_i32_0 = arith.constant 0 : i32
    %c0_i32_1 = arith.constant 0 : i32
    return %arg0, %c0_i32, %c0_i32_0 : i32, i32, i32
  }
  func.func @transform_3(%arg0: i32, %arg1: i32) -> (i32, i32, i32) {
    %c0_i32 = arith.constant 0 : i32
    %c0_i32_0 = arith.constant 0 : i32
    return %arg0, %arg1, %c0_i32 : i32, i32, i32
  }
}

module attributes {stable_mosaic.version = 11 : i64} {
  func.func @gru_recurrence_kernel(%arg0: i32, %arg1: memref<1x16x2x24xbf16, #tpu.memory_space<vmem>>, %arg2: memref<1x8x24xf32, #tpu.memory_space<vmem>>, %arg3: memref<1x1x8xf32, #tpu.memory_space<vmem>>, %arg4: memref<1x16x2x8xbf16, #tpu.memory_space<vmem>>) attributes {dimension_semantics = [#tpu.dimension_semantics<parallel>], iteration_bounds = array<i64: 2>, scalar_prefetch = 0 : i64, scratch_operands = 0 : i64, tpu.core_type = #tpu.core_type<tc>, window_params = [{transform_indices = @transform_0, window_bounds = array<i64: 1, 16, 2, 24>}, {transform_indices = @transform_1, window_bounds = array<i64: 1, 8, 24>}, {transform_indices = @transform_2, window_bounds = array<i64: 1, 1, 8>}, {transform_indices = @transform_3, window_bounds = array<i64: 1, 16, 2, 8>}]} {
    %c0 = arith.constant 0 : index
    %c0_0 = arith.constant 0 : index
    %c0_1 = arith.constant 0 : index
    %0 = vector.load %arg2[%c0, %c0_0, %c0_1] : memref<1x8x24xf32, #tpu.memory_space<vmem>>, vector<1x8x24xf32>
    %1 = vector.shape_cast %0 : vector<1x8x24xf32> to vector<8x24xf32>
    %c0_2 = arith.constant 0 : index
    %c0_3 = arith.constant 0 : index
    %c0_4 = arith.constant 0 : index
    %2 = vector.load %arg3[%c0_2, %c0_3, %c0_4] : memref<1x1x8xf32, #tpu.memory_space<vmem>>, vector<1x1x8xf32>
    %3 = vector.shape_cast %2 : vector<1x1x8xf32> to vector<1x8xf32>
    %c15_i32 = arith.constant 15 : i32
    %4 = arith.muli %arg0, %c15_i32 : i32
    %c2_i32 = arith.constant 2 : i32
    %5 = arith.muli %c2_i32, %arg0 : i32
    %c1_i32 = arith.constant 1 : i32
    %6 = arith.subi %c1_i32, %5 : i32
    %cst = arith.constant 0.000000e+00 : f32
    %7 = vector.broadcast %cst : f32 to vector<2x8xf32>
    %c0_i32 = arith.constant 0 : i32
    %8 = arith.muli %6, %c0_i32 : i32
    %9 = arith.addi %4, %8 : i32
    %c0_5 = arith.constant 0 : index
    %10 = arith.index_cast %9 : i32 to index
    %c0_6 = arith.constant 0 : index
    %c0_7 = arith.constant 0 : index
    %11 = vector.load %arg1[%c0_5, %10, %c0_6, %c0_7] : memref<1x16x2x24xbf16, #tpu.memory_space<vmem>>, vector<1x1x2x24xbf16>
    %12 = vector.shape_cast %11 : vector<1x1x2x24xbf16> to vector<2x24xbf16>
    %13 = arith.extf %12 : vector<2x24xbf16> to vector<2x24xf32>
    %cst_8 = arith.constant dense<0.000000e+00> : vector<2x24xf32>
    %14 = tpu.matmul %7, %1, %cst_8 {dimension_numbers = #tpu.dot_dimension_numbers<[1], [0], [0], [1], [0, 0, 1, 1], [], []>} : vector<2x8xf32>, vector<8x24xf32>, vector<2x24xf32> -> vector<2x24xf32>
    %15 = vector.extract_strided_slice %13 {offsets = [0, 0], sizes = [2, 8], strides = [1, 1]} : vector<2x24xf32> to vector<2x8xf32>
    %16 = vector.extract_strided_slice %14 {offsets = [0, 0], sizes = [2, 8], strides = [1, 1]} : vector<2x24xf32> to vector<2x8xf32>
    %17 = arith.addf %15, %16 : vector<2x8xf32>
    %18 = arith.negf %17 : vector<2x8xf32>
    %19 = math.exp %18 : vector<2x8xf32>
    %cst_9 = arith.constant 1.000000e+00 : f32
    %20 = vector.broadcast %cst_9 : f32 to vector<2x8xf32>
    %21 = arith.addf %20, %19 : vector<2x8xf32>
    %22 = arith.divf %20, %21 : vector<2x8xf32>
    %23 = vector.extract_strided_slice %13 {offsets = [0, 8], sizes = [2, 8], strides = [1, 1]} : vector<2x24xf32> to vector<2x8xf32>
    %24 = vector.extract_strided_slice %14 {offsets = [0, 8], sizes = [2, 8], strides = [1, 1]} : vector<2x24xf32> to vector<2x8xf32>
    %25 = arith.addf %23, %24 : vector<2x8xf32>
    %26 = arith.negf %25 : vector<2x8xf32>
    %27 = math.exp %26 : vector<2x8xf32>
    %cst_10 = arith.constant 1.000000e+00 : f32
    %28 = vector.broadcast %cst_10 : f32 to vector<2x8xf32>
    %29 = arith.addf %28, %27 : vector<2x8xf32>
    %30 = arith.divf %28, %29 : vector<2x8xf32>
    %31 = vector.extract_strided_slice %13 {offsets = [0, 16], sizes = [2, 8], strides = [1, 1]} : vector<2x24xf32> to vector<2x8xf32>
    %32 = vector.extract_strided_slice %14 {offsets = [0, 16], sizes = [2, 8], strides = [1, 1]} : vector<2x24xf32> to vector<2x8xf32>
    %33 = vector.broadcast %3 : vector<1x8xf32> to vector<2x8xf32>
    %34 = arith.addf %32, %33 : vector<2x8xf32>
    %35 = arith.mulf %22, %34 : vector<2x8xf32>
    %36 = arith.addf %31, %35 : vector<2x8xf32>
    %37 = math.tanh %36 : vector<2x8xf32>
    %cst_11 = arith.constant 1.000000e+00 : f32
    %38 = vector.broadcast %cst_11 : f32 to vector<2x8xf32>
    %39 = arith.subf %38, %30 : vector<2x8xf32>
    %40 = arith.mulf %39, %37 : vector<2x8xf32>
    %41 = arith.mulf %30, %7 : vector<2x8xf32>
    %42 = arith.addf %40, %41 : vector<2x8xf32>
    %43 = arith.truncf %42 : vector<2x8xf32> to vector<2x8xbf16>
    %c0_12 = arith.constant 0 : index
    %44 = arith.index_cast %9 : i32 to index
    %c0_13 = arith.constant 0 : index
    %c0_14 = arith.constant 0 : index
    %45 = vector.load %arg4[%c0_12, %44, %c0_13, %c0_14] : memref<1x16x2x8xbf16, #tpu.memory_space<vmem>>, vector<1x1x2x8xbf16>
    %46 = vector.shape_cast %45 : vector<1x1x2x8xbf16> to vector<2x8xbf16>
    %47 = vector.shape_cast %43 : vector<2x8xbf16> to vector<1x1x2x8xbf16>
    tpu.vector_store %arg4[%c0_12, %44, %c0_13, %c0_14], %47 {strides = array<i32>} : memref<1x16x2x8xbf16, #tpu.memory_space<vmem>>, vector<1x1x2x8xbf16>,
    %c1_i32_15 = arith.constant 1 : i32
    %48 = arith.muli %6, %c1_i32_15 : i32
    %49 = arith.addi %4, %48 : i32
    %c0_16 = arith.constant 0 : index
    %50 = arith.index_cast %49 : i32 to index
    %c0_17 = arith.constant 0 : index
    %c0_18 = arith.constant 0 : index
    %51 = vector.load %arg1[%c0_16, %50, %c0_17, %c0_18] : memref<1x16x2x24xbf16, #tpu.memory_space<vmem>>, vector<1x1x2x24xbf16>
    %52 = vector.shape_cast %51 : vector<1x1x2x24xbf16> to vector<2x24xbf16>
    %53 = arith.extf %52 : vector<2x24xbf16> to vector<2x24xf32>
    %cst_19 = arith.constant dense<0.000000e+00> : vector<2x24xf32>
    %54 = tpu.matmul %42, %1, %cst_19 {dimension_numbers = #tpu.dot_dimension_numbers<[1], [0], [0], [1], [0, 0, 1, 1], [], []>} : vector<2x8xf32>, vector<8x24xf32>, vector<2x24xf32> -> vector<2x24xf32>
    %55 = vector.extract_strided_slice %53 {offsets = [0, 0], sizes = [2, 8], strides = [1, 1]} : vector<2x24xf32> to vector<2x8xf32>
    %56 = vector.extract_strided_slice %54 {offsets = [0, 0], sizes = [2, 8], strides = [1, 1]} : vector<2x24xf32> to vector<2x8xf32>
    %57 = arith.addf %55, %56 : vector<2x8xf32>
    %58 = arith.negf %57 : vector<2x8xf32>
    %59 = math.exp %58 : vector<2x8xf32>
    %cst_20 = arith.constant 1.000000e+00 : f32
    %60 = vector.broadcast %cst_20 : f32 to vector<2x8xf32>
    %61 = arith.addf %60, %59 : vector<2x8xf32>
    %62 = arith.divf %60, %61 : vector<2x8xf32>
    %63 = vector.extract_strided_slice %53 {offsets = [0, 8], sizes = [2, 8], strides = [1, 1]} : vector<2x24xf32> to vector<2x8xf32>
    %64 = vector.extract_strided_slice %54 {offsets = [0, 8], sizes = [2, 8], strides = [1, 1]} : vector<2x24xf32> to vector<2x8xf32>
    %65 = arith.addf %63, %64 : vector<2x8xf32>
    %66 = arith.negf %65 : vector<2x8xf32>
    %67 = math.exp %66 : vector<2x8xf32>
    %cst_21 = arith.constant 1.000000e+00 : f32
    %68 = vector.broadcast %cst_21 : f32 to vector<2x8xf32>
    %69 = arith.addf %68, %67 : vector<2x8xf32>
    %70 = arith.divf %68, %69 : vector<2x8xf32>
    %71 = vector.extract_strided_slice %53 {offsets = [0, 16], sizes = [2, 8], strides = [1, 1]} : vector<2x24xf32> to vector<2x8xf32>
    %72 = vector.extract_strided_slice %54 {offsets = [0, 16], sizes = [2, 8], strides = [1, 1]} : vector<2x24xf32> to vector<2x8xf32>
    %73 = vector.broadcast %3 : vector<1x8xf32> to vector<2x8xf32>
    %74 = arith.addf %72, %73 : vector<2x8xf32>
    %75 = arith.mulf %62, %74 : vector<2x8xf32>
    %76 = arith.addf %71, %75 : vector<2x8xf32>
    %77 = math.tanh %76 : vector<2x8xf32>
    %cst_22 = arith.constant 1.000000e+00 : f32
    %78 = vector.broadcast %cst_22 : f32 to vector<2x8xf32>
    %79 = arith.subf %78, %70 : vector<2x8xf32>
    %80 = arith.mulf %79, %77 : vector<2x8xf32>
    %81 = arith.mulf %70, %42 : vector<2x8xf32>
    %82 = arith.addf %80, %81 : vector<2x8xf32>
    %83 = arith.truncf %82 : vector<2x8xf32> to vector<2x8xbf16>
    %c0_23 = arith.constant 0 : index
    %84 = arith.index_cast %49 : i32 to index
    %c0_24 = arith.constant 0 : index
    %c0_25 = arith.constant 0 : index
    %85 = vector.load %arg4[%c0_23, %84, %c0_24, %c0_25] : memref<1x16x2x8xbf16, #tpu.memory_space<vmem>>, vector<1x1x2x8xbf16>
    %86 = vector.shape_cast %85 : vector<1x1x2x8xbf16> to vector<2x8xbf16>
    %87 = vector.shape_cast %83 : vector<2x8xbf16> to vector<1x1x2x8xbf16>
    tpu.vector_store %arg4[%c0_23, %84, %c0_24, %c0_25], %87 {strides = array<i32>} : memref<1x16x2x8xbf16, #tpu.memory_space<vmem>>, vector<1x1x2x8xbf16>,
    %c2_i32_26 = arith.constant 2 : i32
    %88 = arith.muli %6, %c2_i32_26 : i32
    %89 = arith.addi %4, %88 : i32
    %c0_27 = arith.constant 0 : index
    %90 = arith.index_cast %89 : i32 to index
    %c0_28 = arith.constant 0 : index
    %c0_29 = arith.constant 0 : index
    %91 = vector.load %arg1[%c0_27, %90, %c0_28, %c0_29] : memref<1x16x2x24xbf16, #tpu.memory_space<vmem>>, vector<1x1x2x24xbf16>
    %92 = vector.shape_cast %91 : vector<1x1x2x24xbf16> to vector<2x24xbf16>
    %93 = arith.extf %92 : vector<2x24xbf16> to vector<2x24xf32>
    %cst_30 = arith.constant dense<0.000000e+00> : vector<2x24xf32>
    %94 = tpu.matmul %82, %1, %cst_30 {dimension_numbers = #tpu.dot_dimension_numbers<[1], [0], [0], [1], [0, 0, 1, 1], [], []>} : vector<2x8xf32>, vector<8x24xf32>, vector<2x24xf32> -> vector<2x24xf32>
    %95 = vector.extract_strided_slice %93 {offsets = [0, 0], sizes = [2, 8], strides = [1, 1]} : vector<2x24xf32> to vector<2x8xf32>
    %96 = vector.extract_strided_slice %94 {offsets = [0, 0], sizes = [2, 8], strides = [1, 1]} : vector<2x24xf32> to vector<2x8xf32>
    %97 = arith.addf %95, %96 : vector<2x8xf32>
    %98 = arith.negf %97 : vector<2x8xf32>
    %99 = math.exp %98 : vector<2x8xf32>
    %cst_31 = arith.constant 1.000000e+00 : f32
    %100 = vector.broadcast %cst_31 : f32 to vector<2x8xf32>
    %101 = arith.addf %100, %99 : vector<2x8xf32>
    %102 = arith.divf %100, %101 : vector<2x8xf32>
    %103 = vector.extract_strided_slice %93 {offsets = [0, 8], sizes = [2, 8], strides = [1, 1]} : vector<2x24xf32> to vector<2x8xf32>
    %104 = vector.extract_strided_slice %94 {offsets = [0, 8], sizes = [2, 8], strides = [1, 1]} : vector<2x24xf32> to vector<2x8xf32>
    %105 = arith.addf %103, %104 : vector<2x8xf32>
    %106 = arith.negf %105 : vector<2x8xf32>
    %107 = math.exp %106 : vector<2x8xf32>
    %cst_32 = arith.constant 1.000000e+00 : f32
    %108 = vector.broadcast %cst_32 : f32 to vector<2x8xf32>
    %109 = arith.addf %108, %107 : vector<2x8xf32>
    %110 = arith.divf %108, %109 : vector<2x8xf32>
    %111 = vector.extract_strided_slice %93 {offsets = [0, 16], sizes = [2, 8], strides = [1, 1]} : vector<2x24xf32> to vector<2x8xf32>
    %112 = vector.extract_strided_slice %94 {offsets = [0, 16], sizes = [2, 8], strides = [1, 1]} : vector<2x24xf32> to vector<2x8xf32>
    %113 = vector.broadcast %3 : vector<1x8xf32> to vector<2x8xf32>
    %114 = arith.addf %112, %113 : vector<2x8xf32>
    %115 = arith.mulf %102, %114 : vector<2x8xf32>
    %116 = arith.addf %111, %115 : vector<2x8xf32>
    %117 = math.tanh %116 : vector<2x8xf32>
    %cst_33 = arith.constant 1.000000e+00 : f32
    %118 = vector.broadcast %cst_33 : f32 to vector<2x8xf32>
    %119 = arith.subf %118, %110 : vector<2x8xf32>
    %120 = arith.mulf %119, %117 : vector<2x8xf32>
    %121 = arith.mulf %110, %82 : vector<2x8xf32>
    %122 = arith.addf %120, %121 : vector<2x8xf32>
    %123 = arith.truncf %122 : vector<2x8xf32> to vector<2x8xbf16>
    %c0_34 = arith.constant 0 : index
    %124 = arith.index_cast %89 : i32 to index
    %c0_35 = arith.constant 0 : index
    %c0_36 = arith.constant 0 : index
    %125 = vector.load %arg4[%c0_34, %124, %c0_35, %c0_36] : memref<1x16x2x8xbf16, #tpu.memory_space<vmem>>, vector<1x1x2x8xbf16>
    %126 = vector.shape_cast %125 : vector<1x1x2x8xbf16> to vector<2x8xbf16>
    %127 = vector.shape_cast %123 : vector<2x8xbf16> to vector<1x1x2x8xbf16>
    tpu.vector_store %arg4[%c0_34, %124, %c0_35, %c0_36], %127 {strides = array<i32>} : memref<1x16x2x8xbf16, #tpu.memory_space<vmem>>, vector<1x1x2x8xbf16>,
    %c3_i32 = arith.constant 3 : i32
    %128 = arith.muli %6, %c3_i32 : i32
    %129 = arith.addi %4, %128 : i32
    %c0_37 = arith.constant 0 : index
    %130 = arith.index_cast %129 : i32 to index
    %c0_38 = arith.constant 0 : index
    %c0_39 = arith.constant 0 : index
    %131 = vector.load %arg1[%c0_37, %130, %c0_38, %c0_39] : memref<1x16x2x24xbf16, #tpu.memory_space<vmem>>, vector<1x1x2x24xbf16>
    %132 = vector.shape_cast %131 : vector<1x1x2x24xbf16> to vector<2x24xbf16>
    %133 = arith.extf %132 : vector<2x24xbf16> to vector<2x24xf32>
    %cst_40 = arith.constant dense<0.000000e+00> : vector<2x24xf32>
    %134 = tpu.matmul %122, %1, %cst_40 {dimension_numbers = #tpu.dot_dimension_numbers<[1], [0], [0], [1], [0, 0, 1, 1], [], []>} : vector<2x8xf32>, vector<8x24xf32>, vector<2x24xf32> -> vector<2x24xf32>
    %135 = vector.extract_strided_slice %133 {offsets = [0, 0], sizes = [2, 8], strides = [1, 1]} : vector<2x24xf32> to vector<2x8xf32>
    %136 = vector.extract_strided_slice %134 {offsets = [0, 0], sizes = [2, 8], strides = [1, 1]} : vector<2x24xf32> to vector<2x8xf32>
    %137 = arith.addf %135, %136 : vector<2x8xf32>
    %138 = arith.negf %137 : vector<2x8xf32>
    %139 = math.exp %138 : vector<2x8xf32>
    %cst_41 = arith.constant 1.000000e+00 : f32
    %140 = vector.broadcast %cst_41 : f32 to vector<2x8xf32>
    %141 = arith.addf %140, %139 : vector<2x8xf32>
    %142 = arith.divf %140, %141 : vector<2x8xf32>
    %143 = vector.extract_strided_slice %133 {offsets = [0, 8], sizes = [2, 8], strides = [1, 1]} : vector<2x24xf32> to vector<2x8xf32>
    %144 = vector.extract_strided_slice %134 {offsets = [0, 8], sizes = [2, 8], strides = [1, 1]} : vector<2x24xf32> to vector<2x8xf32>
    %145 = arith.addf %143, %144 : vector<2x8xf32>
    %146 = arith.negf %145 : vector<2x8xf32>
    %147 = math.exp %146 : vector<2x8xf32>
    %cst_42 = arith.constant 1.000000e+00 : f32
    %148 = vector.broadcast %cst_42 : f32 to vector<2x8xf32>
    %149 = arith.addf %148, %147 : vector<2x8xf32>
    %150 = arith.divf %148, %149 : vector<2x8xf32>
    %151 = vector.extract_strided_slice %133 {offsets = [0, 16], sizes = [2, 8], strides = [1, 1]} : vector<2x24xf32> to vector<2x8xf32>
    %152 = vector.extract_strided_slice %134 {offsets = [0, 16], sizes = [2, 8], strides = [1, 1]} : vector<2x24xf32> to vector<2x8xf32>
    %153 = vector.broadcast %3 : vector<1x8xf32> to vector<2x8xf32>
    %154 = arith.addf %152, %153 : vector<2x8xf32>
    %155 = arith.mulf %142, %154 : vector<2x8xf32>
    %156 = arith.addf %151, %155 : vector<2x8xf32>
    %157 = math.tanh %156 : vector<2x8xf32>
    %cst_43 = arith.constant 1.000000e+00 : f32
    %158 = vector.broadcast %cst_43 : f32 to vector<2x8xf32>
    %159 = arith.subf %158, %150 : vector<2x8xf32>
    %160 = arith.mulf %159, %157 : vector<2x8xf32>
    %161 = arith.mulf %150, %122 : vector<2x8xf32>
    %162 = arith.addf %160, %161 : vector<2x8xf32>
    %163 = arith.truncf %162 : vector<2x8xf32> to vector<2x8xbf16>
    %c0_44 = arith.constant 0 : index
    %164 = arith.index_cast %129 : i32 to index
    %c0_45 = arith.constant 0 : index
    %c0_46 = arith.constant 0 : index
    %165 = vector.load %arg4[%c0_44, %164, %c0_45, %c0_46] : memref<1x16x2x8xbf16, #tpu.memory_space<vmem>>, vector<1x1x2x8xbf16>
    %166 = vector.shape_cast %165 : vector<1x1x2x8xbf16> to vector<2x8xbf16>
    %167 = vector.shape_cast %163 : vector<2x8xbf16> to vector<1x1x2x8xbf16>
    tpu.vector_store %arg4[%c0_44, %164, %c0_45, %c0_46], %167 {strides = array<i32>} : memref<1x16x2x8xbf16, #tpu.memory_space<vmem>>, vector<1x1x2x8xbf16>,
    %c4_i32 = arith.constant 4 : i32
    %168 = arith.muli %6, %c4_i32 : i32
    %169 = arith.addi %4, %168 : i32
    %c0_47 = arith.constant 0 : index
    %170 = arith.index_cast %169 : i32 to index
    %c0_48 = arith.constant 0 : index
    %c0_49 = arith.constant 0 : index
    %171 = vector.load %arg1[%c0_47, %170, %c0_48, %c0_49] : memref<1x16x2x24xbf16, #tpu.memory_space<vmem>>, vector<1x1x2x24xbf16>
    %172 = vector.shape_cast %171 : vector<1x1x2x24xbf16> to vector<2x24xbf16>
    %173 = arith.extf %172 : vector<2x24xbf16> to vector<2x24xf32>
    %cst_50 = arith.constant dense<0.000000e+00> : vector<2x24xf32>
    %174 = tpu.matmul %162, %1, %cst_50 {dimension_numbers = #tpu.dot_dimension_numbers<[1], [0], [0], [1], [0, 0, 1, 1], [], []>} : vector<2x8xf32>, vector<8x24xf32>, vector<2x24xf32> -> vector<2x24xf32>
    %175 = vector.extract_strided_slice %173 {offsets = [0, 0], sizes = [2, 8], strides = [1, 1]} : vector<2x24xf32> to vector<2x8xf32>
    %176 = vector.extract_strided_slice %174 {offsets = [0, 0], sizes = [2, 8], strides = [1, 1]} : vector<2x24xf32> to vector<2x8xf32>
    %177 = arith.addf %175, %176 : vector<2x8xf32>
    %178 = arith.negf %177 : vector<2x8xf32>
    %179 = math.exp %178 : vector<2x8xf32>
    %cst_51 = arith.constant 1.000000e+00 : f32
    %180 = vector.broadcast %cst_51 : f32 to vector<2x8xf32>
    %181 = arith.addf %180, %179 : vector<2x8xf32>
    %182 = arith.divf %180, %181 : vector<2x8xf32>
    %183 = vector.extract_strided_slice %173 {offsets = [0, 8], sizes = [2, 8], strides = [1, 1]} : vector<2x24xf32> to vector<2x8xf32>
    %184 = vector.extract_strided_slice %174 {offsets = [0, 8], sizes = [2, 8], strides = [1, 1]} : vector<2x24xf32> to vector<2x8xf32>
    %185 = arith.addf %183, %184 : vector<2x8xf32>
    %186 = arith.negf %185 : vector<2x8xf32>
    %187 = math.exp %186 : vector<2x8xf32>
    %cst_52 = arith.constant 1.000000e+00 : f32
    %188 = vector.broadcast %cst_52 : f32 to vector<2x8xf32>
    %189 = arith.addf %188, %187 : vector<2x8xf32>
    %190 = arith.divf %188, %189 : vector<2x8xf32>
    %191 = vector.extract_strided_slice %173 {offsets = [0, 16], sizes = [2, 8], strides = [1, 1]} : vector<2x24xf32> to vector<2x8xf32>
    %192 = vector.extract_strided_slice %174 {offsets = [0, 16], sizes = [2, 8], strides = [1, 1]} : vector<2x24xf32> to vector<2x8xf32>
    %193 = vector.broadcast %3 : vector<1x8xf32> to vector<2x8xf32>
    %194 = arith.addf %192, %193 : vector<2x8xf32>
    %195 = arith.mulf %182, %194 : vector<2x8xf32>
    %196 = arith.addf %191, %195 : vector<2x8xf32>
    %197 = math.tanh %196 : vector<2x8xf32>
    %cst_53 = arith.constant 1.000000e+00 : f32
    %198 = vector.broadcast %cst_53 : f32 to vector<2x8xf32>
    %199 = arith.subf %198, %190 : vector<2x8xf32>
    %200 = arith.mulf %199, %197 : vector<2x8xf32>
    %201 = arith.mulf %190, %162 : vector<2x8xf32>
    %202 = arith.addf %200, %201 : vector<2x8xf32>
    %203 = arith.truncf %202 : vector<2x8xf32> to vector<2x8xbf16>
    %c0_54 = arith.constant 0 : index
    %204 = arith.index_cast %169 : i32 to index
    %c0_55 = arith.constant 0 : index
    %c0_56 = arith.constant 0 : index
    %205 = vector.load %arg4[%c0_54, %204, %c0_55, %c0_56] : memref<1x16x2x8xbf16, #tpu.memory_space<vmem>>, vector<1x1x2x8xbf16>
    %206 = vector.shape_cast %205 : vector<1x1x2x8xbf16> to vector<2x8xbf16>
    %207 = vector.shape_cast %203 : vector<2x8xbf16> to vector<1x1x2x8xbf16>
    tpu.vector_store %arg4[%c0_54, %204, %c0_55, %c0_56], %207 {strides = array<i32>} : memref<1x16x2x8xbf16, #tpu.memory_space<vmem>>, vector<1x1x2x8xbf16>,
    %c5_i32 = arith.constant 5 : i32
    %208 = arith.muli %6, %c5_i32 : i32
    %209 = arith.addi %4, %208 : i32
    %c0_57 = arith.constant 0 : index
    %210 = arith.index_cast %209 : i32 to index
    %c0_58 = arith.constant 0 : index
    %c0_59 = arith.constant 0 : index
    %211 = vector.load %arg1[%c0_57, %210, %c0_58, %c0_59] : memref<1x16x2x24xbf16, #tpu.memory_space<vmem>>, vector<1x1x2x24xbf16>
    %212 = vector.shape_cast %211 : vector<1x1x2x24xbf16> to vector<2x24xbf16>
    %213 = arith.extf %212 : vector<2x24xbf16> to vector<2x24xf32>
    %cst_60 = arith.constant dense<0.000000e+00> : vector<2x24xf32>
    %214 = tpu.matmul %202, %1, %cst_60 {dimension_numbers = #tpu.dot_dimension_numbers<[1], [0], [0], [1], [0, 0, 1, 1], [], []>} : vector<2x8xf32>, vector<8x24xf32>, vector<2x24xf32> -> vector<2x24xf32>
    %215 = vector.extract_strided_slice %213 {offsets = [0, 0], sizes = [2, 8], strides = [1, 1]} : vector<2x24xf32> to vector<2x8xf32>
    %216 = vector.extract_strided_slice %214 {offsets = [0, 0], sizes = [2, 8], strides = [1, 1]} : vector<2x24xf32> to vector<2x8xf32>
    %217 = arith.addf %215, %216 : vector<2x8xf32>
    %218 = arith.negf %217 : vector<2x8xf32>
    %219 = math.exp %218 : vector<2x8xf32>
    %cst_61 = arith.constant 1.000000e+00 : f32
    %220 = vector.broadcast %cst_61 : f32 to vector<2x8xf32>
    %221 = arith.addf %220, %219 : vector<2x8xf32>
    %222 = arith.divf %220, %221 : vector<2x8xf32>
    %223 = vector.extract_strided_slice %213 {offsets = [0, 8], sizes = [2, 8], strides = [1, 1]} : vector<2x24xf32> to vector<2x8xf32>
    %224 = vector.extract_strided_slice %214 {offsets = [0, 8], sizes = [2, 8], strides = [1, 1]} : vector<2x24xf32> to vector<2x8xf32>
    %225 = arith.addf %223, %224 : vector<2x8xf32>
    %226 = arith.negf %225 : vector<2x8xf32>
    %227 = math.exp %226 : vector<2x8xf32>
    %cst_62 = arith.constant 1.000000e+00 : f32
    %228 = vector.broadcast %cst_62 : f32 to vector<2x8xf32>
    %229 = arith.addf %228, %227 : vector<2x8xf32>
    %230 = arith.divf %228, %229 : vector<2x8xf32>
    %231 = vector.extract_strided_slice %213 {offsets = [0, 16], sizes = [2, 8], strides = [1, 1]} : vector<2x24xf32> to vector<2x8xf32>
    %232 = vector.extract_strided_slice %214 {offsets = [0, 16], sizes = [2, 8], strides = [1, 1]} : vector<2x24xf32> to vector<2x8xf32>
    %233 = vector.broadcast %3 : vector<1x8xf32> to vector<2x8xf32>
    %234 = arith.addf %232, %233 : vector<2x8xf32>
    %235 = arith.mulf %222, %234 : vector<2x8xf32>
    %236 = arith.addf %231, %235 : vector<2x8xf32>
    %237 = math.tanh %236 : vector<2x8xf32>
    %cst_63 = arith.constant 1.000000e+00 : f32
    %238 = vector.broadcast %cst_63 : f32 to vector<2x8xf32>
    %239 = arith.subf %238, %230 : vector<2x8xf32>
    %240 = arith.mulf %239, %237 : vector<2x8xf32>
    %241 = arith.mulf %230, %202 : vector<2x8xf32>
    %242 = arith.addf %240, %241 : vector<2x8xf32>
    %243 = arith.truncf %242 : vector<2x8xf32> to vector<2x8xbf16>
    %c0_64 = arith.constant 0 : index
    %244 = arith.index_cast %209 : i32 to index
    %c0_65 = arith.constant 0 : index
    %c0_66 = arith.constant 0 : index
    %245 = vector.load %arg4[%c0_64, %244, %c0_65, %c0_66] : memref<1x16x2x8xbf16, #tpu.memory_space<vmem>>, vector<1x1x2x8xbf16>
    %246 = vector.shape_cast %245 : vector<1x1x2x8xbf16> to vector<2x8xbf16>
    %247 = vector.shape_cast %243 : vector<2x8xbf16> to vector<1x1x2x8xbf16>
    tpu.vector_store %arg4[%c0_64, %244, %c0_65, %c0_66], %247 {strides = array<i32>} : memref<1x16x2x8xbf16, #tpu.memory_space<vmem>>, vector<1x1x2x8xbf16>,
    %c6_i32 = arith.constant 6 : i32
    %248 = arith.muli %6, %c6_i32 : i32
    %249 = arith.addi %4, %248 : i32
    %c0_67 = arith.constant 0 : index
    %250 = arith.index_cast %249 : i32 to index
    %c0_68 = arith.constant 0 : index
    %c0_69 = arith.constant 0 : index
    %251 = vector.load %arg1[%c0_67, %250, %c0_68, %c0_69] : memref<1x16x2x24xbf16, #tpu.memory_space<vmem>>, vector<1x1x2x24xbf16>
    %252 = vector.shape_cast %251 : vector<1x1x2x24xbf16> to vector<2x24xbf16>
    %253 = arith.extf %252 : vector<2x24xbf16> to vector<2x24xf32>
    %cst_70 = arith.constant dense<0.000000e+00> : vector<2x24xf32>
    %254 = tpu.matmul %242, %1, %cst_70 {dimension_numbers = #tpu.dot_dimension_numbers<[1], [0], [0], [1], [0, 0, 1, 1], [], []>} : vector<2x8xf32>, vector<8x24xf32>, vector<2x24xf32> -> vector<2x24xf32>
    %255 = vector.extract_strided_slice %253 {offsets = [0, 0], sizes = [2, 8], strides = [1, 1]} : vector<2x24xf32> to vector<2x8xf32>
    %256 = vector.extract_strided_slice %254 {offsets = [0, 0], sizes = [2, 8], strides = [1, 1]} : vector<2x24xf32> to vector<2x8xf32>
    %257 = arith.addf %255, %256 : vector<2x8xf32>
    %258 = arith.negf %257 : vector<2x8xf32>
    %259 = math.exp %258 : vector<2x8xf32>
    %cst_71 = arith.constant 1.000000e+00 : f32
    %260 = vector.broadcast %cst_71 : f32 to vector<2x8xf32>
    %261 = arith.addf %260, %259 : vector<2x8xf32>
    %262 = arith.divf %260, %261 : vector<2x8xf32>
    %263 = vector.extract_strided_slice %253 {offsets = [0, 8], sizes = [2, 8], strides = [1, 1]} : vector<2x24xf32> to vector<2x8xf32>
    %264 = vector.extract_strided_slice %254 {offsets = [0, 8], sizes = [2, 8], strides = [1, 1]} : vector<2x24xf32> to vector<2x8xf32>
    %265 = arith.addf %263, %264 : vector<2x8xf32>
    %266 = arith.negf %265 : vector<2x8xf32>
    %267 = math.exp %266 : vector<2x8xf32>
    %cst_72 = arith.constant 1.000000e+00 : f32
    %268 = vector.broadcast %cst_72 : f32 to vector<2x8xf32>
    %269 = arith.addf %268, %267 : vector<2x8xf32>
    %270 = arith.divf %268, %269 : vector<2x8xf32>
    %271 = vector.extract_strided_slice %253 {offsets = [0, 16], sizes = [2, 8], strides = [1, 1]} : vector<2x24xf32> to vector<2x8xf32>
    %272 = vector.extract_strided_slice %254 {offsets = [0, 16], sizes = [2, 8], strides = [1, 1]} : vector<2x24xf32> to vector<2x8xf32>
    %273 = vector.broadcast %3 : vector<1x8xf32> to vector<2x8xf32>
    %274 = arith.addf %272, %273 : vector<2x8xf32>
    %275 = arith.mulf %262, %274 : vector<2x8xf32>
    %276 = arith.addf %271, %275 : vector<2x8xf32>
    %277 = math.tanh %276 : vector<2x8xf32>
    %cst_73 = arith.constant 1.000000e+00 : f32
    %278 = vector.broadcast %cst_73 : f32 to vector<2x8xf32>
    %279 = arith.subf %278, %270 : vector<2x8xf32>
    %280 = arith.mulf %279, %277 : vector<2x8xf32>
    %281 = arith.mulf %270, %242 : vector<2x8xf32>
    %282 = arith.addf %280, %281 : vector<2x8xf32>
    %283 = arith.truncf %282 : vector<2x8xf32> to vector<2x8xbf16>
    %c0_74 = arith.constant 0 : index
    %284 = arith.index_cast %249 : i32 to index
    %c0_75 = arith.constant 0 : index
    %c0_76 = arith.constant 0 : index
    %285 = vector.load %arg4[%c0_74, %284, %c0_75, %c0_76] : memref<1x16x2x8xbf16, #tpu.memory_space<vmem>>, vector<1x1x2x8xbf16>
    %286 = vector.shape_cast %285 : vector<1x1x2x8xbf16> to vector<2x8xbf16>
    %287 = vector.shape_cast %283 : vector<2x8xbf16> to vector<1x1x2x8xbf16>
    tpu.vector_store %arg4[%c0_74, %284, %c0_75, %c0_76], %287 {strides = array<i32>} : memref<1x16x2x8xbf16, #tpu.memory_space<vmem>>, vector<1x1x2x8xbf16>,
    %c7_i32 = arith.constant 7 : i32
    %288 = arith.muli %6, %c7_i32 : i32
    %289 = arith.addi %4, %288 : i32
    %c0_77 = arith.constant 0 : index
    %290 = arith.index_cast %289 : i32 to index
    %c0_78 = arith.constant 0 : index
    %c0_79 = arith.constant 0 : index
    %291 = vector.load %arg1[%c0_77, %290, %c0_78, %c0_79] : memref<1x16x2x24xbf16, #tpu.memory_space<vmem>>, vector<1x1x2x24xbf16>
    %292 = vector.shape_cast %291 : vector<1x1x2x24xbf16> to vector<2x24xbf16>
    %293 = arith.extf %292 : vector<2x24xbf16> to vector<2x24xf32>
    %cst_80 = arith.constant dense<0.000000e+00> : vector<2x24xf32>
    %294 = tpu.matmul %282, %1, %cst_80 {dimension_numbers = #tpu.dot_dimension_numbers<[1], [0], [0], [1], [0, 0, 1, 1], [], []>} : vector<2x8xf32>, vector<8x24xf32>, vector<2x24xf32> -> vector<2x24xf32>
    %295 = vector.extract_strided_slice %293 {offsets = [0, 0], sizes = [2, 8], strides = [1, 1]} : vector<2x24xf32> to vector<2x8xf32>
    %296 = vector.extract_strided_slice %294 {offsets = [0, 0], sizes = [2, 8], strides = [1, 1]} : vector<2x24xf32> to vector<2x8xf32>
    %297 = arith.addf %295, %296 : vector<2x8xf32>
    %298 = arith.negf %297 : vector<2x8xf32>
    %299 = math.exp %298 : vector<2x8xf32>
    %cst_81 = arith.constant 1.000000e+00 : f32
    %300 = vector.broadcast %cst_81 : f32 to vector<2x8xf32>
    %301 = arith.addf %300, %299 : vector<2x8xf32>
    %302 = arith.divf %300, %301 : vector<2x8xf32>
    %303 = vector.extract_strided_slice %293 {offsets = [0, 8], sizes = [2, 8], strides = [1, 1]} : vector<2x24xf32> to vector<2x8xf32>
    %304 = vector.extract_strided_slice %294 {offsets = [0, 8], sizes = [2, 8], strides = [1, 1]} : vector<2x24xf32> to vector<2x8xf32>
    %305 = arith.addf %303, %304 : vector<2x8xf32>
    %306 = arith.negf %305 : vector<2x8xf32>
    %307 = math.exp %306 : vector<2x8xf32>
    %cst_82 = arith.constant 1.000000e+00 : f32
    %308 = vector.broadcast %cst_82 : f32 to vector<2x8xf32>
    %309 = arith.addf %308, %307 : vector<2x8xf32>
    %310 = arith.divf %308, %309 : vector<2x8xf32>
    %311 = vector.extract_strided_slice %293 {offsets = [0, 16], sizes = [2, 8], strides = [1, 1]} : vector<2x24xf32> to vector<2x8xf32>
    %312 = vector.extract_strided_slice %294 {offsets = [0, 16], sizes = [2, 8], strides = [1, 1]} : vector<2x24xf32> to vector<2x8xf32>
    %313 = vector.broadcast %3 : vector<1x8xf32> to vector<2x8xf32>
    %314 = arith.addf %312, %313 : vector<2x8xf32>
    %315 = arith.mulf %302, %314 : vector<2x8xf32>
    %316 = arith.addf %311, %315 : vector<2x8xf32>
    %317 = math.tanh %316 : vector<2x8xf32>
    %cst_83 = arith.constant 1.000000e+00 : f32
    %318 = vector.broadcast %cst_83 : f32 to vector<2x8xf32>
    %319 = arith.subf %318, %310 : vector<2x8xf32>
    %320 = arith.mulf %319, %317 : vector<2x8xf32>
    %321 = arith.mulf %310, %282 : vector<2x8xf32>
    %322 = arith.addf %320, %321 : vector<2x8xf32>
    %323 = arith.truncf %322 : vector<2x8xf32> to vector<2x8xbf16>
    %c0_84 = arith.constant 0 : index
    %324 = arith.index_cast %289 : i32 to index
    %c0_85 = arith.constant 0 : index
    %c0_86 = arith.constant 0 : index
    %325 = vector.load %arg4[%c0_84, %324, %c0_85, %c0_86] : memref<1x16x2x8xbf16, #tpu.memory_space<vmem>>, vector<1x1x2x8xbf16>
    %326 = vector.shape_cast %325 : vector<1x1x2x8xbf16> to vector<2x8xbf16>
    %327 = vector.shape_cast %323 : vector<2x8xbf16> to vector<1x1x2x8xbf16>
    tpu.vector_store %arg4[%c0_84, %324, %c0_85, %c0_86], %327 {strides = array<i32>} : memref<1x16x2x8xbf16, #tpu.memory_space<vmem>>, vector<1x1x2x8xbf16>,
    %c8_i32 = arith.constant 8 : i32
    %328 = arith.muli %6, %c8_i32 : i32
    %329 = arith.addi %4, %328 : i32
    %c0_87 = arith.constant 0 : index
    %330 = arith.index_cast %329 : i32 to index
    %c0_88 = arith.constant 0 : index
    %c0_89 = arith.constant 0 : index
    %331 = vector.load %arg1[%c0_87, %330, %c0_88, %c0_89] : memref<1x16x2x24xbf16, #tpu.memory_space<vmem>>, vector<1x1x2x24xbf16>
    %332 = vector.shape_cast %331 : vector<1x1x2x24xbf16> to vector<2x24xbf16>
    %333 = arith.extf %332 : vector<2x24xbf16> to vector<2x24xf32>
    %cst_90 = arith.constant dense<0.000000e+00> : vector<2x24xf32>
    %334 = tpu.matmul %322, %1, %cst_90 {dimension_numbers = #tpu.dot_dimension_numbers<[1], [0], [0], [1], [0, 0, 1, 1], [], []>} : vector<2x8xf32>, vector<8x24xf32>, vector<2x24xf32> -> vector<2x24xf32>
    %335 = vector.extract_strided_slice %333 {offsets = [0, 0], sizes = [2, 8], strides = [1, 1]} : vector<2x24xf32> to vector<2x8xf32>
    %336 = vector.extract_strided_slice %334 {offsets = [0, 0], sizes = [2, 8], strides = [1, 1]} : vector<2x24xf32> to vector<2x8xf32>
    %337 = arith.addf %335, %336 : vector<2x8xf32>
    %338 = arith.negf %337 : vector<2x8xf32>
    %339 = math.exp %338 : vector<2x8xf32>
    %cst_91 = arith.constant 1.000000e+00 : f32
    %340 = vector.broadcast %cst_91 : f32 to vector<2x8xf32>
    %341 = arith.addf %340, %339 : vector<2x8xf32>
    %342 = arith.divf %340, %341 : vector<2x8xf32>
    %343 = vector.extract_strided_slice %333 {offsets = [0, 8], sizes = [2, 8], strides = [1, 1]} : vector<2x24xf32> to vector<2x8xf32>
    %344 = vector.extract_strided_slice %334 {offsets = [0, 8], sizes = [2, 8], strides = [1, 1]} : vector<2x24xf32> to vector<2x8xf32>
    %345 = arith.addf %343, %344 : vector<2x8xf32>
    %346 = arith.negf %345 : vector<2x8xf32>
    %347 = math.exp %346 : vector<2x8xf32>
    %cst_92 = arith.constant 1.000000e+00 : f32
    %348 = vector.broadcast %cst_92 : f32 to vector<2x8xf32>
    %349 = arith.addf %348, %347 : vector<2x8xf32>
    %350 = arith.divf %348, %349 : vector<2x8xf32>
    %351 = vector.extract_strided_slice %333 {offsets = [0, 16], sizes = [2, 8], strides = [1, 1]} : vector<2x24xf32> to vector<2x8xf32>
    %352 = vector.extract_strided_slice %334 {offsets = [0, 16], sizes = [2, 8], strides = [1, 1]} : vector<2x24xf32> to vector<2x8xf32>
    %353 = vector.broadcast %3 : vector<1x8xf32> to vector<2x8xf32>
    %354 = arith.addf %352, %353 : vector<2x8xf32>
    %355 = arith.mulf %342, %354 : vector<2x8xf32>
    %356 = arith.addf %351, %355 : vector<2x8xf32>
    %357 = math.tanh %356 : vector<2x8xf32>
    %cst_93 = arith.constant 1.000000e+00 : f32
    %358 = vector.broadcast %cst_93 : f32 to vector<2x8xf32>
    %359 = arith.subf %358, %350 : vector<2x8xf32>
    %360 = arith.mulf %359, %357 : vector<2x8xf32>
    %361 = arith.mulf %350, %322 : vector<2x8xf32>
    %362 = arith.addf %360, %361 : vector<2x8xf32>
    %363 = arith.truncf %362 : vector<2x8xf32> to vector<2x8xbf16>
    %c0_94 = arith.constant 0 : index
    %364 = arith.index_cast %329 : i32 to index
    %c0_95 = arith.constant 0 : index
    %c0_96 = arith.constant 0 : index
    %365 = vector.load %arg4[%c0_94, %364, %c0_95, %c0_96] : memref<1x16x2x8xbf16, #tpu.memory_space<vmem>>, vector<1x1x2x8xbf16>
    %366 = vector.shape_cast %365 : vector<1x1x2x8xbf16> to vector<2x8xbf16>
    %367 = vector.shape_cast %363 : vector<2x8xbf16> to vector<1x1x2x8xbf16>
    tpu.vector_store %arg4[%c0_94, %364, %c0_95, %c0_96], %367 {strides = array<i32>} : memref<1x16x2x8xbf16, #tpu.memory_space<vmem>>, vector<1x1x2x8xbf16>,
    %c9_i32 = arith.constant 9 : i32
    %368 = arith.muli %6, %c9_i32 : i32
    %369 = arith.addi %4, %368 : i32
    %c0_97 = arith.constant 0 : index
    %370 = arith.index_cast %369 : i32 to index
    %c0_98 = arith.constant 0 : index
    %c0_99 = arith.constant 0 : index
    %371 = vector.load %arg1[%c0_97, %370, %c0_98, %c0_99] : memref<1x16x2x24xbf16, #tpu.memory_space<vmem>>, vector<1x1x2x24xbf16>
    %372 = vector.shape_cast %371 : vector<1x1x2x24xbf16> to vector<2x24xbf16>
    %373 = arith.extf %372 : vector<2x24xbf16> to vector<2x24xf32>
    %cst_100 = arith.constant dense<0.000000e+00> : vector<2x24xf32>
    %374 = tpu.matmul %362, %1, %cst_100 {dimension_numbers = #tpu.dot_dimension_numbers<[1], [0], [0], [1], [0, 0, 1, 1], [], []>} : vector<2x8xf32>, vector<8x24xf32>, vector<2x24xf32> -> vector<2x24xf32>
    %375 = vector.extract_strided_slice %373 {offsets = [0, 0], sizes = [2, 8], strides = [1, 1]} : vector<2x24xf32> to vector<2x8xf32>
    %376 = vector.extract_strided_slice %374 {offsets = [0, 0], sizes = [2, 8], strides = [1, 1]} : vector<2x24xf32> to vector<2x8xf32>
    %377 = arith.addf %375, %376 : vector<2x8xf32>
    %378 = arith.negf %377 : vector<2x8xf32>
    %379 = math.exp %378 : vector<2x8xf32>
    %cst_101 = arith.constant 1.000000e+00 : f32
    %380 = vector.broadcast %cst_101 : f32 to vector<2x8xf32>
    %381 = arith.addf %380, %379 : vector<2x8xf32>
    %382 = arith.divf %380, %381 : vector<2x8xf32>
    %383 = vector.extract_strided_slice %373 {offsets = [0, 8], sizes = [2, 8], strides = [1, 1]} : vector<2x24xf32> to vector<2x8xf32>
    %384 = vector.extract_strided_slice %374 {offsets = [0, 8], sizes = [2, 8], strides = [1, 1]} : vector<2x24xf32> to vector<2x8xf32>
    %385 = arith.addf %383, %384 : vector<2x8xf32>
    %386 = arith.negf %385 : vector<2x8xf32>
    %387 = math.exp %386 : vector<2x8xf32>
    %cst_102 = arith.constant 1.000000e+00 : f32
    %388 = vector.broadcast %cst_102 : f32 to vector<2x8xf32>
    %389 = arith.addf %388, %387 : vector<2x8xf32>
    %390 = arith.divf %388, %389 : vector<2x8xf32>
    %391 = vector.extract_strided_slice %373 {offsets = [0, 16], sizes = [2, 8], strides = [1, 1]} : vector<2x24xf32> to vector<2x8xf32>
    %392 = vector.extract_strided_slice %374 {offsets = [0, 16], sizes = [2, 8], strides = [1, 1]} : vector<2x24xf32> to vector<2x8xf32>
    %393 = vector.broadcast %3 : vector<1x8xf32> to vector<2x8xf32>
    %394 = arith.addf %392, %393 : vector<2x8xf32>
    %395 = arith.mulf %382, %394 : vector<2x8xf32>
    %396 = arith.addf %391, %395 : vector<2x8xf32>
    %397 = math.tanh %396 : vector<2x8xf32>
    %cst_103 = arith.constant 1.000000e+00 : f32
    %398 = vector.broadcast %cst_103 : f32 to vector<2x8xf32>
    %399 = arith.subf %398, %390 : vector<2x8xf32>
    %400 = arith.mulf %399, %397 : vector<2x8xf32>
    %401 = arith.mulf %390, %362 : vector<2x8xf32>
    %402 = arith.addf %400, %401 : vector<2x8xf32>
    %403 = arith.truncf %402 : vector<2x8xf32> to vector<2x8xbf16>
    %c0_104 = arith.constant 0 : index
    %404 = arith.index_cast %369 : i32 to index
    %c0_105 = arith.constant 0 : index
    %c0_106 = arith.constant 0 : index
    %405 = vector.load %arg4[%c0_104, %404, %c0_105, %c0_106] : memref<1x16x2x8xbf16, #tpu.memory_space<vmem>>, vector<1x1x2x8xbf16>
    %406 = vector.shape_cast %405 : vector<1x1x2x8xbf16> to vector<2x8xbf16>
    %407 = vector.shape_cast %403 : vector<2x8xbf16> to vector<1x1x2x8xbf16>
    tpu.vector_store %arg4[%c0_104, %404, %c0_105, %c0_106], %407 {strides = array<i32>} : memref<1x16x2x8xbf16, #tpu.memory_space<vmem>>, vector<1x1x2x8xbf16>,
    %c10_i32 = arith.constant 10 : i32
    %408 = arith.muli %6, %c10_i32 : i32
    %409 = arith.addi %4, %408 : i32
    %c0_107 = arith.constant 0 : index
    %410 = arith.index_cast %409 : i32 to index
    %c0_108 = arith.constant 0 : index
    %c0_109 = arith.constant 0 : index
    %411 = vector.load %arg1[%c0_107, %410, %c0_108, %c0_109] : memref<1x16x2x24xbf16, #tpu.memory_space<vmem>>, vector<1x1x2x24xbf16>
    %412 = vector.shape_cast %411 : vector<1x1x2x24xbf16> to vector<2x24xbf16>
    %413 = arith.extf %412 : vector<2x24xbf16> to vector<2x24xf32>
    %cst_110 = arith.constant dense<0.000000e+00> : vector<2x24xf32>
    %414 = tpu.matmul %402, %1, %cst_110 {dimension_numbers = #tpu.dot_dimension_numbers<[1], [0], [0], [1], [0, 0, 1, 1], [], []>} : vector<2x8xf32>, vector<8x24xf32>, vector<2x24xf32> -> vector<2x24xf32>
    %415 = vector.extract_strided_slice %413 {offsets = [0, 0], sizes = [2, 8], strides = [1, 1]} : vector<2x24xf32> to vector<2x8xf32>
    %416 = vector.extract_strided_slice %414 {offsets = [0, 0], sizes = [2, 8], strides = [1, 1]} : vector<2x24xf32> to vector<2x8xf32>
    %417 = arith.addf %415, %416 : vector<2x8xf32>
    %418 = arith.negf %417 : vector<2x8xf32>
    %419 = math.exp %418 : vector<2x8xf32>
    %cst_111 = arith.constant 1.000000e+00 : f32
    %420 = vector.broadcast %cst_111 : f32 to vector<2x8xf32>
    %421 = arith.addf %420, %419 : vector<2x8xf32>
    %422 = arith.divf %420, %421 : vector<2x8xf32>
    %423 = vector.extract_strided_slice %413 {offsets = [0, 8], sizes = [2, 8], strides = [1, 1]} : vector<2x24xf32> to vector<2x8xf32>
    %424 = vector.extract_strided_slice %414 {offsets = [0, 8], sizes = [2, 8], strides = [1, 1]} : vector<2x24xf32> to vector<2x8xf32>
    %425 = arith.addf %423, %424 : vector<2x8xf32>
    %426 = arith.negf %425 : vector<2x8xf32>
    %427 = math.exp %426 : vector<2x8xf32>
    %cst_112 = arith.constant 1.000000e+00 : f32
    %428 = vector.broadcast %cst_112 : f32 to vector<2x8xf32>
    %429 = arith.addf %428, %427 : vector<2x8xf32>
    %430 = arith.divf %428, %429 : vector<2x8xf32>
    %431 = vector.extract_strided_slice %413 {offsets = [0, 16], sizes = [2, 8], strides = [1, 1]} : vector<2x24xf32> to vector<2x8xf32>
    %432 = vector.extract_strided_slice %414 {offsets = [0, 16], sizes = [2, 8], strides = [1, 1]} : vector<2x24xf32> to vector<2x8xf32>
    %433 = vector.broadcast %3 : vector<1x8xf32> to vector<2x8xf32>
    %434 = arith.addf %432, %433 : vector<2x8xf32>
    %435 = arith.mulf %422, %434 : vector<2x8xf32>
    %436 = arith.addf %431, %435 : vector<2x8xf32>
    %437 = math.tanh %436 : vector<2x8xf32>
    %cst_113 = arith.constant 1.000000e+00 : f32
    %438 = vector.broadcast %cst_113 : f32 to vector<2x8xf32>
    %439 = arith.subf %438, %430 : vector<2x8xf32>
    %440 = arith.mulf %439, %437 : vector<2x8xf32>
    %441 = arith.mulf %430, %402 : vector<2x8xf32>
    %442 = arith.addf %440, %441 : vector<2x8xf32>
    %443 = arith.truncf %442 : vector<2x8xf32> to vector<2x8xbf16>
    %c0_114 = arith.constant 0 : index
    %444 = arith.index_cast %409 : i32 to index
    %c0_115 = arith.constant 0 : index
    %c0_116 = arith.constant 0 : index
    %445 = vector.load %arg4[%c0_114, %444, %c0_115, %c0_116] : memref<1x16x2x8xbf16, #tpu.memory_space<vmem>>, vector<1x1x2x8xbf16>
    %446 = vector.shape_cast %445 : vector<1x1x2x8xbf16> to vector<2x8xbf16>
    %447 = vector.shape_cast %443 : vector<2x8xbf16> to vector<1x1x2x8xbf16>
    tpu.vector_store %arg4[%c0_114, %444, %c0_115, %c0_116], %447 {strides = array<i32>} : memref<1x16x2x8xbf16, #tpu.memory_space<vmem>>, vector<1x1x2x8xbf16>,
    %c11_i32 = arith.constant 11 : i32
    %448 = arith.muli %6, %c11_i32 : i32
    %449 = arith.addi %4, %448 : i32
    %c0_117 = arith.constant 0 : index
    %450 = arith.index_cast %449 : i32 to index
    %c0_118 = arith.constant 0 : index
    %c0_119 = arith.constant 0 : index
    %451 = vector.load %arg1[%c0_117, %450, %c0_118, %c0_119] : memref<1x16x2x24xbf16, #tpu.memory_space<vmem>>, vector<1x1x2x24xbf16>
    %452 = vector.shape_cast %451 : vector<1x1x2x24xbf16> to vector<2x24xbf16>
    %453 = arith.extf %452 : vector<2x24xbf16> to vector<2x24xf32>
    %cst_120 = arith.constant dense<0.000000e+00> : vector<2x24xf32>
    %454 = tpu.matmul %442, %1, %cst_120 {dimension_numbers = #tpu.dot_dimension_numbers<[1], [0], [0], [1], [0, 0, 1, 1], [], []>} : vector<2x8xf32>, vector<8x24xf32>, vector<2x24xf32> -> vector<2x24xf32>
    %455 = vector.extract_strided_slice %453 {offsets = [0, 0], sizes = [2, 8], strides = [1, 1]} : vector<2x24xf32> to vector<2x8xf32>
    %456 = vector.extract_strided_slice %454 {offsets = [0, 0], sizes = [2, 8], strides = [1, 1]} : vector<2x24xf32> to vector<2x8xf32>
    %457 = arith.addf %455, %456 : vector<2x8xf32>
    %458 = arith.negf %457 : vector<2x8xf32>
    %459 = math.exp %458 : vector<2x8xf32>
    %cst_121 = arith.constant 1.000000e+00 : f32
    %460 = vector.broadcast %cst_121 : f32 to vector<2x8xf32>
    %461 = arith.addf %460, %459 : vector<2x8xf32>
    %462 = arith.divf %460, %461 : vector<2x8xf32>
    %463 = vector.extract_strided_slice %453 {offsets = [0, 8], sizes = [2, 8], strides = [1, 1]} : vector<2x24xf32> to vector<2x8xf32>
    %464 = vector.extract_strided_slice %454 {offsets = [0, 8], sizes = [2, 8], strides = [1, 1]} : vector<2x24xf32> to vector<2x8xf32>
    %465 = arith.addf %463, %464 : vector<2x8xf32>
    %466 = arith.negf %465 : vector<2x8xf32>
    %467 = math.exp %466 : vector<2x8xf32>
    %cst_122 = arith.constant 1.000000e+00 : f32
    %468 = vector.broadcast %cst_122 : f32 to vector<2x8xf32>
    %469 = arith.addf %468, %467 : vector<2x8xf32>
    %470 = arith.divf %468, %469 : vector<2x8xf32>
    %471 = vector.extract_strided_slice %453 {offsets = [0, 16], sizes = [2, 8], strides = [1, 1]} : vector<2x24xf32> to vector<2x8xf32>
    %472 = vector.extract_strided_slice %454 {offsets = [0, 16], sizes = [2, 8], strides = [1, 1]} : vector<2x24xf32> to vector<2x8xf32>
    %473 = vector.broadcast %3 : vector<1x8xf32> to vector<2x8xf32>
    %474 = arith.addf %472, %473 : vector<2x8xf32>
    %475 = arith.mulf %462, %474 : vector<2x8xf32>
    %476 = arith.addf %471, %475 : vector<2x8xf32>
    %477 = math.tanh %476 : vector<2x8xf32>
    %cst_123 = arith.constant 1.000000e+00 : f32
    %478 = vector.broadcast %cst_123 : f32 to vector<2x8xf32>
    %479 = arith.subf %478, %470 : vector<2x8xf32>
    %480 = arith.mulf %479, %477 : vector<2x8xf32>
    %481 = arith.mulf %470, %442 : vector<2x8xf32>
    %482 = arith.addf %480, %481 : vector<2x8xf32>
    %483 = arith.truncf %482 : vector<2x8xf32> to vector<2x8xbf16>
    %c0_124 = arith.constant 0 : index
    %484 = arith.index_cast %449 : i32 to index
    %c0_125 = arith.constant 0 : index
    %c0_126 = arith.constant 0 : index
    %485 = vector.load %arg4[%c0_124, %484, %c0_125, %c0_126] : memref<1x16x2x8xbf16, #tpu.memory_space<vmem>>, vector<1x1x2x8xbf16>
    %486 = vector.shape_cast %485 : vector<1x1x2x8xbf16> to vector<2x8xbf16>
    %487 = vector.shape_cast %483 : vector<2x8xbf16> to vector<1x1x2x8xbf16>
    tpu.vector_store %arg4[%c0_124, %484, %c0_125, %c0_126], %487 {strides = array<i32>} : memref<1x16x2x8xbf16, #tpu.memory_space<vmem>>, vector<1x1x2x8xbf16>,
    %c12_i32 = arith.constant 12 : i32
    %488 = arith.muli %6, %c12_i32 : i32
    %489 = arith.addi %4, %488 : i32
    %c0_127 = arith.constant 0 : index
    %490 = arith.index_cast %489 : i32 to index
    %c0_128 = arith.constant 0 : index
    %c0_129 = arith.constant 0 : index
    %491 = vector.load %arg1[%c0_127, %490, %c0_128, %c0_129] : memref<1x16x2x24xbf16, #tpu.memory_space<vmem>>, vector<1x1x2x24xbf16>
    %492 = vector.shape_cast %491 : vector<1x1x2x24xbf16> to vector<2x24xbf16>
    %493 = arith.extf %492 : vector<2x24xbf16> to vector<2x24xf32>
    %cst_130 = arith.constant dense<0.000000e+00> : vector<2x24xf32>
    %494 = tpu.matmul %482, %1, %cst_130 {dimension_numbers = #tpu.dot_dimension_numbers<[1], [0], [0], [1], [0, 0, 1, 1], [], []>} : vector<2x8xf32>, vector<8x24xf32>, vector<2x24xf32> -> vector<2x24xf32>
    %495 = vector.extract_strided_slice %493 {offsets = [0, 0], sizes = [2, 8], strides = [1, 1]} : vector<2x24xf32> to vector<2x8xf32>
    %496 = vector.extract_strided_slice %494 {offsets = [0, 0], sizes = [2, 8], strides = [1, 1]} : vector<2x24xf32> to vector<2x8xf32>
    %497 = arith.addf %495, %496 : vector<2x8xf32>
    %498 = arith.negf %497 : vector<2x8xf32>
    %499 = math.exp %498 : vector<2x8xf32>
    %cst_131 = arith.constant 1.000000e+00 : f32
    %500 = vector.broadcast %cst_131 : f32 to vector<2x8xf32>
    %501 = arith.addf %500, %499 : vector<2x8xf32>
    %502 = arith.divf %500, %501 : vector<2x8xf32>
    %503 = vector.extract_strided_slice %493 {offsets = [0, 8], sizes = [2, 8], strides = [1, 1]} : vector<2x24xf32> to vector<2x8xf32>
    %504 = vector.extract_strided_slice %494 {offsets = [0, 8], sizes = [2, 8], strides = [1, 1]} : vector<2x24xf32> to vector<2x8xf32>
    %505 = arith.addf %503, %504 : vector<2x8xf32>
    %506 = arith.negf %505 : vector<2x8xf32>
    %507 = math.exp %506 : vector<2x8xf32>
    %cst_132 = arith.constant 1.000000e+00 : f32
    %508 = vector.broadcast %cst_132 : f32 to vector<2x8xf32>
    %509 = arith.addf %508, %507 : vector<2x8xf32>
    %510 = arith.divf %508, %509 : vector<2x8xf32>
    %511 = vector.extract_strided_slice %493 {offsets = [0, 16], sizes = [2, 8], strides = [1, 1]} : vector<2x24xf32> to vector<2x8xf32>
    %512 = vector.extract_strided_slice %494 {offsets = [0, 16], sizes = [2, 8], strides = [1, 1]} : vector<2x24xf32> to vector<2x8xf32>
    %513 = vector.broadcast %3 : vector<1x8xf32> to vector<2x8xf32>
    %514 = arith.addf %512, %513 : vector<2x8xf32>
    %515 = arith.mulf %502, %514 : vector<2x8xf32>
    %516 = arith.addf %511, %515 : vector<2x8xf32>
    %517 = math.tanh %516 : vector<2x8xf32>
    %cst_133 = arith.constant 1.000000e+00 : f32
    %518 = vector.broadcast %cst_133 : f32 to vector<2x8xf32>
    %519 = arith.subf %518, %510 : vector<2x8xf32>
    %520 = arith.mulf %519, %517 : vector<2x8xf32>
    %521 = arith.mulf %510, %482 : vector<2x8xf32>
    %522 = arith.addf %520, %521 : vector<2x8xf32>
    %523 = arith.truncf %522 : vector<2x8xf32> to vector<2x8xbf16>
    %c0_134 = arith.constant 0 : index
    %524 = arith.index_cast %489 : i32 to index
    %c0_135 = arith.constant 0 : index
    %c0_136 = arith.constant 0 : index
    %525 = vector.load %arg4[%c0_134, %524, %c0_135, %c0_136] : memref<1x16x2x8xbf16, #tpu.memory_space<vmem>>, vector<1x1x2x8xbf16>
    %526 = vector.shape_cast %525 : vector<1x1x2x8xbf16> to vector<2x8xbf16>
    %527 = vector.shape_cast %523 : vector<2x8xbf16> to vector<1x1x2x8xbf16>
    tpu.vector_store %arg4[%c0_134, %524, %c0_135, %c0_136], %527 {strides = array<i32>} : memref<1x16x2x8xbf16, #tpu.memory_space<vmem>>, vector<1x1x2x8xbf16>,
    %c13_i32 = arith.constant 13 : i32
    %528 = arith.muli %6, %c13_i32 : i32
    %529 = arith.addi %4, %528 : i32
    %c0_137 = arith.constant 0 : index
    %530 = arith.index_cast %529 : i32 to index
    %c0_138 = arith.constant 0 : index
    %c0_139 = arith.constant 0 : index
    %531 = vector.load %arg1[%c0_137, %530, %c0_138, %c0_139] : memref<1x16x2x24xbf16, #tpu.memory_space<vmem>>, vector<1x1x2x24xbf16>
    %532 = vector.shape_cast %531 : vector<1x1x2x24xbf16> to vector<2x24xbf16>
    %533 = arith.extf %532 : vector<2x24xbf16> to vector<2x24xf32>
    %cst_140 = arith.constant dense<0.000000e+00> : vector<2x24xf32>
    %534 = tpu.matmul %522, %1, %cst_140 {dimension_numbers = #tpu.dot_dimension_numbers<[1], [0], [0], [1], [0, 0, 1, 1], [], []>} : vector<2x8xf32>, vector<8x24xf32>, vector<2x24xf32> -> vector<2x24xf32>
    %535 = vector.extract_strided_slice %533 {offsets = [0, 0], sizes = [2, 8], strides = [1, 1]} : vector<2x24xf32> to vector<2x8xf32>
    %536 = vector.extract_strided_slice %534 {offsets = [0, 0], sizes = [2, 8], strides = [1, 1]} : vector<2x24xf32> to vector<2x8xf32>
    %537 = arith.addf %535, %536 : vector<2x8xf32>
    %538 = arith.negf %537 : vector<2x8xf32>
    %539 = math.exp %538 : vector<2x8xf32>
    %cst_141 = arith.constant 1.000000e+00 : f32
    %540 = vector.broadcast %cst_141 : f32 to vector<2x8xf32>
    %541 = arith.addf %540, %539 : vector<2x8xf32>
    %542 = arith.divf %540, %541 : vector<2x8xf32>
    %543 = vector.extract_strided_slice %533 {offsets = [0, 8], sizes = [2, 8], strides = [1, 1]} : vector<2x24xf32> to vector<2x8xf32>
    %544 = vector.extract_strided_slice %534 {offsets = [0, 8], sizes = [2, 8], strides = [1, 1]} : vector<2x24xf32> to vector<2x8xf32>
    %545 = arith.addf %543, %544 : vector<2x8xf32>
    %546 = arith.negf %545 : vector<2x8xf32>
    %547 = math.exp %546 : vector<2x8xf32>
    %cst_142 = arith.constant 1.000000e+00 : f32
    %548 = vector.broadcast %cst_142 : f32 to vector<2x8xf32>
    %549 = arith.addf %548, %547 : vector<2x8xf32>
    %550 = arith.divf %548, %549 : vector<2x8xf32>
    %551 = vector.extract_strided_slice %533 {offsets = [0, 16], sizes = [2, 8], strides = [1, 1]} : vector<2x24xf32> to vector<2x8xf32>
    %552 = vector.extract_strided_slice %534 {offsets = [0, 16], sizes = [2, 8], strides = [1, 1]} : vector<2x24xf32> to vector<2x8xf32>
    %553 = vector.broadcast %3 : vector<1x8xf32> to vector<2x8xf32>
    %554 = arith.addf %552, %553 : vector<2x8xf32>
    %555 = arith.mulf %542, %554 : vector<2x8xf32>
    %556 = arith.addf %551, %555 : vector<2x8xf32>
    %557 = math.tanh %556 : vector<2x8xf32>
    %cst_143 = arith.constant 1.000000e+00 : f32
    %558 = vector.broadcast %cst_143 : f32 to vector<2x8xf32>
    %559 = arith.subf %558, %550 : vector<2x8xf32>
    %560 = arith.mulf %559, %557 : vector<2x8xf32>
    %561 = arith.mulf %550, %522 : vector<2x8xf32>
    %562 = arith.addf %560, %561 : vector<2x8xf32>
    %563 = arith.truncf %562 : vector<2x8xf32> to vector<2x8xbf16>
    %c0_144 = arith.constant 0 : index
    %564 = arith.index_cast %529 : i32 to index
    %c0_145 = arith.constant 0 : index
    %c0_146 = arith.constant 0 : index
    %565 = vector.load %arg4[%c0_144, %564, %c0_145, %c0_146] : memref<1x16x2x8xbf16, #tpu.memory_space<vmem>>, vector<1x1x2x8xbf16>
    %566 = vector.shape_cast %565 : vector<1x1x2x8xbf16> to vector<2x8xbf16>
    %567 = vector.shape_cast %563 : vector<2x8xbf16> to vector<1x1x2x8xbf16>
    tpu.vector_store %arg4[%c0_144, %564, %c0_145, %c0_146], %567 {strides = array<i32>} : memref<1x16x2x8xbf16, #tpu.memory_space<vmem>>, vector<1x1x2x8xbf16>,
    %c14_i32 = arith.constant 14 : i32
    %568 = arith.muli %6, %c14_i32 : i32
    %569 = arith.addi %4, %568 : i32
    %c0_147 = arith.constant 0 : index
    %570 = arith.index_cast %569 : i32 to index
    %c0_148 = arith.constant 0 : index
    %c0_149 = arith.constant 0 : index
    %571 = vector.load %arg1[%c0_147, %570, %c0_148, %c0_149] : memref<1x16x2x24xbf16, #tpu.memory_space<vmem>>, vector<1x1x2x24xbf16>
    %572 = vector.shape_cast %571 : vector<1x1x2x24xbf16> to vector<2x24xbf16>
    %573 = arith.extf %572 : vector<2x24xbf16> to vector<2x24xf32>
    %cst_150 = arith.constant dense<0.000000e+00> : vector<2x24xf32>
    %574 = tpu.matmul %562, %1, %cst_150 {dimension_numbers = #tpu.dot_dimension_numbers<[1], [0], [0], [1], [0, 0, 1, 1], [], []>} : vector<2x8xf32>, vector<8x24xf32>, vector<2x24xf32> -> vector<2x24xf32>
    %575 = vector.extract_strided_slice %573 {offsets = [0, 0], sizes = [2, 8], strides = [1, 1]} : vector<2x24xf32> to vector<2x8xf32>
    %576 = vector.extract_strided_slice %574 {offsets = [0, 0], sizes = [2, 8], strides = [1, 1]} : vector<2x24xf32> to vector<2x8xf32>
    %577 = arith.addf %575, %576 : vector<2x8xf32>
    %578 = arith.negf %577 : vector<2x8xf32>
    %579 = math.exp %578 : vector<2x8xf32>
    %cst_151 = arith.constant 1.000000e+00 : f32
    %580 = vector.broadcast %cst_151 : f32 to vector<2x8xf32>
    %581 = arith.addf %580, %579 : vector<2x8xf32>
    %582 = arith.divf %580, %581 : vector<2x8xf32>
    %583 = vector.extract_strided_slice %573 {offsets = [0, 8], sizes = [2, 8], strides = [1, 1]} : vector<2x24xf32> to vector<2x8xf32>
    %584 = vector.extract_strided_slice %574 {offsets = [0, 8], sizes = [2, 8], strides = [1, 1]} : vector<2x24xf32> to vector<2x8xf32>
    %585 = arith.addf %583, %584 : vector<2x8xf32>
    %586 = arith.negf %585 : vector<2x8xf32>
    %587 = math.exp %586 : vector<2x8xf32>
    %cst_152 = arith.constant 1.000000e+00 : f32
    %588 = vector.broadcast %cst_152 : f32 to vector<2x8xf32>
    %589 = arith.addf %588, %587 : vector<2x8xf32>
    %590 = arith.divf %588, %589 : vector<2x8xf32>
    %591 = vector.extract_strided_slice %573 {offsets = [0, 16], sizes = [2, 8], strides = [1, 1]} : vector<2x24xf32> to vector<2x8xf32>
    %592 = vector.extract_strided_slice %574 {offsets = [0, 16], sizes = [2, 8], strides = [1, 1]} : vector<2x24xf32> to vector<2x8xf32>
    %593 = vector.broadcast %3 : vector<1x8xf32> to vector<2x8xf32>
    %594 = arith.addf %592, %593 : vector<2x8xf32>
    %595 = arith.mulf %582, %594 : vector<2x8xf32>
    %596 = arith.addf %591, %595 : vector<2x8xf32>
    %597 = math.tanh %596 : vector<2x8xf32>
    %cst_153 = arith.constant 1.000000e+00 : f32
    %598 = vector.broadcast %cst_153 : f32 to vector<2x8xf32>
    %599 = arith.subf %598, %590 : vector<2x8xf32>
    %600 = arith.mulf %599, %597 : vector<2x8xf32>
    %601 = arith.mulf %590, %562 : vector<2x8xf32>
    %602 = arith.addf %600, %601 : vector<2x8xf32>
    %603 = arith.truncf %602 : vector<2x8xf32> to vector<2x8xbf16>
    %c0_154 = arith.constant 0 : index
    %604 = arith.index_cast %569 : i32 to index
    %c0_155 = arith.constant 0 : index
    %c0_156 = arith.constant 0 : index
    %605 = vector.load %arg4[%c0_154, %604, %c0_155, %c0_156] : memref<1x16x2x8xbf16, #tpu.memory_space<vmem>>, vector<1x1x2x8xbf16>
    %606 = vector.shape_cast %605 : vector<1x1x2x8xbf16> to vector<2x8xbf16>
    %607 = vector.shape_cast %603 : vector<2x8xbf16> to vector<1x1x2x8xbf16>
    tpu.vector_store %arg4[%c0_154, %604, %c0_155, %c0_156], %607 {strides = array<i32>} : memref<1x16x2x8xbf16, #tpu.memory_space<vmem>>, vector<1x1x2x8xbf16>,
    %c15_i32_157 = arith.constant 15 : i32
    %608 = arith.muli %6, %c15_i32_157 : i32
    %609 = arith.addi %4, %608 : i32
    %c0_158 = arith.constant 0 : index
    %610 = arith.index_cast %609 : i32 to index
    %c0_159 = arith.constant 0 : index
    %c0_160 = arith.constant 0 : index
    %611 = vector.load %arg1[%c0_158, %610, %c0_159, %c0_160] : memref<1x16x2x24xbf16, #tpu.memory_space<vmem>>, vector<1x1x2x24xbf16>
    %612 = vector.shape_cast %611 : vector<1x1x2x24xbf16> to vector<2x24xbf16>
    %613 = arith.extf %612 : vector<2x24xbf16> to vector<2x24xf32>
    %cst_161 = arith.constant dense<0.000000e+00> : vector<2x24xf32>
    %614 = tpu.matmul %602, %1, %cst_161 {dimension_numbers = #tpu.dot_dimension_numbers<[1], [0], [0], [1], [0, 0, 1, 1], [], []>} : vector<2x8xf32>, vector<8x24xf32>, vector<2x24xf32> -> vector<2x24xf32>
    %615 = vector.extract_strided_slice %613 {offsets = [0, 0], sizes = [2, 8], strides = [1, 1]} : vector<2x24xf32> to vector<2x8xf32>
    %616 = vector.extract_strided_slice %614 {offsets = [0, 0], sizes = [2, 8], strides = [1, 1]} : vector<2x24xf32> to vector<2x8xf32>
    %617 = arith.addf %615, %616 : vector<2x8xf32>
    %618 = arith.negf %617 : vector<2x8xf32>
    %619 = math.exp %618 : vector<2x8xf32>
    %cst_162 = arith.constant 1.000000e+00 : f32
    %620 = vector.broadcast %cst_162 : f32 to vector<2x8xf32>
    %621 = arith.addf %620, %619 : vector<2x8xf32>
    %622 = arith.divf %620, %621 : vector<2x8xf32>
    %623 = vector.extract_strided_slice %613 {offsets = [0, 8], sizes = [2, 8], strides = [1, 1]} : vector<2x24xf32> to vector<2x8xf32>
    %624 = vector.extract_strided_slice %614 {offsets = [0, 8], sizes = [2, 8], strides = [1, 1]} : vector<2x24xf32> to vector<2x8xf32>
    %625 = arith.addf %623, %624 : vector<2x8xf32>
    %626 = arith.negf %625 : vector<2x8xf32>
    %627 = math.exp %626 : vector<2x8xf32>
    %cst_163 = arith.constant 1.000000e+00 : f32
    %628 = vector.broadcast %cst_163 : f32 to vector<2x8xf32>
    %629 = arith.addf %628, %627 : vector<2x8xf32>
    %630 = arith.divf %628, %629 : vector<2x8xf32>
    %631 = vector.extract_strided_slice %613 {offsets = [0, 16], sizes = [2, 8], strides = [1, 1]} : vector<2x24xf32> to vector<2x8xf32>
    %632 = vector.extract_strided_slice %614 {offsets = [0, 16], sizes = [2, 8], strides = [1, 1]} : vector<2x24xf32> to vector<2x8xf32>
    %633 = vector.broadcast %3 : vector<1x8xf32> to vector<2x8xf32>
    %634 = arith.addf %632, %633 : vector<2x8xf32>
    %635 = arith.mulf %622, %634 : vector<2x8xf32>
    %636 = arith.addf %631, %635 : vector<2x8xf32>
    %637 = math.tanh %636 : vector<2x8xf32>
    %cst_164 = arith.constant 1.000000e+00 : f32
    %638 = vector.broadcast %cst_164 : f32 to vector<2x8xf32>
    %639 = arith.subf %638, %630 : vector<2x8xf32>
    %640 = arith.mulf %639, %637 : vector<2x8xf32>
    %641 = arith.mulf %630, %602 : vector<2x8xf32>
    %642 = arith.addf %640, %641 : vector<2x8xf32>
    %643 = arith.truncf %642 : vector<2x8xf32> to vector<2x8xbf16>
    %c0_165 = arith.constant 0 : index
    %644 = arith.index_cast %609 : i32 to index
    %c0_166 = arith.constant 0 : index
    %c0_167 = arith.constant 0 : index
    %645 = vector.load %arg4[%c0_165, %644, %c0_166, %c0_167] : memref<1x16x2x8xbf16, #tpu.memory_space<vmem>>, vector<1x1x2x8xbf16>
    %646 = vector.shape_cast %645 : vector<1x1x2x8xbf16> to vector<2x8xbf16>
    %647 = vector.shape_cast %643 : vector<2x8xbf16> to vector<1x1x2x8xbf16>
    tpu.vector_store %arg4[%c0_165, %644, %c0_166, %c0_167], %647 {strides = array<i32>} : memref<1x16x2x8xbf16, #tpu.memory_space<vmem>>, vector<1x1x2x8xbf16>,
    return
  }
  func.func @transform_0(%arg0: i32) -> (i32, i32, i32, i32) {
    %c0_i32 = arith.constant 0 : i32
    %c0_i32_0 = arith.constant 0 : i32
    %c0_i32_1 = arith.constant 0 : i32
    %c0_i32_2 = arith.constant 0 : i32
    return %arg0, %c0_i32, %c0_i32_0, %c0_i32_1 : i32, i32, i32, i32
  }
  func.func @transform_1(%arg0: i32) -> (i32, i32, i32) {
    %c0_i32 = arith.constant 0 : i32
    %c0_i32_0 = arith.constant 0 : i32
    %c0_i32_1 = arith.constant 0 : i32
    return %arg0, %c0_i32, %c0_i32_0 : i32, i32, i32
  }
  func.func @transform_2(%arg0: i32) -> (i32, i32, i32) {
    %c0_i32 = arith.constant 0 : i32
    %c0_i32_0 = arith.constant 0 : i32
    %c0_i32_1 = arith.constant 0 : i32
    return %arg0, %c0_i32, %c0_i32_0 : i32, i32, i32
  }
  func.func @transform_3(%arg0: i32) -> (i32, i32, i32, i32) {
    %c0_i32 = arith.constant 0 : i32
    %c0_i32_0 = arith.constant 0 : i32
    %c0_i32_1 = arith.constant 0 : i32
    %c0_i32_2 = arith.constant 0 : i32
    return %arg0, %c0_i32, %c0_i32_0, %c0_i32_1 : i32, i32, i32, i32
  }
}

module attributes {stable_mosaic.version = 11 : i64} {
  func.func @proj_kernel(%arg0: i32, %arg1: i32, %arg2: memref<2x32x8xbf16, #tpu.memory_space<vmem>>, %arg3: memref<2x1x8x24xbf16, #tpu.memory_space<vmem>>, %arg4: memref<1x1x24xf32, #tpu.memory_space<vmem>>, %arg5: memref<1x32x24xbf16, #tpu.memory_space<vmem>>) attributes {dimension_semantics = [#tpu.dimension_semantics<parallel>, #tpu.dimension_semantics<parallel>], iteration_bounds = array<i64: 2, 1>, scalar_prefetch = 0 : i64, scratch_operands = 0 : i64, tpu.core_type = #tpu.core_type<tc>, window_params = [{transform_indices = @transform_0, window_bounds = array<i64: 2, 32, 8>}, {transform_indices = @transform_1, window_bounds = array<i64: 2, 1, 8, 24>}, {transform_indices = @transform_2, window_bounds = array<i64: 1, 1, 24>}, {transform_indices = @transform_3, window_bounds = array<i64: 1, 32, 24>}]} {
    %c0 = arith.constant 0 : index
    %c0_0 = arith.constant 0 : index
    %c0_1 = arith.constant 0 : index
    %0 = vector.load %arg2[%c0, %c0_0, %c0_1] : memref<2x32x8xbf16, #tpu.memory_space<vmem>>, vector<1x32x8xbf16>
    %1 = vector.shape_cast %0 : vector<1x32x8xbf16> to vector<32x8xbf16>
    %c0_2 = arith.constant 0 : index
    %c0_3 = arith.constant 0 : index
    %c0_4 = arith.constant 0 : index
    %c0_5 = arith.constant 0 : index
    %2 = vector.load %arg3[%c0_2, %c0_3, %c0_4, %c0_5] : memref<2x1x8x24xbf16, #tpu.memory_space<vmem>>, vector<1x1x8x24xbf16>
    %3 = vector.shape_cast %2 : vector<1x1x8x24xbf16> to vector<8x24xbf16>
    %cst = arith.constant dense<0.000000e+00> : vector<32x24xf32>
    %4 = tpu.matmul %1, %3, %cst {dimension_numbers = #tpu.dot_dimension_numbers<[1], [0], [0], [1], [0, 0, 1, 1], [], []>} : vector<32x8xbf16>, vector<8x24xbf16>, vector<32x24xf32> -> vector<32x24xf32>
    %c1 = arith.constant 1 : index
    %c0_6 = arith.constant 0 : index
    %c0_7 = arith.constant 0 : index
    %5 = vector.load %arg2[%c1, %c0_6, %c0_7] : memref<2x32x8xbf16, #tpu.memory_space<vmem>>, vector<1x32x8xbf16>
    %6 = vector.shape_cast %5 : vector<1x32x8xbf16> to vector<32x8xbf16>
    %c1_8 = arith.constant 1 : index
    %c0_9 = arith.constant 0 : index
    %c0_10 = arith.constant 0 : index
    %c0_11 = arith.constant 0 : index
    %7 = vector.load %arg3[%c1_8, %c0_9, %c0_10, %c0_11] : memref<2x1x8x24xbf16, #tpu.memory_space<vmem>>, vector<1x1x8x24xbf16>
    %8 = vector.shape_cast %7 : vector<1x1x8x24xbf16> to vector<8x24xbf16>
    %cst_12 = arith.constant dense<0.000000e+00> : vector<32x24xf32>
    %9 = tpu.matmul %6, %8, %cst_12 {dimension_numbers = #tpu.dot_dimension_numbers<[1], [0], [0], [1], [0, 0, 1, 1], [], []>} : vector<32x8xbf16>, vector<8x24xbf16>, vector<32x24xf32> -> vector<32x24xf32>
    %10 = arith.addf %4, %9 : vector<32x24xf32>
    %c0_13 = arith.constant 0 : index
    %c0_14 = arith.constant 0 : index
    %c0_15 = arith.constant 0 : index
    %11 = vector.load %arg4[%c0_13, %c0_14, %c0_15] : memref<1x1x24xf32, #tpu.memory_space<vmem>>, vector<1x1x24xf32>
    %12 = vector.shape_cast %11 : vector<1x1x24xf32> to vector<1x24xf32>
    %13 = vector.broadcast %12 : vector<1x24xf32> to vector<32x24xf32>
    %14 = arith.addf %10, %13 : vector<32x24xf32>
    %15 = arith.truncf %14 : vector<32x24xf32> to vector<32x24xbf16>
    %c0_16 = arith.constant 0 : index
    %c0_17 = arith.constant 0 : index
    %c0_18 = arith.constant 0 : index
    %16 = vector.load %arg5[%c0_16, %c0_17, %c0_18] : memref<1x32x24xbf16, #tpu.memory_space<vmem>>, vector<1x32x24xbf16>
    %17 = vector.shape_cast %16 : vector<1x32x24xbf16> to vector<32x24xbf16>
    %18 = vector.shape_cast %15 : vector<32x24xbf16> to vector<1x32x24xbf16>
    tpu.vector_store %arg5[%c0_16, %c0_17, %c0_18], %18 {strides = array<i32>} : memref<1x32x24xbf16, #tpu.memory_space<vmem>>, vector<1x32x24xbf16>,
    return
  }
  func.func @transform_0(%arg0: i32, %arg1: i32) -> (i32, i32, i32) {
    %c0_i32 = arith.constant 0 : i32
    %c0_i32_0 = arith.constant 0 : i32
    %c0_i32_1 = arith.constant 0 : i32
    return %c0_i32, %arg1, %c0_i32_0 : i32, i32, i32
  }
  func.func @transform_1(%arg0: i32, %arg1: i32) -> (i32, i32, i32, i32) {
    %c0_i32 = arith.constant 0 : i32
    %c0_i32_0 = arith.constant 0 : i32
    %c0_i32_1 = arith.constant 0 : i32
    %c0_i32_2 = arith.constant 0 : i32
    return %c0_i32, %arg0, %c0_i32_0, %c0_i32_1 : i32, i32, i32, i32
  }
  func.func @transform_2(%arg0: i32, %arg1: i32) -> (i32, i32, i32) {
    %c0_i32 = arith.constant 0 : i32
    %c0_i32_0 = arith.constant 0 : i32
    %c0_i32_1 = arith.constant 0 : i32
    return %arg0, %c0_i32, %c0_i32_0 : i32, i32, i32
  }
  func.func @transform_3(%arg0: i32, %arg1: i32) -> (i32, i32, i32) {
    %c0_i32 = arith.constant 0 : i32
    %c0_i32_0 = arith.constant 0 : i32
    return %arg0, %arg1, %c0_i32 : i32, i32, i32
  }
}

module attributes {stable_mosaic.version = 11 : i64} {
  func.func @proj_kernel(%arg0: i32, %arg1: i32, %arg2: memref<2x32x8xbf16, #tpu.memory_space<vmem>>, %arg3: memref<2x1x8x8xbf16, #tpu.memory_space<vmem>>, %arg4: memref<1x1x8xf32, #tpu.memory_space<vmem>>, %arg5: memref<1x32x8xf32, #tpu.memory_space<vmem>>) attributes {dimension_semantics = [#tpu.dimension_semantics<parallel>, #tpu.dimension_semantics<parallel>], iteration_bounds = array<i64: 1, 1>, scalar_prefetch = 0 : i64, scratch_operands = 0 : i64, tpu.core_type = #tpu.core_type<tc>, window_params = [{transform_indices = @transform_0, window_bounds = array<i64: 2, 32, 8>}, {transform_indices = @transform_1, window_bounds = array<i64: 2, 1, 8, 8>}, {transform_indices = @transform_2, window_bounds = array<i64: 1, 1, 8>}, {transform_indices = @transform_3, window_bounds = array<i64: 1, 32, 8>}]} {
    %c0 = arith.constant 0 : index
    %c0_0 = arith.constant 0 : index
    %c0_1 = arith.constant 0 : index
    %0 = vector.load %arg2[%c0, %c0_0, %c0_1] : memref<2x32x8xbf16, #tpu.memory_space<vmem>>, vector<1x32x8xbf16>
    %1 = vector.shape_cast %0 : vector<1x32x8xbf16> to vector<32x8xbf16>
    %c0_2 = arith.constant 0 : index
    %c0_3 = arith.constant 0 : index
    %c0_4 = arith.constant 0 : index
    %c0_5 = arith.constant 0 : index
    %2 = vector.load %arg3[%c0_2, %c0_3, %c0_4, %c0_5] : memref<2x1x8x8xbf16, #tpu.memory_space<vmem>>, vector<1x1x8x8xbf16>
    %3 = vector.shape_cast %2 : vector<1x1x8x8xbf16> to vector<8x8xbf16>
    %cst = arith.constant dense<0.000000e+00> : vector<32x8xf32>
    %4 = tpu.matmul %1, %3, %cst {dimension_numbers = #tpu.dot_dimension_numbers<[1], [0], [0], [1], [0, 0, 1, 1], [], []>} : vector<32x8xbf16>, vector<8x8xbf16>, vector<32x8xf32> -> vector<32x8xf32>
    %c1 = arith.constant 1 : index
    %c0_6 = arith.constant 0 : index
    %c0_7 = arith.constant 0 : index
    %5 = vector.load %arg2[%c1, %c0_6, %c0_7] : memref<2x32x8xbf16, #tpu.memory_space<vmem>>, vector<1x32x8xbf16>
    %6 = vector.shape_cast %5 : vector<1x32x8xbf16> to vector<32x8xbf16>
    %c1_8 = arith.constant 1 : index
    %c0_9 = arith.constant 0 : index
    %c0_10 = arith.constant 0 : index
    %c0_11 = arith.constant 0 : index
    %7 = vector.load %arg3[%c1_8, %c0_9, %c0_10, %c0_11] : memref<2x1x8x8xbf16, #tpu.memory_space<vmem>>, vector<1x1x8x8xbf16>
    %8 = vector.shape_cast %7 : vector<1x1x8x8xbf16> to vector<8x8xbf16>
    %cst_12 = arith.constant dense<0.000000e+00> : vector<32x8xf32>
    %9 = tpu.matmul %6, %8, %cst_12 {dimension_numbers = #tpu.dot_dimension_numbers<[1], [0], [0], [1], [0, 0, 1, 1], [], []>} : vector<32x8xbf16>, vector<8x8xbf16>, vector<32x8xf32> -> vector<32x8xf32>
    %10 = arith.addf %4, %9 : vector<32x8xf32>
    %c0_13 = arith.constant 0 : index
    %c0_14 = arith.constant 0 : index
    %c0_15 = arith.constant 0 : index
    %11 = vector.load %arg4[%c0_13, %c0_14, %c0_15] : memref<1x1x8xf32, #tpu.memory_space<vmem>>, vector<1x1x8xf32>
    %12 = vector.shape_cast %11 : vector<1x1x8xf32> to vector<1x8xf32>
    %13 = vector.broadcast %12 : vector<1x8xf32> to vector<32x8xf32>
    %14 = arith.addf %10, %13 : vector<32x8xf32>
    %c0_16 = arith.constant 0 : index
    %c0_17 = arith.constant 0 : index
    %c0_18 = arith.constant 0 : index
    %15 = vector.load %arg5[%c0_16, %c0_17, %c0_18] : memref<1x32x8xf32, #tpu.memory_space<vmem>>, vector<1x32x8xf32>
    %16 = vector.shape_cast %15 : vector<1x32x8xf32> to vector<32x8xf32>
    %17 = vector.shape_cast %14 : vector<32x8xf32> to vector<1x32x8xf32>
    tpu.vector_store %arg5[%c0_16, %c0_17, %c0_18], %17 {strides = array<i32>} : memref<1x32x8xf32, #tpu.memory_space<vmem>>, vector<1x32x8xf32>,
    return
  }
  func.func @transform_0(%arg0: i32, %arg1: i32) -> (i32, i32, i32) {
    %c0_i32 = arith.constant 0 : i32
    %c0_i32_0 = arith.constant 0 : i32
    %c0_i32_1 = arith.constant 0 : i32
    return %c0_i32, %arg1, %c0_i32_0 : i32, i32, i32
  }
  func.func @transform_1(%arg0: i32, %arg1: i32) -> (i32, i32, i32, i32) {
    %c0_i32 = arith.constant 0 : i32
    %c0_i32_0 = arith.constant 0 : i32
    %c0_i32_1 = arith.constant 0 : i32
    %c0_i32_2 = arith.constant 0 : i32
    return %c0_i32, %arg0, %c0_i32_0, %c0_i32_1 : i32, i32, i32, i32
  }
  func.func @transform_2(%arg0: i32, %arg1: i32) -> (i32, i32, i32) {
    %c0_i32 = arith.constant 0 : i32
    %c0_i32_0 = arith.constant 0 : i32
    %c0_i32_1 = arith.constant 0 : i32
    return %arg0, %c0_i32, %c0_i32_0 : i32, i32, i32
  }
  func.func @transform_3(%arg0: i32, %arg1: i32) -> (i32, i32, i32) {
    %c0_i32 = arith.constant 0 : i32
    %c0_i32_0 = arith.constant 0 : i32
    return %arg0, %arg1, %c0_i32 : i32, i32, i32
  }
}

</mosaic_0001>

<llo_original>
// kernel: _lambda_.5
$region0: #{_lambda_.5}
  #allocation0 [shape = 'u32[]', space=smem, size = 0x4, offset = 0x4, fixed_abs, tag = 'smem constant byte address 0x4 - core index']
  #allocation1 [shape = 'u32[144,128]{1,0:T(1,128)}', space=vmem, size = 0x12000, scoped, tag = 'internal scratch']
  %s0 = inlined_call_operand.hbm [shape: bf16[1,32,16], index: 0, kind: input, shape index: {}]
  %s1 = inlined_call_operand.hbm [shape: bf16[1,2,16,24], index: 1, kind: input, shape index: {}]
  %s2 = inlined_call_operand.hbm [shape: f32[2,1,24], index: 2, kind: input, shape index: {}]
  %s3 = inlined_call_operand.hbm [shape: bf16[2,32,24], index: 3, kind: output, shape index: {}]
  %s4 = sld [smem:[#allocation0]]
  $region57: #{_lambda_.5} parent=0
    _
  %s6 = ssub.s32 1, %s4
  %s7 = scalar_select 0, %s6, %s4
  $region1: #{_lambda_.5} parent=0
    #allocation2 [shape = 'u8[8192]{0}', space=vmem, size = 0x2000, scoped, tag = 'input window, operand 0, single buffered']
    #allocation3 [shape = 's32[2]{0}', space=sflag, size = 0x8, scoped, tag = 'scoped memory for _lambda_.5']
    #allocation4 [shape = 's32[2]{0}', space=sflag, size = 0x8, scoped, tag = 'scoped memory for _lambda_.5']
    #allocation5 [shape = 'u8[8192]{0}', space=vmem, size = 0x2000, scoped, tag = 'input window, operand 1']
    #allocation6 [shape = 's32[2]{0}', space=sflag, size = 0x8, scoped, tag = 'scoped memory for _lambda_.5']
    #allocation7 [shape = 'u8[1024]{0}', space=vmem, size = 0x400, scoped, tag = 'input window, operand 2']
    #allocation8 [shape = 'u8[16384]{0}', space=vmem, size = 0x4000, scoped, tag = 'output window, operand 0']
    %8 = vsyncpa [#allocation3], 0
    %9 = vsyncpa [#allocation6], 0
    %s10 = scalar_lea.sflag [#allocation6], 1
    %11 = vsyncpa %s10, 0
    %12 = vsyncpa [#allocation4], 0
    %s13 = scalar_lea.sflag [#allocation4], 1
    %14 = vsyncpa %s13, 0
    loop: start=0, step=1, limit=4
    $region2: #{_lambda_.5} parent=1 // loop_pre_header
      _
    $region3: #{_lambda_.5} parent=1 // loop_header
      %s16 = sphi 0, %s20
      %p17 = scmp.ge.s32.totalorder %s16, 4
      %s23 = sphi 0, %s35
      %s24 = sphi 0, %s31
      %s25 = sphi 0, %s23
      %s26 = sphi 0, %s24
      %s27 = sphi 0, %s25
      %s28 = sphi 0, %s26
      %s38 = sphi 0, %s40
      %s41 = sphi 0, %s38
      %s42 = sphi 0, %s41
      %s58 = sphi 0, %s42
      %s64 = sphi 0, %s66
      %s67 = sphi 0, %s64
      %s68 = sphi 0, %s67
      %s84 = sphi 0, %s68
      %s90 = sphi 0, %s92
      %s93 = sphi 0, %s90
      %s94 = sphi 0, %s93
      %s110 = sphi 0, %s94
      %s118 = sphi 0, %s120
      %s121 = sphi 0, %s118
      %s122 = sphi 0, %s121
      %s138 = sphi 0, %s122
    $region4: #{_lambda_.5} parent=1 // loop_header_branch
      %19 = sbr.rel (%p17) target = $region8
    $region5: #{_lambda_.5} parent=1 // loop_body
      %s21 = ssub.s32 %s16, 1
      %s22 = ssub.s32 %s16, 2
      %s29 = sadd.s32 1, %s24
      %p30 = scmp.ge.s32.totalorder %s29, 1
      %s31 = scalar_select %p30, 0, %s29
      %s32 = sadd.s32 1, %s23
      %s33 = scalar_select %p30, %s32, %s23
      %p34 = scmp.ge.s32.totalorder %s33, 2
      %s35 = scalar_select %p34, 0, %s33
      %s36 = ssub.s32 %s24, %s31
      %p37 = scmp.eq.s32.totalorder %s36, 0
      %s39 = sadd.s32 %s38, 1
      %s40 = scalar_select %p37, %s38, %s39
      %p43 = pneg %p37
      %p44 = scmp.eq.s32.totalorder %s16, 1
      %p45 = por %p43, %p44
      %p46 = scmp.ne.s32.totalorder %s38, %s41
      %p47 = scmp.eq.s32.totalorder %s16, 0
      %p48 = por %p46, %p47
      %p49 = scmp.ne.s32.totalorder %s38, %s41
      %p50 = scmp.eq.s32.totalorder %s21, 1
      %p51 = por %p49, %p50
      %p52 = scmp.ne.s32.totalorder %s41, %s42
      %p53 = scmp.eq.s32.totalorder %s21, 0
      %p54 = por %p52, %p53
      %p55 = scmp.ne.s32.totalorder %s41, %s42
      %p56 = scmp.eq.s32.totalorder %s22, 1
      %p57 = por %p55, %p56
      %p59 = scmp.ne.s32.totalorder %s42, %s58
      %p60 = scmp.eq.s32.totalorder %s22, 0
      %p61 = por %p59, %p60
      %s62 = ssub.s32 %s23, %s35
      %p63 = scmp.eq.s32.totalorder %s62, 0
      %s65 = sadd.s32 %s64, 1
      %s66 = scalar_select %p63, %s64, %s65
      %p69 = pneg %p63
      %p70 = scmp.eq.s32.totalorder %s16, 1
      %p71 = por %p69, %p70
      %p72 = scmp.ne.s32.totalorder %s64, %s67
      %p73 = scmp.eq.s32.totalorder %s16, 0
      %p74 = por %p72, %p73
      %p75 = scmp.ne.s32.totalorder %s64, %s67
      %p76 = scmp.eq.s32.totalorder %s21, 1
      %p77 = por %p75, %p76
      %p78 = scmp.ne.s32.totalorder %s67, %s68
      %p79 = scmp.eq.s32.totalorder %s21, 0
      %p80 = por %p78, %p79
      %p81 = scmp.ne.s32.totalorder %s67, %s68
      %p82 = scmp.eq.s32.totalorder %s22, 1
      %p83 = por %p81, %p82
      %p85 = scmp.ne.s32.totalorder %s68, %s84
      %p86 = scmp.eq.s32.totalorder %s22, 0
      %p87 = por %p85, %p86
      %s88 = ssub.s32 %s23, %s35
      %p89 = scmp.eq.s32.totalorder %s88, 0
      %s91 = sadd.s32 %s90, 1
      %s92 = scalar_select %p89, %s90, %s91
      %p95 = pneg %p89
      %p96 = scmp.eq.s32.totalorder %s16, 1
      %p97 = por %p95, %p96
      %p98 = scmp.ne.s32.totalorder %s90, %s93
      %p99 = scmp.eq.s32.totalorder %s16, 0
      %p100 = por %p98, %p99
      %p101 = scmp.ne.s32.totalorder %s90, %s93
      %p102 = scmp.eq.s32.totalorder %s21, 1
      %p103 = por %p101, %p102
      %p104 = scmp.ne.s32.totalorder %s93, %s94
      %p105 = scmp.eq.s32.totalorder %s21, 0
      %p106 = por %p104, %p105
      %p107 = scmp.ne.s32.totalorder %s93, %s94
      %p108 = scmp.eq.s32.totalorder %s22, 1
      %p109 = por %p107, %p108
      %p111 = scmp.ne.s32.totalorder %s94, %s110
      %p112 = scmp.eq.s32.totalorder %s22, 0
      %p113 = por %p111, %p112
      %s114 = ssub.s32 %s23, %s35
      %s115 = ssub.s32 %s24, %s31
      %s116 = sor.u32 %s114, %s115
      %p117 = scmp.eq.s32.totalorder %s116, 0
      %s119 = sadd.s32 %s118, 1
      %s120 = scalar_select %p117, %s118, %s119
      %p123 = pneg %p117
      %p124 = scmp.eq.s32.totalorder %s16, 1
      %p125 = por %p123, %p124
      %p126 = scmp.ne.s32.totalorder %s118, %s121
      %p127 = scmp.eq.s32.totalorder %s16, 0
      %p128 = por %p126, %p127
      %p129 = scmp.ne.s32.totalorder %s118, %s121
      %p130 = scmp.eq.s32.totalorder %s21, 1
      %p131 = por %p129, %p130
      %p132 = scmp.ne.s32.totalorder %s121, %s122
      %p133 = scmp.eq.s32.totalorder %s21, 0
      %p134 = por %p132, %p133
      %p135 = scmp.ne.s32.totalorder %s121, %s122
      %p136 = scmp.eq.s32.totalorder %s22, 1
      %p137 = por %p135, %p136
      %p139 = scmp.ne.s32.totalorder %s122, %s138
      %p140 = scmp.eq.s32.totalorder %s22, 0
      %p141 = por %p139, %p140
      %p142 = scmp.le.s32.totalorder 1, %s16
      %p143 = scmp.lt.s32.totalorder %s16, 3
      %p144 = pnand %p142, %p143
      %p145 = pneg %p144
      // Predicated region
      $region9: #{_lambda_.5} parent=5 // pred_check
        _
      $region10: #{_lambda_.5} parent=5 // pred_check_branch
        %147 = sbr.rel (%p144) target = $region12
      $region11: #{_lambda_.5} parent=5 // pred_region
        %s148 = ssub.s32 %s16, 1
        // Predicated region
        $region13: #{_lambda_.5} parent=11 // pred_check
          %p149 = pneg %p54
        $region14: #{_lambda_.5} parent=11 // pred_check_branch
          %151 = sbr.rel (%p149) target = $region16
        $region15: #{_lambda_.5} parent=11 // pred_region
          %s152 = smul.u32 4, %s26
          %s154 = ssub.s32 256, 256
          %155 = vsyncadd [#allocation3], %s154
          %s156 = smul.addr %s152, 64
          %s157 = scalar_lea.hbm %s0, %s156
          %s158 = sshll.u32 [#allocation2], 4
          %s159 = int_to_ptr.vmem [resolvable:$true] %s158
          %164 = dma.hbm_to_vmem [thread:$0]  %s157, 256, %s159, [#allocation3], 64, 64, 4
        $region16: #{_lambda_.5} parent=11 // pred_fallthru
          _
      $region12: #{_lambda_.5} parent=5 // pred_fallthru
        _
      %p165 = scmp.lt.s32.totalorder %s16, 2
      // Predicated region
      $region17: #{_lambda_.5} parent=5 // pred_check
        %p166 = pneg %p165
      $region18: #{_lambda_.5} parent=5 // pred_check_branch
        %168 = sbr.rel (%p166) target = $region20
      $region19: #{_lambda_.5} parent=5 // pred_region
        // Predicated region
        $region21: #{_lambda_.5} parent=19 // pred_check
          %p169 = pneg %p74
        $region22: #{_lambda_.5} parent=19 // pred_check_branch
          %171 = sbr.rel (%p169) target = $region24
        $region23: #{_lambda_.5} parent=19 // pred_region
          %s172 = sand.u32 %s16, 1
          %s173 = scalar_lea.sflag [#allocation6], %s172
          %s174 = sand.u32 %s64, 1
          %s175 = smul.addr %s174, 8
          %s176 = scalar_lea.vmem [#allocation5], %s175
          %s178 = ssub.s32 128, 128
          %179 = vsyncadd %s173, %s178
          %s180 = smul.addr %s23, 2
          %s181 = smul.addr %s180, 64
          %s182 = scalar_lea.hbm %s1, %s181
          %s183 = sshll.u32 %s176, 4
          %s184 = int_to_ptr.vmem [resolvable:$true] %s183
          %189 = dma.hbm_to_vmem [thread:$0]  %s182, 128, %s184, %s173, 64, 64, 4
        $region24: #{_lambda_.5} parent=19 // pred_fallthru
          _
        // Predicated region
        $region25: #{_lambda_.5} parent=19 // pred_check
          %p190 = pneg %p100
        $region26: #{_lambda_.5} parent=19 // pred_check_branch
          %192 = sbr.rel (%p190) target = $region28
        $region27: #{_lambda_.5} parent=19 // pred_region
          %s193 = sand.u32 %s16, 1
          %s194 = scalar_lea.sflag [#allocation6], %s193
          %s195 = sand.u32 %s90, 1
          %s196 = scalar_lea.vmem [#allocation7], %s195
          %s198 = ssub.s32 16, 16
          %199 = vsyncadd %s194, %s198
          %s200 = smul.addr %s23, 16
          %s201 = scalar_lea.hbm %s2, %s200
          %s203 = sshll.u32 %s196, 4
          %s204 = int_to_ptr.vmem [resolvable:$true] %s203
          %206 = dma.hbm_to_vmem [thread:$0]  %s201, 16, %s204, %s194
        $region28: #{_lambda_.5} parent=19 // pred_fallthru
          _
      $region20: #{_lambda_.5} parent=5 // pred_fallthru
        _
      %p207 = scmp.le.s32.totalorder 1, %s16
      %p208 = scmp.lt.s32.totalorder %s16, 3
      %p209 = pnand %p207, %p208
      %p210 = pneg %p209
      // Predicated region
      $region29: #{_lambda_.5} parent=5 // pred_check
        _
      $region30: #{_lambda_.5} parent=5 // pred_check_branch
        %212 = sbr.rel (%p209) target = $region32
      $region31: #{_lambda_.5} parent=5 // pred_region
        %s213 = ssub.s32 %s16, 1
        // Predicated region
        $region33: #{_lambda_.5} parent=31 // pred_check
          %p214 = pneg %p54
        $region34: #{_lambda_.5} parent=31 // pred_check_branch
          %216 = sbr.rel (%p214) target = $region36
        $region35: #{_lambda_.5} parent=31 // pred_region
          %217 = dma.done [#allocation3], 256
        $region36: #{_lambda_.5} parent=31 // pred_fallthru
          _
        %s218 = sand.u32 %s21, 1
        %s219 = scalar_lea.sflag [#allocation6], %s218
        %s220 = sand.u32 %s67, 1
        %s221 = smul.addr %s220, 8
        %s222 = scalar_lea.vmem [#allocation5], %s221
        // Predicated region
        $region37: #{_lambda_.5} parent=31 // pred_check
          %p223 = pneg %p80
        $region38: #{_lambda_.5} parent=31 // pred_check_branch
          %225 = sbr.rel (%p223) target = $region40
        $region39: #{_lambda_.5} parent=31 // pred_region
          %226 = dma.done %s219, 128
        $region40: #{_lambda_.5} parent=31 // pred_fallthru
          _
        %s227 = sand.u32 %s21, 1
        %s228 = scalar_lea.sflag [#allocation6], %s227
        %s229 = sand.u32 %s93, 1
        %s230 = scalar_lea.vmem [#allocation7], %s229
        // Predicated region
        $region41: #{_lambda_.5} parent=31 // pred_check
          %p231 = pneg %p106
        $region42: #{_lambda_.5} parent=31 // pred_check_branch
          %233 = sbr.rel (%p231) target = $region44
        $region43: #{_lambda_.5} parent=31 // pred_region
          %234 = dma.done %s228, 16
        $region44: #{_lambda_.5} parent=31 // pred_fallthru
          _
        %p235 = pneg %p54
        %p236 = pneg %p51
        %s237 = sand.u32 %s21, 1
        %s238 = scalar_lea.sflag [#allocation6], %s237
        %s239 = sand.u32 %s67, 1
        %s240 = smul.addr %s239, 8
        %s241 = scalar_lea.vmem [#allocation5], %s240
        %p242 = pneg %p80
        %p243 = pneg %p77
        %s244 = sand.u32 %s21, 1
        %s245 = scalar_lea.sflag [#allocation6], %s244
        %s246 = sand.u32 %s93, 1
        %s247 = scalar_lea.vmem [#allocation7], %s246
        %p248 = pneg %p106
        %p249 = pneg %p103
        %p250 = pneg %p134
        %p251 = pneg %p131
        %s252 = sand.u32 %s121, 1
        %s253 = scalar_lea.sflag [#allocation4], %s252
        %s254 = sand.u32 %s121, 1
        %s255 = smul.addr %s254, 16
        %s256 = scalar_lea.vmem [#allocation8], %s255
        %s257 = smul.u32 4, %s26
        %s258 = smul.u32 4, %s26
        %v260 = vld [vmem:[#allocation2] sm:$0xf]
        %v261 = vld [vmem:[#allocation2 + $0x4] sm:$0xf]
        %v262 = vld [vmem:[#allocation2 + $0x8] sm:$0xf]
        %v263 = vld [vmem:[#allocation2 + $0xc] sm:$0xf]
        %v264 = vld [vmem:[%s222] sm:$0xf]
        %v265 = vld [vmem:[%s222 + $0x4] sm:$0xf]
        %v266 = vld [vmem:[%s230] sm:$0x1]
        %v268 = vlaneseq
        %v269 = vshrl.u32 %v268, 7
        %v270 = vsub.s32 0, %v269
        %v271 = vrot.slane %v266, %v270
        %v277 = vunpack.c.l.b16 %v260
        %v278 = vunpack.c.l.b16 %v261
        %v279 = vunpack.c.l.b16 %v262
        %v280 = vunpack.c.l.b16 %v263
        %v281 = vpack.c.b16 %v278, %v277
        %v282 = vpack.c.b16 %v280, %v279
        %v285 = vunpack.c.l.b16 %v264
        %v286 = vunpack.c.l.b16 %v265
        %v287 = vpack.c.b16 %v286, %v285
        %vm289 = vcmask 130048
        %v291 = vsel %vm289, %v281, 0
        %v294 = vsel %vm289, %v282, 0
        %296 = vmatprep.subr.bf16.mxu0 0
        %297 = vmatpush1.bf16.msra.mxu0 %v287
        %298 = vmatprep.subr.bf16.mxu0 0
        %299 = vmatpush1.bf16.msra.mxu0 0
        %300 = vmatprep.subr.bf16.mxu0 0
        %301 = vmatpush1.bf16.msra.mxu0 0
        %302 = vmatprep.subr.bf16.mxu0 0
        %303 = vmatpush1.bf16.msra.mxu0 0
        %304 = vmatprep.subr.bf16.mxu0 0
        %305 = vmatpush1.bf16.msra.mxu0 0
        %306 = vmatprep.subr.bf16.mxu0 0
        %307 = vmatpush1.bf16.msra.mxu0 0
        %308 = vmatprep.subr.bf16.mxu0 0
        %309 = vmatpush1.bf16.msra.mxu0 0
        %310 = vmatprep.subr.bf16.mxu0 0
        %311 = vmatpush1.bf16.msra.mxu0 0
        %312 = vmatprep.subr.bf16.mxu0 0
        %313 = vmatpush1.bf16.msra.mxu0 0
        %314 = vmatprep.subr.bf16.mxu0 0
        %315 = vmatpush1.bf16.msra.mxu0 0
        %316 = vmatprep.subr.bf16.mxu0 0
        %317 = vmatpush1.bf16.msra.mxu0 0
        %318 = vmatprep.subr.bf16.mxu0 0
        %319 = vmatpush1.bf16.msra.mxu0 0
        %320 = vmatprep.subr.bf16.mxu0 0
        %321 = vmatpush1.bf16.msra.mxu0 0
        %322 = vmatprep.subr.bf16.mxu0 0
        %323 = vmatpush1.bf16.msra.mxu0 0
        %324 = vmatprep.subr.bf16.mxu0 0
        %325 = vmatpush1.bf16.msra.mxu0 0
        %326 = vmatprep.subr.bf16.mxu0 0
        %327 = vmatpush1.bf16.msra.mxu0 0
        %328 = vmatprep.mubr.bf16.mxu0 0
        %329 = vmatmul.mubr.bf16.gmra.mrb[0].mxu0 %v291
        %v330 = vpop.f32.mrb[0].mxu0
        %v331 = vadd.f32 %v271, %v330
        %v332 = vpop.f32.mrb[0].mxu0
        %v333 = vpop.f32.mrb[0].mxu0
        %v334 = vadd.f32 %v271, %v333
        %v335 = vpop.f32.mrb[0].mxu0
        %336 = vmatprep.mubr.bf16.mxu0 0
        %337 = vmatmul.mubr.bf16.gmra.mrb[0].mxu0 %v294
        %v338 = vpop.f32.mrb[0].mxu0
        %v339 = vadd.f32 %v271, %v338
        %v340 = vpop.f32.mrb[0].mxu0
        %v341 = vpop.f32.mrb[0].mxu0
        %v342 = vadd.f32 %v271, %v341
        %v343 = vpop.f32.mrb[0].mxu0
        %344 = vdwg.mxu0
        %v345 = vpack.c.bf16 %v334, %v331
        %v346 = vpack.c.bf16 %v342, %v339
        %v349 = vunpack.c.l.b16 %v345
        %v350 = vunpack.c.h.b16 %v345
        %v351 = vunpack.c.l.b16 %v346
        %v352 = vunpack.c.h.b16 %v346
        %v353 = vpack.c.b16 %v349, %v349
        %v354 = vpack.c.b16 %v350, %v350
        %v355 = vpack.c.b16 %v351, %v351
        %v356 = vpack.c.b16 %v352, %v352
        %vm361 = vcmask 191488
        %362 = vst.msk [vmem:[%s256] sm:$0xf] %vm361, %v353
        %363 = vst.msk [vmem:[%s256 + $0x4] sm:$0xf] %vm361, %v354
        %364 = vst.msk [vmem:[%s256 + $0x8] sm:$0xf] %vm361, %v355
        %365 = vst.msk [vmem:[%s256 + $0xc] sm:$0xf] %vm361, %v356
        %s366 = sand.u32 %s121, 1
        %s367 = scalar_lea.sflag [#allocation4], %s366
        %s368 = sand.u32 %s121, 1
        %s369 = smul.addr %s368, 16
        %s370 = scalar_lea.vmem [#allocation8], %s369
        // Predicated region
        $region45: #{_lambda_.5} parent=31 // pred_check
          %p371 = pneg %p131
        $region46: #{_lambda_.5} parent=31 // pred_check_branch
          %373 = sbr.rel (%p371) target = $region48
        $region47: #{_lambda_.5} parent=31 // pred_region
          %s374 = smul.u32 4, %s26
          %s376 = ssub.s32 256, 256
          %377 = vsyncadd %s367, %s376
          %s378 = smul.addr %s25, 4
          %s379 = sadd.s32 %s374, %s378
          %s380 = smul.addr %s379, 64
          %s381 = scalar_lea.hbm %s3, %s380
          %s382 = sshll.u32 %s370, 4
          %s383 = int_to_ptr.vmem [resolvable:$true] %s382
          %388 = dma.vmem_to_hbm [thread:$0]  %s383, 256, %s381, %s367, 64, 64, 4
        $region48: #{_lambda_.5} parent=31 // pred_fallthru
          _
      $region32: #{_lambda_.5} parent=5 // pred_fallthru
        _
      %p389 = scmp.le.s32.totalorder 2, %s16
      // Predicated region
      $region49: #{_lambda_.5} parent=5 // pred_check
        %p390 = pneg %p389
      $region50: #{_lambda_.5} parent=5 // pred_check_branch
        %392 = sbr.rel (%p390) target = $region52
      $region51: #{_lambda_.5} parent=5 // pred_region
        %s393 = ssub.s32 %s16, 2
        // Predicated region
        $region53: #{_lambda_.5} parent=51 // pred_check
          %p394 = pneg %p137
        $region54: #{_lambda_.5} parent=51 // pred_check_branch
          %396 = sbr.rel (%p394) target = $region56
        $region55: #{_lambda_.5} parent=51 // pred_region
          %s397 = sand.u32 %s122, 1
          %s398 = scalar_lea.sflag [#allocation4], %s397
          %s399 = sand.u32 %s122, 1
          %s400 = smul.addr %s399, 16
          %s401 = scalar_lea.vmem [#allocation8], %s400
          %402 = dma.done %s398, 256
        $region56: #{_lambda_.5} parent=51 // pred_fallthru
          _
      $region52: #{_lambda_.5} parent=5 // pred_fallthru
        _
    $region6: #{_lambda_.5} parent=1 // loop_footer
      %s20 = sadd.s32 1, %s16
    $region7: #{_lambda_.5} parent=1 // loop_footer_branch
      %15 = sbr.rel target = $region3
    $region8: #{_lambda_.5} parent=1 // loop_exit
      _
    %403 = vsyncpa [#allocation3], 1
    %s404 = scalar_lea.sflag [#allocation3], 1
    %405 = vsyncpa %s404, 1
    %406 = vsyncpa [#allocation6], 1
    %s407 = scalar_lea.sflag [#allocation6], 1
    %408 = vsyncpa %s407, 1
    %409 = vsyncpa [#allocation4], 1
    %s410 = scalar_lea.sflag [#allocation4], 1
    %411 = vsyncpa %s410, 1

// kernel: _lambda_.7
$region0: #{_lambda_.7}
  #allocation0 [shape = 'u32[]', space=smem, size = 0x4, offset = 0x4, fixed_abs, tag = 'smem constant byte address 0x4 - core index']
  #allocation1 [shape = 'u32[144,128]{1,0:T(1,128)}', space=vmem, size = 0x12000, scoped, tag = 'internal scratch']
  %s0 = inlined_call_operand.hbm [shape: bf16[2,32,8], index: 0, kind: input, shape index: {}]
  %s1 = inlined_call_operand.hbm [shape: bf16[2,2,8,24], index: 1, kind: input, shape index: {}]
  %s2 = inlined_call_operand.hbm [shape: f32[2,1,24], index: 2, kind: input, shape index: {}]
  %s3 = inlined_call_operand.hbm [shape: bf16[2,32,24], index: 3, kind: output, shape index: {}]
  %s4 = sld [smem:[#allocation0]]
  $region57: #{_lambda_.7} parent=0
    _
  %s6 = ssub.s32 1, %s4
  %s7 = scalar_select 0, %s6, %s4
  $region1: #{_lambda_.7} parent=0
    #allocation2 [shape = 'u8[16384]{0}', space=vmem, size = 0x4000, scoped, tag = 'input window, operand 0, single buffered']
    #allocation3 [shape = 's32[2]{0}', space=sflag, size = 0x8, scoped, tag = 'scoped memory for _lambda_.7']
    #allocation4 [shape = 's32[2]{0}', space=sflag, size = 0x8, scoped, tag = 'scoped memory for _lambda_.7']
    #allocation5 [shape = 'u8[8192]{0}', space=vmem, size = 0x2000, scoped, tag = 'input window, operand 1']
    #allocation6 [shape = 's32[2]{0}', space=sflag, size = 0x8, scoped, tag = 'scoped memory for _lambda_.7']
    #allocation7 [shape = 'u8[1024]{0}', space=vmem, size = 0x400, scoped, tag = 'input window, operand 2']
    #allocation8 [shape = 'u8[16384]{0}', space=vmem, size = 0x4000, scoped, tag = 'output window, operand 0']
    %8 = vsyncpa [#allocation3], 0
    %9 = vsyncpa [#allocation6], 0
    %s10 = scalar_lea.sflag [#allocation6], 1
    %11 = vsyncpa %s10, 0
    %12 = vsyncpa [#allocation4], 0
    %s13 = scalar_lea.sflag [#allocation4], 1
    %14 = vsyncpa %s13, 0
    loop: start=0, step=1, limit=4
    $region2: #{_lambda_.7} parent=1 // loop_pre_header
      _
    $region3: #{_lambda_.7} parent=1 // loop_header
      %s16 = sphi 0, %s20
      %p17 = scmp.ge.s32.totalorder %s16, 4
      %s23 = sphi 0, %s35
      %s24 = sphi 0, %s31
      %s25 = sphi 0, %s23
      %s26 = sphi 0, %s24
      %s27 = sphi 0, %s25
      %s28 = sphi 0, %s26
      %s38 = sphi 0, %s40
      %s41 = sphi 0, %s38
      %s42 = sphi 0, %s41
      %s58 = sphi 0, %s42
      %s64 = sphi 0, %s66
      %s67 = sphi 0, %s64
      %s68 = sphi 0, %s67
      %s84 = sphi 0, %s68
      %s90 = sphi 0, %s92
      %s93 = sphi 0, %s90
      %s94 = sphi 0, %s93
      %s110 = sphi 0, %s94
      %s118 = sphi 0, %s120
      %s121 = sphi 0, %s118
      %s122 = sphi 0, %s121
      %s138 = sphi 0, %s122
    $region4: #{_lambda_.7} parent=1 // loop_header_branch
      %19 = sbr.rel (%p17) target = $region8
    $region5: #{_lambda_.7} parent=1 // loop_body
      %s21 = ssub.s32 %s16, 1
      %s22 = ssub.s32 %s16, 2
      %s29 = sadd.s32 1, %s24
      %p30 = scmp.ge.s32.totalorder %s29, 1
      %s31 = scalar_select %p30, 0, %s29
      %s32 = sadd.s32 1, %s23
      %s33 = scalar_select %p30, %s32, %s23
      %p34 = scmp.ge.s32.totalorder %s33, 2
      %s35 = scalar_select %p34, 0, %s33
      %s36 = ssub.s32 %s24, %s31
      %p37 = scmp.eq.s32.totalorder %s36, 0
      %s39 = sadd.s32 %s38, 1
      %s40 = scalar_select %p37, %s38, %s39
      %p43 = pneg %p37
      %p44 = scmp.eq.s32.totalorder %s16, 1
      %p45 = por %p43, %p44
      %p46 = scmp.ne.s32.totalorder %s38, %s41
      %p47 = scmp.eq.s32.totalorder %s16, 0
      %p48 = por %p46, %p47
      %p49 = scmp.ne.s32.totalorder %s38, %s41
      %p50 = scmp.eq.s32.totalorder %s21, 1
      %p51 = por %p49, %p50
      %p52 = scmp.ne.s32.totalorder %s41, %s42
      %p53 = scmp.eq.s32.totalorder %s21, 0
      %p54 = por %p52, %p53
      %p55 = scmp.ne.s32.totalorder %s41, %s42
      %p56 = scmp.eq.s32.totalorder %s22, 1
      %p57 = por %p55, %p56
      %p59 = scmp.ne.s32.totalorder %s42, %s58
      %p60 = scmp.eq.s32.totalorder %s22, 0
      %p61 = por %p59, %p60
      %s62 = ssub.s32 %s23, %s35
      %p63 = scmp.eq.s32.totalorder %s62, 0
      %s65 = sadd.s32 %s64, 1
      %s66 = scalar_select %p63, %s64, %s65
      %p69 = pneg %p63
      %p70 = scmp.eq.s32.totalorder %s16, 1
      %p71 = por %p69, %p70
      %p72 = scmp.ne.s32.totalorder %s64, %s67
      %p73 = scmp.eq.s32.totalorder %s16, 0
      %p74 = por %p72, %p73
      %p75 = scmp.ne.s32.totalorder %s64, %s67
      %p76 = scmp.eq.s32.totalorder %s21, 1
      %p77 = por %p75, %p76
      %p78 = scmp.ne.s32.totalorder %s67, %s68
      %p79 = scmp.eq.s32.totalorder %s21, 0
      %p80 = por %p78, %p79
      %p81 = scmp.ne.s32.totalorder %s67, %s68
      %p82 = scmp.eq.s32.totalorder %s22, 1
      %p83 = por %p81, %p82
      %p85 = scmp.ne.s32.totalorder %s68, %s84
      %p86 = scmp.eq.s32.totalorder %s22, 0
      %p87 = por %p85, %p86
      %s88 = ssub.s32 %s23, %s35
      %p89 = scmp.eq.s32.totalorder %s88, 0
      %s91 = sadd.s32 %s90, 1
      %s92 = scalar_select %p89, %s90, %s91
      %p95 = pneg %p89
      %p96 = scmp.eq.s32.totalorder %s16, 1
      %p97 = por %p95, %p96
      %p98 = scmp.ne.s32.totalorder %s90, %s93
      %p99 = scmp.eq.s32.totalorder %s16, 0
      %p100 = por %p98, %p99
      %p101 = scmp.ne.s32.totalorder %s90, %s93
      %p102 = scmp.eq.s32.totalorder %s21, 1
      %p103 = por %p101, %p102
      %p104 = scmp.ne.s32.totalorder %s93, %s94
      %p105 = scmp.eq.s32.totalorder %s21, 0
      %p106 = por %p104, %p105
      %p107 = scmp.ne.s32.totalorder %s93, %s94
      %p108 = scmp.eq.s32.totalorder %s22, 1
      %p109 = por %p107, %p108
      %p111 = scmp.ne.s32.totalorder %s94, %s110
      %p112 = scmp.eq.s32.totalorder %s22, 0
      %p113 = por %p111, %p112
      %s114 = ssub.s32 %s23, %s35
      %s115 = ssub.s32 %s24, %s31
      %s116 = sor.u32 %s114, %s115
      %p117 = scmp.eq.s32.totalorder %s116, 0
      %s119 = sadd.s32 %s118, 1
      %s120 = scalar_select %p117, %s118, %s119
      %p123 = pneg %p117
      %p124 = scmp.eq.s32.totalorder %s16, 1
      %p125 = por %p123, %p124
      %p126 = scmp.ne.s32.totalorder %s118, %s121
      %p127 = scmp.eq.s32.totalorder %s16, 0
      %p128 = por %p126, %p127
      %p129 = scmp.ne.s32.totalorder %s118, %s121
      %p130 = scmp.eq.s32.totalorder %s21, 1
      %p131 = por %p129, %p130
      %p132 = scmp.ne.s32.totalorder %s121, %s122
      %p133 = scmp.eq.s32.totalorder %s21, 0
      %p134 = por %p132, %p133
      %p135 = scmp.ne.s32.totalorder %s121, %s122
      %p136 = scmp.eq.s32.totalorder %s22, 1
      %p137 = por %p135, %p136
      %p139 = scmp.ne.s32.totalorder %s122, %s138
      %p140 = scmp.eq.s32.totalorder %s22, 0
      %p141 = por %p139, %p140
      %p142 = scmp.le.s32.totalorder 1, %s16
      %p143 = scmp.lt.s32.totalorder %s16, 3
      %p144 = pnand %p142, %p143
      %p145 = pneg %p144
      // Predicated region
      $region9: #{_lambda_.7} parent=5 // pred_check
        _
      $region10: #{_lambda_.7} parent=5 // pred_check_branch
        %147 = sbr.rel (%p144) target = $region12
      $region11: #{_lambda_.7} parent=5 // pred_region
        %s148 = ssub.s32 %s16, 1
        // Predicated region
        $region13: #{_lambda_.7} parent=11 // pred_check
          %p149 = pneg %p54
        $region14: #{_lambda_.7} parent=11 // pred_check_branch
          %151 = sbr.rel (%p149) target = $region16
        $region15: #{_lambda_.7} parent=11 // pred_region
          %s152 = smul.u32 4, %s26
          %s154 = ssub.s32 512, 512
          %155 = vsyncadd [#allocation3], %s154
          %s156 = smul.addr %s152, 64
          %s157 = scalar_lea.hbm %s0, %s156
          %s158 = sshll.u32 [#allocation2], 4
          %s159 = int_to_ptr.vmem [resolvable:$true] %s158
          %164 = dma.hbm_to_vmem [thread:$0]  %s157, 512, %s159, [#allocation3], 64, 64, 4
        $region16: #{_lambda_.7} parent=11 // pred_fallthru
          _
      $region12: #{_lambda_.7} parent=5 // pred_fallthru
        _
      %p165 = scmp.lt.s32.totalorder %s16, 2
      // Predicated region
      $region17: #{_lambda_.7} parent=5 // pred_check
        %p166 = pneg %p165
      $region18: #{_lambda_.7} parent=5 // pred_check_branch
        %168 = sbr.rel (%p166) target = $region20
      $region19: #{_lambda_.7} parent=5 // pred_region
        // Predicated region
        $region21: #{_lambda_.7} parent=19 // pred_check
          %p169 = pneg %p74
        $region22: #{_lambda_.7} parent=19 // pred_check_branch
          %171 = sbr.rel (%p169) target = $region24
        $region23: #{_lambda_.7} parent=19 // pred_region
          %s172 = sand.u32 %s16, 1
          %s173 = scalar_lea.sflag [#allocation6], %s172
          %s174 = sand.u32 %s64, 1
          %s175 = smul.addr %s174, 8
          %s176 = scalar_lea.vmem [#allocation5], %s175
          %s178 = ssub.s32 128, 128
          %179 = vsyncadd %s173, %s178
          %s180 = smul.addr %s23, 64
          %s181 = scalar_lea.hbm %s1, %s180
          %s182 = sshll.u32 %s176, 4
          %s183 = int_to_ptr.vmem [resolvable:$true] %s182
          %188 = dma.hbm_to_vmem [thread:$0]  %s181, 128, %s183, %s173, 128, 64, 4
        $region24: #{_lambda_.7} parent=19 // pred_fallthru
          _
        // Predicated region
        $region25: #{_lambda_.7} parent=19 // pred_check
          %p189 = pneg %p100
        $region26: #{_lambda_.7} parent=19 // pred_check_branch
          %191 = sbr.rel (%p189) target = $region28
        $region27: #{_lambda_.7} parent=19 // pred_region
          %s192 = sand.u32 %s16, 1
          %s193 = scalar_lea.sflag [#allocation6], %s192
          %s194 = sand.u32 %s90, 1
          %s195 = scalar_lea.vmem [#allocation7], %s194
          %s197 = ssub.s32 16, 16
          %198 = vsyncadd %s193, %s197
          %s199 = smul.addr %s23, 16
          %s200 = scalar_lea.hbm %s2, %s199
          %s202 = sshll.u32 %s195, 4
          %s203 = int_to_ptr.vmem [resolvable:$true] %s202
          %205 = dma.hbm_to_vmem [thread:$0]  %s200, 16, %s203, %s193
        $region28: #{_lambda_.7} parent=19 // pred_fallthru
          _
      $region20: #{_lambda_.7} parent=5 // pred_fallthru
        _
      %p206 = scmp.le.s32.totalorder 1, %s16
      %p207 = scmp.lt.s32.totalorder %s16, 3
      %p208 = pnand %p206, %p207
      %p209 = pneg %p208
      // Predicated region
      $region29: #{_lambda_.7} parent=5 // pred_check
        _
      $region30: #{_lambda_.7} parent=5 // pred_check_branch
        %211 = sbr.rel (%p208) target = $region32
      $region31: #{_lambda_.7} parent=5 // pred_region
        %s212 = ssub.s32 %s16, 1
        // Predicated region
        $region33: #{_lambda_.7} parent=31 // pred_check
          %p213 = pneg %p54
        $region34: #{_lambda_.7} parent=31 // pred_check_branch
          %215 = sbr.rel (%p213) target = $region36
        $region35: #{_lambda_.7} parent=31 // pred_region
          %216 = dma.done [#allocation3], 512
        $region36: #{_lambda_.7} parent=31 // pred_fallthru
          _
        %s217 = sand.u32 %s21, 1
        %s218 = scalar_lea.sflag [#allocation6], %s217
        %s219 = sand.u32 %s67, 1
        %s220 = smul.addr %s219, 8
        %s221 = scalar_lea.vmem [#allocation5], %s220
        // Predicated region
        $region37: #{_lambda_.7} parent=31 // pred_check
          %p222 = pneg %p80
        $region38: #{_lambda_.7} parent=31 // pred_check_branch
          %224 = sbr.rel (%p222) target = $region40
        $region39: #{_lambda_.7} parent=31 // pred_region
          %225 = dma.done %s218, 128
        $region40: #{_lambda_.7} parent=31 // pred_fallthru
          _
        %s226 = sand.u32 %s21, 1
        %s227 = scalar_lea.sflag [#allocation6], %s226
        %s228 = sand.u32 %s93, 1
        %s229 = scalar_lea.vmem [#allocation7], %s228
        // Predicated region
        $region41: #{_lambda_.7} parent=31 // pred_check
          %p230 = pneg %p106
        $region42: #{_lambda_.7} parent=31 // pred_check_branch
          %232 = sbr.rel (%p230) target = $region44
        $region43: #{_lambda_.7} parent=31 // pred_region
          %233 = dma.done %s227, 16
        $region44: #{_lambda_.7} parent=31 // pred_fallthru
          _
        %p234 = pneg %p54
        %p235 = pneg %p51
        %s236 = sand.u32 %s21, 1
        %s237 = scalar_lea.sflag [#allocation6], %s236
        %s238 = sand.u32 %s67, 1
        %s239 = smul.addr %s238, 8
        %s240 = scalar_lea.vmem [#allocation5], %s239
        %p241 = pneg %p80
        %p242 = pneg %p77
        %s243 = sand.u32 %s21, 1
        %s244 = scalar_lea.sflag [#allocation6], %s243
        %s245 = sand.u32 %s93, 1
        %s246 = scalar_lea.vmem [#allocation7], %s245
        %p247 = pneg %p106
        %p248 = pneg %p103
        %p249 = pneg %p134
        %p250 = pneg %p131
        %s251 = sand.u32 %s121, 1
        %s252 = scalar_lea.sflag [#allocation4], %s251
        %s253 = sand.u32 %s121, 1
        %s254 = smul.addr %s253, 16
        %s255 = scalar_lea.vmem [#allocation8], %s254
        %s256 = smul.u32 4, %s26
        %s257 = smul.u32 4, %s26
        %v259 = vld [vmem:[#allocation2] sm:$0xf]
        %v260 = vld [vmem:[#allocation2 + $0x4] sm:$0xf]
        %v261 = vld [vmem:[#allocation2 + $0x8] sm:$0xf]
        %v262 = vld [vmem:[#allocation2 + $0xc] sm:$0xf]
        %v263 = vld [vmem:[%s221] sm:$0xf]
        %s264 = scalar_lea.vmem [#allocation2], 16
        %v265 = vld [vmem:[%s264] sm:$0xf]
        %v266 = vld [vmem:[%s264 + $0x4] sm:$0xf]
        %v267 = vld [vmem:[%s264 + $0x8] sm:$0xf]
        %v268 = vld [vmem:[%s264 + $0xc] sm:$0xf]
        %s269 = scalar_lea.vmem %s221, 4 [#allocation5]
        %v270 = vld [vmem:[%s269] sm:$0xf]
        %v275 = vunpack.c.l.b16 %v265
        %v276 = vunpack.c.l.b16 %v266
        %v277 = vunpack.c.l.b16 %v267
        %v278 = vunpack.c.l.b16 %v268
        %v279 = vpack.c.b16 %v276, %v275
        %v280 = vpack.c.b16 %v278, %v277
        %vm281 = vcmask 64512
        %v283 = vsel %vm281, %v279, 0
        %v286 = vsel %vm281, %v280, 0
        %vm288 = vcmask 1043456
        %v290 = vsel %vm288, %v270, 0
        %292 = vmatprep.subr.bf16.mxu0 0
        %293 = vmatpush1.bf16.msra.mxu0 %v290
        %294 = vmatprep.subr.bf16.mxu0 0
        %295 = vmatpush1.bf16.msra.mxu0 0
        %296 = vmatprep.subr.bf16.mxu0 0
        %297 = vmatpush1.bf16.msra.mxu0 0
        %298 = vmatprep.subr.bf16.mxu0 0
        %299 = vmatpush1.bf16.msra.mxu0 0
        %300 = vmatprep.subr.bf16.mxu0 0
        %301 = vmatpush1.bf16.msra.mxu0 0
        %302 = vmatprep.subr.bf16.mxu0 0
        %303 = vmatpush1.bf16.msra.mxu0 0
        %304 = vmatprep.subr.bf16.mxu0 0
        %305 = vmatpush1.bf16.msra.mxu0 0
        %306 = vmatprep.subr.bf16.mxu0 0
        %307 = vmatpush1.bf16.msra.mxu0 0
        %308 = vmatprep.subr.bf16.mxu0 0
        %309 = vmatpush1.bf16.msra.mxu0 0
        %310 = vmatprep.subr.bf16.mxu0 0
        %311 = vmatpush1.bf16.msra.mxu0 0
        %312 = vmatprep.subr.bf16.mxu0 0
        %313 = vmatpush1.bf16.msra.mxu0 0
        %314 = vmatprep.subr.bf16.mxu0 0
        %315 = vmatpush1.bf16.msra.mxu0 0
        %316 = vmatprep.subr.bf16.mxu0 0
        %317 = vmatpush1.bf16.msra.mxu0 0
        %318 = vmatprep.subr.bf16.mxu0 0
        %319 = vmatpush1.bf16.msra.mxu0 0
        %320 = vmatprep.subr.bf16.mxu0 0
        %321 = vmatpush1.bf16.msra.mxu0 0
        %322 = vmatprep.subr.bf16.mxu0 0
        %323 = vmatpush1.bf16.msra.mxu0 0
        %324 = vmatprep.mubr.bf16.mxu0 0
        %325 = vmatmul.mubr.bf16.gmra.mrb[0].mxu0 %v283
        %v326 = vpop.f32.mrb[0].mxu0
        %v327 = vadd.f32 0.0, %v326
        %v328 = vpop.f32.mrb[0].mxu0
        %v329 = vpop.f32.mrb[0].mxu0
        %v330 = vadd.f32 0.0, %v329
        %v331 = vpop.f32.mrb[0].mxu0
        %332 = vmatprep.mubr.bf16.mxu0 0
        %333 = vmatmul.mubr.bf16.gmra.mrb[0].mxu0 %v286
        %v334 = vpop.f32.mrb[0].mxu0
        %v335 = vadd.f32 0.0, %v334
        %v336 = vpop.f32.mrb[0].mxu0
        %v337 = vpop.f32.mrb[0].mxu0
        %v338 = vadd.f32 0.0, %v337
        %v339 = vpop.f32.mrb[0].mxu0
        %340 = vdwg.mxu0
        %v345 = vunpack.c.l.b16 %v259
        %v346 = vunpack.c.l.b16 %v260
        %v347 = vunpack.c.l.b16 %v261
        %v348 = vunpack.c.l.b16 %v262
        %v349 = vpack.c.b16 %v346, %v345
        %v350 = vpack.c.b16 %v348, %v347
        %v352 = vsel %vm281, %v349, 0
        %v355 = vsel %vm281, %v350, 0
        %v358 = vsel %vm288, %v263, 0
        %360 = vmatprep.subr.bf16.mxu0 0
        %361 = vmatpush1.bf16.msra.mxu0 %v358
        %362 = vmatprep.subr.bf16.mxu0 0
        %363 = vmatpush1.bf16.msra.mxu0 0
        %364 = vmatprep.subr.bf16.mxu0 0
        %365 = vmatpush1.bf16.msra.mxu0 0
        %366 = vmatprep.subr.bf16.mxu0 0
        %367 = vmatpush1.bf16.msra.mxu0 0
        %368 = vmatprep.subr.bf16.mxu0 0
        %369 = vmatpush1.bf16.msra.mxu0 0
        %370 = vmatprep.subr.bf16.mxu0 0
        %371 = vmatpush1.bf16.msra.mxu0 0
        %372 = vmatprep.subr.bf16.mxu0 0
        %373 = vmatpush1.bf16.msra.mxu0 0
        %374 = vmatprep.subr.bf16.mxu0 0
        %375 = vmatpush1.bf16.msra.mxu0 0
        %376 = vmatprep.subr.bf16.mxu0 0
        %377 = vmatpush1.bf16.msra.mxu0 0
        %378 = vmatprep.subr.bf16.mxu0 0
        %379 = vmatpush1.bf16.msra.mxu0 0
        %380 = vmatprep.subr.bf16.mxu0 0
        %381 = vmatpush1.bf16.msra.mxu0 0
        %382 = vmatprep.subr.bf16.mxu0 0
        %383 = vmatpush1.bf16.msra.mxu0 0
        %384 = vmatprep.subr.bf16.mxu0 0
        %385 = vmatpush1.bf16.msra.mxu0 0
        %386 = vmatprep.subr.bf16.mxu0 0
        %387 = vmatpush1.bf16.msra.mxu0 0
        %388 = vmatprep.subr.bf16.mxu0 0
        %389 = vmatpush1.bf16.msra.mxu0 0
        %390 = vmatprep.subr.bf16.mxu0 0
        %391 = vmatpush1.bf16.msra.mxu0 0
        %392 = vmatprep.mubr.bf16.mxu0 0
        %393 = vmatmul.mubr.bf16.gmra.mrb[0].mxu0 %v352
        %v394 = vpop.f32.mrb[0].mxu0
        %v395 = vadd.f32 %v327, %v394
        %v396 = vpop.f32.mrb[0].mxu0
        %v397 = vpop.f32.mrb[0].mxu0
        %v398 = vadd.f32 %v330, %v397
        %v399 = vpop.f32.mrb[0].mxu0
        %400 = vmatprep.mubr.bf16.mxu0 0
        %401 = vmatmul.mubr.bf16.gmra.mrb[0].mxu0 %v355
        %v402 = vpop.f32.mrb[0].mxu0
        %v403 = vadd.f32 %v335, %v402
        %v404 = vpop.f32.mrb[0].mxu0
        %v405 = vpop.f32.mrb[0].mxu0
        %v406 = vadd.f32 %v338, %v405
        %v407 = vpop.f32.mrb[0].mxu0
        %408 = vdwg.mxu0
        %v409 = vld [vmem:[%s229] sm:$0x1]
        %v411 = vlaneseq
        %v412 = vshrl.u32 %v411, 7
        %v413 = vsub.s32 0, %v412
        %v414 = vrot.slane %v409, %v413
        %v416 = vadd.f32 %v395, %v414
        %v417 = vadd.f32 %v398, %v414
        %v418 = vadd.f32 %v403, %v414
        %v419 = vadd.f32 %v406, %v414
        %v420 = vpack.c.bf16 %v417, %v416
        %v421 = vpack.c.bf16 %v419, %v418
        %v424 = vunpack.c.l.b16 %v420
        %v425 = vunpack.c.h.b16 %v420
        %v426 = vunpack.c.l.b16 %v421
        %v427 = vunpack.c.h.b16 %v421
        %v428 = vpack.c.b16 %v424, %v424
        %v429 = vpack.c.b16 %v425, %v425
        %v430 = vpack.c.b16 %v426, %v426
        %v431 = vpack.c.b16 %v427, %v427
        %vm436 = vcmask 191488
        %437 = vst.msk [vmem:[%s255] sm:$0xf] %vm436, %v428
        %438 = vst.msk [vmem:[%s255 + $0x4] sm:$0xf] %vm436, %v429
        %439 = vst.msk [vmem:[%s255 + $0x8] sm:$0xf] %vm436, %v430
        %440 = vst.msk [vmem:[%s255 + $0xc] sm:$0xf] %vm436, %v431
        %s441 = sand.u32 %s121, 1
        %s442 = scalar_lea.sflag [#allocation4], %s441
        %s443 = sand.u32 %s121, 1
        %s444 = smul.addr %s443, 16
        %s445 = scalar_lea.vmem [#allocation8], %s444
        // Predicated region
        $region45: #{_lambda_.7} parent=31 // pred_check
          %p446 = pneg %p131
        $region46: #{_lambda_.7} parent=31 // pred_check_branch
          %448 = sbr.rel (%p446) target = $region48
        $region47: #{_lambda_.7} parent=31 // pred_region
          %s449 = smul.u32 4, %s26
          %s451 = ssub.s32 256, 256
          %452 = vsyncadd %s442, %s451
          %s453 = smul.addr %s25, 4
          %s454 = sadd.s32 %s449, %s453
          %s455 = smul.addr %s454, 64
          %s456 = scalar_lea.hbm %s3, %s455
          %s457 = sshll.u32 %s445, 4
          %s458 = int_to_ptr.vmem [resolvable:$true] %s457
          %463 = dma.vmem_to_hbm [thread:$0]  %s458, 256, %s456, %s442, 64, 64, 4
        $region48: #{_lambda_.7} parent=31 // pred_fallthru
          _
      $region32: #{_lambda_.7} parent=5 // pred_fallthru
        _
      %p464 = scmp.le.s32.totalorder 2, %s16
      // Predicated region
      $region49: #{_lambda_.7} parent=5 // pred_check
        %p465 = pneg %p464
      $region50: #{_lambda_.7} parent=5 // pred_check_branch
        %467 = sbr.rel (%p465) target = $region52
      $region51: #{_lambda_.7} parent=5 // pred_region
        %s468 = ssub.s32 %s16, 2
        // Predicated region
        $region53: #{_lambda_.7} parent=51 // pred_check
          %p469 = pneg %p137
        $region54: #{_lambda_.7} parent=51 // pred_check_branch
          %471 = sbr.rel (%p469) target = $region56
        $region55: #{_lambda_.7} parent=51 // pred_region
          %s472 = sand.u32 %s122, 1
          %s473 = scalar_lea.sflag [#allocation4], %s472
          %s474 = sand.u32 %s122, 1
          %s475 = smul.addr %s474, 16
          %s476 = scalar_lea.vmem [#allocation8], %s475
          %477 = dma.done %s473, 256
        $region56: #{_lambda_.7} parent=51 // pred_fallthru
          _
      $region52: #{_lambda_.7} parent=5 // pred_fallthru
        _
    $region6: #{_lambda_.7} parent=1 // loop_footer
      %s20 = sadd.s32 1, %s16
    $region7: #{_lambda_.7} parent=1 // loop_footer_branch
      %15 = sbr.rel target = $region3
    $region8: #{_lambda_.7} parent=1 // loop_exit
      _
    %478 = vsyncpa [#allocation3], 1
    %s479 = scalar_lea.sflag [#allocation3], 1
    %480 = vsyncpa %s479, 1
    %481 = vsyncpa [#allocation6], 1
    %s482 = scalar_lea.sflag [#allocation6], 1
    %483 = vsyncpa %s482, 1
    %484 = vsyncpa [#allocation4], 1
    %s485 = scalar_lea.sflag [#allocation4], 1
    %486 = vsyncpa %s485, 1

// kernel: _lambda_.9
$region0: #{_lambda_.9}
  #allocation0 [shape = 'u32[]', space=smem, size = 0x4, offset = 0x4, fixed_abs, tag = 'smem constant byte address 0x4 - core index']
  #allocation1 [shape = 'u32[144,128]{1,0:T(1,128)}', space=vmem, size = 0x12000, scoped, tag = 'internal scratch']
  %s0 = inlined_call_operand.hbm [shape: bf16[2,32,8], index: 0, kind: input, shape index: {}]
  %s1 = inlined_call_operand.hbm [shape: bf16[2,1,8,8], index: 1, kind: input, shape index: {}]
  %s2 = inlined_call_operand.hbm [shape: f32[1,1,8], index: 2, kind: input, shape index: {}]
  %s3 = inlined_call_operand.hbm [shape: f32[1,32,8], index: 3, kind: output, shape index: {}]
  %s4 = sld [smem:[#allocation0]]
  $region34: #{_lambda_.9} parent=0
    _
  %s6 = ssub.s32 1, %s4
  %s7 = scalar_select 0, %s6, %s4
  $region1: #{_lambda_.9} parent=0
    #allocation2 [shape = 'u8[16384]{0}', space=vmem, size = 0x4000, scoped, tag = 'input window, operand 0, single buffered']
    #allocation3 [shape = 's32[1]{0}', space=sflag, size = 0x4, scoped, tag = 'scoped memory for _lambda_.9']
    #allocation4 [shape = 's32[1]{0}', space=sflag, size = 0x4, scoped, tag = 'scoped memory for _lambda_.9']
    #allocation5 [shape = 'u8[4096]{0}', space=vmem, size = 0x1000, scoped, tag = 'input window, operand 1, single buffered']
    #allocation6 [shape = 's32[1]{0}', space=sflag, size = 0x4, scoped, tag = 'scoped memory for _lambda_.9']
    #allocation7 [shape = 'u8[512]{0}', space=vmem, size = 0x400, scoped, tag = 'input window, operand 2, single buffered']
    #allocation8 [shape = 'u8[16384]{0}', space=vmem, size = 0x4000, scoped, tag = 'output window, operand 0, single buffered']
    %8 = vsyncpa [#allocation3], 0
    %9 = vsyncpa [#allocation6], 0
    %10 = vsyncpa [#allocation4], 0
    // Predicated region
    $region2: #{_lambda_.9} parent=1 // pred_check
      _
    $region3: #{_lambda_.9} parent=1 // pred_check_branch
      %12 = sbr.rel (0) target = $region5
    $region4: #{_lambda_.9} parent=1 // pred_region
      %s14 = ssub.s32 512, 512
      %15 = vsyncadd [#allocation3], %s14
      %s16 = sshll.u32 [#allocation2], 4
      %s17 = int_to_ptr.vmem [resolvable:$true] %s16
      %22 = dma.hbm_to_vmem [thread:$0]  %s0, 512, %s17, [#allocation3], 64, 64, 4
    $region5: #{_lambda_.9} parent=1 // pred_fallthru
      _
    // Predicated region
    $region6: #{_lambda_.9} parent=1 // pred_check
      _
    $region7: #{_lambda_.9} parent=1 // pred_check_branch
      %24 = sbr.rel (0) target = $region9
    $region8: #{_lambda_.9} parent=1 // pred_region
      %s26 = ssub.s32 128, 128
      %27 = vsyncadd [#allocation6], %s26
      %s28 = sshll.u32 [#allocation5], 4
      %s29 = int_to_ptr.vmem [resolvable:$true] %s28
      %34 = dma.hbm_to_vmem [thread:$0]  %s1, 128, %s29, [#allocation6], 64, 64, 4
    $region9: #{_lambda_.9} parent=1 // pred_fallthru
      _
    // Predicated region
    $region10: #{_lambda_.9} parent=1 // pred_check
      _
    $region11: #{_lambda_.9} parent=1 // pred_check_branch
      %36 = sbr.rel (0) target = $region13
    $region12: #{_lambda_.9} parent=1 // pred_region
      %s38 = ssub.s32 16, 16
      %39 = vsyncadd [#allocation6], %s38
      %s41 = sshll.u32 [#allocation7], 4
      %s42 = int_to_ptr.vmem [resolvable:$true] %s41
      %44 = dma.hbm_to_vmem [thread:$0]  %s2, 16, %s42, [#allocation6]
    $region13: #{_lambda_.9} parent=1 // pred_fallthru
      _
    // Predicated region
    $region14: #{_lambda_.9} parent=1 // pred_check
      _
    $region15: #{_lambda_.9} parent=1 // pred_check_branch
      %46 = sbr.rel (0) target = $region17
    $region16: #{_lambda_.9} parent=1 // pred_region
      %47 = dma.done [#allocation3], 512
    $region17: #{_lambda_.9} parent=1 // pred_fallthru
      _
    // Predicated region
    $region18: #{_lambda_.9} parent=1 // pred_check
      _
    $region19: #{_lambda_.9} parent=1 // pred_check_branch
      %49 = sbr.rel (0) target = $region21
    $region20: #{_lambda_.9} parent=1 // pred_region
      %50 = dma.done [#allocation6], 128
    $region21: #{_lambda_.9} parent=1 // pred_fallthru
      _
    // Predicated region
    $region22: #{_lambda_.9} parent=1 // pred_check
      _
    $region23: #{_lambda_.9} parent=1 // pred_check_branch
      %52 = sbr.rel (0) target = $region25
    $region24: #{_lambda_.9} parent=1 // pred_region
      %53 = dma.done [#allocation6], 16
    $region25: #{_lambda_.9} parent=1 // pred_fallthru
      _
    %v55 = vld [vmem:[#allocation2] sm:$0xf]
    %v56 = vld [vmem:[#allocation2 + $0x4] sm:$0xf]
    %v57 = vld [vmem:[#allocation2 + $0x8] sm:$0xf]
    %v58 = vld [vmem:[#allocation2 + $0xc] sm:$0xf]
    %v59 = vld [vmem:[#allocation5] sm:$0xf]
    %s60 = scalar_lea.vmem [#allocation2], 16
    %v61 = vld [vmem:[%s60] sm:$0xf]
    %v62 = vld [vmem:[%s60 + $0x4] sm:$0xf]
    %v63 = vld [vmem:[%s60 + $0x8] sm:$0xf]
    %v64 = vld [vmem:[%s60 + $0xc] sm:$0xf]
    %s65 = scalar_lea.vmem [#allocation5], 4
    %v66 = vld [vmem:[%s65] sm:$0xf]
    %v71 = vunpack.c.l.b16 %v61
    %v72 = vunpack.c.l.b16 %v62
    %v73 = vunpack.c.l.b16 %v63
    %v74 = vunpack.c.l.b16 %v64
    %v75 = vpack.c.b16 %v72, %v71
    %v76 = vpack.c.b16 %v74, %v73
    %vm77 = vcmask 64512
    %v79 = vsel %vm77, %v75, 0
    %v82 = vsel %vm77, %v76, 0
    %vm84 = vcmask 1043456
    %v86 = vsel %vm84, %v66, 0
    %88 = vmatprep.subr.bf16.mxu0 0
    %89 = vmatpush1.bf16.msra.mxu0 %v86
    %90 = vmatprep.subr.bf16.mxu0 0
    %91 = vmatpush1.bf16.msra.mxu0 0
    %92 = vmatprep.subr.bf16.mxu0 0
    %93 = vmatpush1.bf16.msra.mxu0 0
    %94 = vmatprep.subr.bf16.mxu0 0
    %95 = vmatpush1.bf16.msra.mxu0 0
    %96 = vmatprep.subr.bf16.mxu0 0
    %97 = vmatpush1.bf16.msra.mxu0 0
    %98 = vmatprep.subr.bf16.mxu0 0
    %99 = vmatpush1.bf16.msra.mxu0 0
    %100 = vmatprep.subr.bf16.mxu0 0
    %101 = vmatpush1.bf16.msra.mxu0 0
    %102 = vmatprep.subr.bf16.mxu0 0
    %103 = vmatpush1.bf16.msra.mxu0 0
    %104 = vmatprep.subr.bf16.mxu0 0
    %105 = vmatpush1.bf16.msra.mxu0 0
    %106 = vmatprep.subr.bf16.mxu0 0
    %107 = vmatpush1.bf16.msra.mxu0 0
    %108 = vmatprep.subr.bf16.mxu0 0
    %109 = vmatpush1.bf16.msra.mxu0 0
    %110 = vmatprep.subr.bf16.mxu0 0
    %111 = vmatpush1.bf16.msra.mxu0 0
    %112 = vmatprep.subr.bf16.mxu0 0
    %113 = vmatpush1.bf16.msra.mxu0 0
    %114 = vmatprep.subr.bf16.mxu0 0
    %115 = vmatpush1.bf16.msra.mxu0 0
    %116 = vmatprep.subr.bf16.mxu0 0
    %117 = vmatpush1.bf16.msra.mxu0 0
    %118 = vmatprep.subr.bf16.mxu0 0
    %119 = vmatpush1.bf16.msra.mxu0 0
    %120 = vmatprep.mubr.bf16.mxu0 0
    %121 = vmatmul.mubr.bf16.gmra.mrb[0].mxu0 %v79
    %v122 = vpop.f32.mrb[0].mxu0
    %v123 = vadd.f32 0.0, %v122
    %v124 = vpop.f32.mrb[0].mxu0
    %v125 = vpop.f32.mrb[0].mxu0
    %v126 = vadd.f32 0.0, %v125
    %v127 = vpop.f32.mrb[0].mxu0
    %128 = vmatprep.mubr.bf16.mxu0 0
    %129 = vmatmul.mubr.bf16.gmra.mrb[0].mxu0 %v82
    %v130 = vpop.f32.mrb[0].mxu0
    %v131 = vadd.f32 0.0, %v130
    %v132 = vpop.f32.mrb[0].mxu0
    %v133 = vpop.f32.mrb[0].mxu0
    %v134 = vadd.f32 0.0, %v133
    %v135 = vpop.f32.mrb[0].mxu0
    %136 = vdwg.mxu0
    %v141 = vunpack.c.l.b16 %v55
    %v142 = vunpack.c.l.b16 %v56
    %v143 = vunpack.c.l.b16 %v57
    %v144 = vunpack.c.l.b16 %v58
    %v145 = vpack.c.b16 %v142, %v141
    %v146 = vpack.c.b16 %v144, %v143
    %v148 = vsel %vm77, %v145, 0
    %v151 = vsel %vm77, %v146, 0
    %v154 = vsel %vm84, %v59, 0
    %156 = vmatprep.subr.bf16.mxu0 0
    %157 = vmatpush1.bf16.msra.mxu0 %v154
    %158 = vmatprep.subr.bf16.mxu0 0
    %159 = vmatpush1.bf16.msra.mxu0 0
    %160 = vmatprep.subr.bf16.mxu0 0
    %161 = vmatpush1.bf16.msra.mxu0 0
    %162 = vmatprep.subr.bf16.mxu0 0
    %163 = vmatpush1.bf16.msra.mxu0 0
    %164 = vmatprep.subr.bf16.mxu0 0
    %165 = vmatpush1.bf16.msra.mxu0 0
    %166 = vmatprep.subr.bf16.mxu0 0
    %167 = vmatpush1.bf16.msra.mxu0 0
    %168 = vmatprep.subr.bf16.mxu0 0
    %169 = vmatpush1.bf16.msra.mxu0 0
    %170 = vmatprep.subr.bf16.mxu0 0
    %171 = vmatpush1.bf16.msra.mxu0 0
    %172 = vmatprep.subr.bf16.mxu0 0
    %173 = vmatpush1.bf16.msra.mxu0 0
    %174 = vmatprep.subr.bf16.mxu0 0
    %175 = vmatpush1.bf16.msra.mxu0 0
    %176 = vmatprep.subr.bf16.mxu0 0
    %177 = vmatpush1.bf16.msra.mxu0 0
    %178 = vmatprep.subr.bf16.mxu0 0
    %179 = vmatpush1.bf16.msra.mxu0 0
    %180 = vmatprep.subr.bf16.mxu0 0
    %181 = vmatpush1.bf16.msra.mxu0 0
    %182 = vmatprep.subr.bf16.mxu0 0
    %183 = vmatpush1.bf16.msra.mxu0 0
    %184 = vmatprep.subr.bf16.mxu0 0
    %185 = vmatpush1.bf16.msra.mxu0 0
    %186 = vmatprep.subr.bf16.mxu0 0
    %187 = vmatpush1.bf16.msra.mxu0 0
    %188 = vmatprep.mubr.bf16.mxu0 0
    %189 = vmatmul.mubr.bf16.gmra.mrb[0].mxu0 %v148
    %v190 = vpop.f32.mrb[0].mxu0
    %v191 = vadd.f32 %v123, %v190
    %v192 = vpop.f32.mrb[0].mxu0
    %v193 = vpop.f32.mrb[0].mxu0
    %v194 = vadd.f32 %v126, %v193
    %v195 = vpop.f32.mrb[0].mxu0
    %196 = vmatprep.mubr.bf16.mxu0 0
    %197 = vmatmul.mubr.bf16.gmra.mrb[0].mxu0 %v151
    %v198 = vpop.f32.mrb[0].mxu0
    %v199 = vadd.f32 %v131, %v198
    %v200 = vpop.f32.mrb[0].mxu0
    %v201 = vpop.f32.mrb[0].mxu0
    %v202 = vadd.f32 %v134, %v201
    %v203 = vpop.f32.mrb[0].mxu0
    %204 = vdwg.mxu0
    %v205 = vld [vmem:[#allocation7] sm:$0x1]
    %v207 = vlaneseq
    %v208 = vshrl.u32 %v207, 7
    %v209 = vsub.s32 0, %v208
    %v210 = vrot.slane %v205, %v209
    %v212 = vadd.f32 %v191, %v210
    %v213 = vadd.f32 %v194, %v210
    %v214 = vadd.f32 %v199, %v210
    %v215 = vadd.f32 %v202, %v210
    %216 = vst.msk [vmem:[#allocation8] sm:$0xff] %vm77, %v212
    %217 = vst.msk [vmem:[#allocation8 + $0x8] sm:$0xff] %vm77, %v213
    %218 = vst.msk [vmem:[#allocation8 + $0x10] sm:$0xff] %vm77, %v214
    %219 = vst.msk [vmem:[#allocation8 + $0x18] sm:$0xff] %vm77, %v215
    // Predicated region
    $region26: #{_lambda_.9} parent=1 // pred_check
      _
    $region27: #{_lambda_.9} parent=1 // pred_check_branch
      %221 = sbr.rel (0) target = $region29
    $region28: #{_lambda_.9} parent=1 // pred_region
      %s223 = ssub.s32 512, 512
      %224 = vsyncadd [#allocation4], %s223
      %s225 = sshll.u32 [#allocation8], 4
      %s226 = int_to_ptr.vmem [resolvable:$true] %s225
      %231 = dma.vmem_to_hbm [thread:$0]  %s226, 512, %s3, [#allocation4], 128, 128, 8
    $region29: #{_lambda_.9} parent=1 // pred_fallthru
      _
    // Predicated region
    $region30: #{_lambda_.9} parent=1 // pred_check
      _
    $region31: #{_lambda_.9} parent=1 // pred_check_branch
      %233 = sbr.rel (0) target = $region33
    $region32: #{_lambda_.9} parent=1 // pred_region
      %234 = dma.done [#allocation4], 512
    $region33: #{_lambda_.9} parent=1 // pred_fallthru
      _
    %235 = vsyncpa [#allocation3], 1
    %236 = vsyncpa [#allocation6], 1
    %237 = vsyncpa [#allocation4], 1

// kernel: _lambda_.6
$region0: #{_lambda_.6}
  #allocation0 [shape = 'u32[]', space=smem, size = 0x4, offset = 0x4, fixed_abs, tag = 'smem constant byte address 0x4 - core index']
  #allocation1 [shape = 'u32[144,128]{1,0:T(1,128)}', space=vmem, size = 0x12000, scoped, tag = 'internal scratch']
  %s0 = inlined_call_operand.hbm [shape: bf16[2,16,2,24], index: 0, kind: input, shape index: {}]
  %s1 = inlined_call_operand.hbm [shape: f32[2,8,24], index: 1, kind: input, shape index: {}]
  %s2 = inlined_call_operand.hbm [shape: f32[2,1,8], index: 2, kind: input, shape index: {}]
  %s3 = inlined_call_operand.hbm [shape: bf16[2,16,2,8], index: 3, kind: output, shape index: {}]
  %s4 = sld [smem:[#allocation0]]
  $region57: #{_lambda_.6} parent=0
    _
  %s6 = ssub.s32 1, %s4
  %s7 = scalar_select 0, %s6, %s4
  $region1: #{_lambda_.6} parent=0
    #allocation2 [shape = 'u8[16384]{0}', space=vmem, size = 0x4000, scoped, tag = 'input window, operand 0']
    #allocation3 [shape = 's32[2]{0}', space=sflag, size = 0x8, scoped, tag = 'scoped memory for _lambda_.6']
    #allocation4 [shape = 's32[2]{0}', space=sflag, size = 0x8, scoped, tag = 'scoped memory for _lambda_.6']
    #allocation5 [shape = 'u8[8192]{0}', space=vmem, size = 0x2000, scoped, tag = 'input window, operand 1']
    #allocation6 [shape = 's32[2]{0}', space=sflag, size = 0x8, scoped, tag = 'scoped memory for _lambda_.6']
    #allocation7 [shape = 'u8[1024]{0}', space=vmem, size = 0x400, scoped, tag = 'input window, operand 2']
    #allocation8 [shape = 'u8[16384]{0}', space=vmem, size = 0x4000, scoped, tag = 'output window, operand 0']
    %8 = vsyncpa [#allocation3], 0
    %s9 = scalar_lea.sflag [#allocation3], 1
    %10 = vsyncpa %s9, 0
    %11 = vsyncpa [#allocation6], 0
    %s12 = scalar_lea.sflag [#allocation6], 1
    %13 = vsyncpa %s12, 0
    %14 = vsyncpa [#allocation4], 0
    %s15 = scalar_lea.sflag [#allocation4], 1
    %16 = vsyncpa %s15, 0
    loop: start=0, step=1, limit=4
    $region2: #{_lambda_.6} parent=1 // loop_pre_header
      _
    $region3: #{_lambda_.6} parent=1 // loop_header
      %s18 = sphi 0, %s22
      %p19 = scmp.ge.s32.totalorder %s18, 4
      %s28 = sphi 0, %s30
      %s31 = sphi 0, %s28
      %s32 = sphi 0, %s31
      %s48 = sphi 0, %s32
      %s54 = sphi 0, %s56
      %s57 = sphi 0, %s54
      %s58 = sphi 0, %s57
      %s74 = sphi 0, %s58
      %s80 = sphi 0, %s82
      %s83 = sphi 0, %s80
      %s84 = sphi 0, %s83
      %s100 = sphi 0, %s84
      %s106 = sphi 0, %s108
      %s109 = sphi 0, %s106
      %s110 = sphi 0, %s109
      %s126 = sphi 0, %s110
    $region4: #{_lambda_.6} parent=1 // loop_header_branch
      %21 = sbr.rel (%p19) target = $region8
    $region5: #{_lambda_.6} parent=1 // loop_body
      %s23 = ssub.s32 %s18, 1
      %s24 = ssub.s32 %s18, 2
      %s25 = sadd.s32 %s18, 1
      %s26 = ssub.s32 %s18, %s25
      %p27 = scmp.eq.s32.totalorder %s26, 0
      %s29 = sadd.s32 %s28, 1
      %s30 = scalar_select %p27, %s28, %s29
      %p33 = pneg %p27
      %p34 = scmp.eq.s32.totalorder %s18, 1
      %p35 = por %p33, %p34
      %p36 = scmp.ne.s32.totalorder %s28, %s31
      %p37 = scmp.eq.s32.totalorder %s18, 0
      %p38 = por %p36, %p37
      %p39 = scmp.ne.s32.totalorder %s28, %s31
      %p40 = scmp.eq.s32.totalorder %s23, 1
      %p41 = por %p39, %p40
      %p42 = scmp.ne.s32.totalorder %s31, %s32
      %p43 = scmp.eq.s32.totalorder %s23, 0
      %p44 = por %p42, %p43
      %p45 = scmp.ne.s32.totalorder %s31, %s32
      %p46 = scmp.eq.s32.totalorder %s24, 1
      %p47 = por %p45, %p46
      %p49 = scmp.ne.s32.totalorder %s32, %s48
      %p50 = scmp.eq.s32.totalorder %s24, 0
      %p51 = por %p49, %p50
      %s52 = ssub.s32 %s18, %s25
      %p53 = scmp.eq.s32.totalorder %s52, 0
      %s55 = sadd.s32 %s54, 1
      %s56 = scalar_select %p53, %s54, %s55
      %p59 = pneg %p53
      %p60 = scmp.eq.s32.totalorder %s18, 1
      %p61 = por %p59, %p60
      %p62 = scmp.ne.s32.totalorder %s54, %s57
      %p63 = scmp.eq.s32.totalorder %s18, 0
      %p64 = por %p62, %p63
      %p65 = scmp.ne.s32.totalorder %s54, %s57
      %p66 = scmp.eq.s32.totalorder %s23, 1
      %p67 = por %p65, %p66
      %p68 = scmp.ne.s32.totalorder %s57, %s58
      %p69 = scmp.eq.s32.totalorder %s23, 0
      %p70 = por %p68, %p69
      %p71 = scmp.ne.s32.totalorder %s57, %s58
      %p72 = scmp.eq.s32.totalorder %s24, 1
      %p73 = por %p71, %p72
      %p75 = scmp.ne.s32.totalorder %s58, %s74
      %p76 = scmp.eq.s32.totalorder %s24, 0
      %p77 = por %p75, %p76
      %s78 = ssub.s32 %s18, %s25
      %p79 = scmp.eq.s32.totalorder %s78, 0
      %s81 = sadd.s32 %s80, 1
      %s82 = scalar_select %p79, %s80, %s81
      %p85 = pneg %p79
      %p86 = scmp.eq.s32.totalorder %s18, 1
      %p87 = por %p85, %p86
      %p88 = scmp.ne.s32.totalorder %s80, %s83
      %p89 = scmp.eq.s32.totalorder %s18, 0
      %p90 = por %p88, %p89
      %p91 = scmp.ne.s32.totalorder %s80, %s83
      %p92 = scmp.eq.s32.totalorder %s23, 1
      %p93 = por %p91, %p92
      %p94 = scmp.ne.s32.totalorder %s83, %s84
      %p95 = scmp.eq.s32.totalorder %s23, 0
      %p96 = por %p94, %p95
      %p97 = scmp.ne.s32.totalorder %s83, %s84
      %p98 = scmp.eq.s32.totalorder %s24, 1
      %p99 = por %p97, %p98
      %p101 = scmp.ne.s32.totalorder %s84, %s100
      %p102 = scmp.eq.s32.totalorder %s24, 0
      %p103 = por %p101, %p102
      %s104 = ssub.s32 %s18, %s25
      %p105 = scmp.eq.s32.totalorder %s104, 0
      %s107 = sadd.s32 %s106, 1
      %s108 = scalar_select %p105, %s106, %s107
      %p111 = pneg %p105
      %p112 = scmp.eq.s32.totalorder %s18, 1
      %p113 = por %p111, %p112
      %p114 = scmp.ne.s32.totalorder %s106, %s109
      %p115 = scmp.eq.s32.totalorder %s18, 0
      %p116 = por %p114, %p115
      %p117 = scmp.ne.s32.totalorder %s106, %s109
      %p118 = scmp.eq.s32.totalorder %s23, 1
      %p119 = por %p117, %p118
      %p120 = scmp.ne.s32.totalorder %s109, %s110
      %p121 = scmp.eq.s32.totalorder %s23, 0
      %p122 = por %p120, %p121
      %p123 = scmp.ne.s32.totalorder %s109, %s110
      %p124 = scmp.eq.s32.totalorder %s24, 1
      %p125 = por %p123, %p124
      %p127 = scmp.ne.s32.totalorder %s110, %s126
      %p128 = scmp.eq.s32.totalorder %s24, 0
      %p129 = por %p127, %p128
      %p130 = scmp.le.s32.totalorder 1, %s18
      %p131 = scmp.lt.s32.totalorder %s18, 3
      %p132 = pnand %p130, %p131
      %p133 = pneg %p132
      // Predicated region
      $region9: #{_lambda_.6} parent=5 // pred_check
        _
      $region10: #{_lambda_.6} parent=5 // pred_check_branch
        %135 = sbr.rel (%p132) target = $region12
      $region11: #{_lambda_.6} parent=5 // pred_region
        %s136 = ssub.s32 %s18, 1
      $region12: #{_lambda_.6} parent=5 // pred_fallthru
        _
      %p137 = scmp.lt.s32.totalorder %s18, 2
      // Predicated region
      $region13: #{_lambda_.6} parent=5 // pred_check
        %p138 = pneg %p137
      $region14: #{_lambda_.6} parent=5 // pred_check_branch
        %140 = sbr.rel (%p138) target = $region16
      $region15: #{_lambda_.6} parent=5 // pred_region
        // Predicated region
        $region17: #{_lambda_.6} parent=15 // pred_check
          %p141 = pneg %p38
        $region18: #{_lambda_.6} parent=15 // pred_check_branch
          %143 = sbr.rel (%p141) target = $region20
        $region19: #{_lambda_.6} parent=15 // pred_region
          %s144 = sand.u32 %s28, 1
          %s145 = scalar_lea.sflag [#allocation3], %s144
          %s146 = sand.u32 %s28, 1
          %s147 = smul.addr %s146, 16
          %s148 = scalar_lea.vmem [#allocation2], %s147
          %s150 = ssub.s32 256, 256
          %151 = vsyncadd %s145, %s150
          %s152 = smul.addr %s18, 16
          %s153 = smul.addr %s152, 16
          %s154 = scalar_lea.hbm %s0, %s153
          %s155 = sshll.u32 %s148, 4
          %s156 = int_to_ptr.vmem [resolvable:$true] %s155
          %161 = dma.hbm_to_vmem [thread:$0]  %s154, 256, %s156, %s145, 16, 16, 1
        $region20: #{_lambda_.6} parent=15 // pred_fallthru
          _
        // Predicated region
        $region21: #{_lambda_.6} parent=15 // pred_check
          %p162 = pneg %p64
        $region22: #{_lambda_.6} parent=15 // pred_check_branch
          %164 = sbr.rel (%p162) target = $region24
        $region23: #{_lambda_.6} parent=15 // pred_region
          %s165 = sand.u32 %s18, 1
          %s166 = scalar_lea.sflag [#allocation6], %s165
          %s167 = sand.u32 %s54, 1
          %s168 = smul.addr %s167, 8
          %s169 = scalar_lea.vmem [#allocation5], %s168
          %s171 = ssub.s32 128, 128
          %172 = vsyncadd %s166, %s171
          %s173 = smul.addr %s18, 128
          %s174 = scalar_lea.hbm %s1, %s173
          %s176 = sshll.u32 %s169, 4
          %s177 = int_to_ptr.vmem [resolvable:$true] %s176
          %179 = dma.hbm_to_vmem [thread:$0]  %s174, 128, %s177, %s166
        $region24: #{_lambda_.6} parent=15 // pred_fallthru
          _
        // Predicated region
        $region25: #{_lambda_.6} parent=15 // pred_check
          %p180 = pneg %p90
        $region26: #{_lambda_.6} parent=15 // pred_check_branch
          %182 = sbr.rel (%p180) target = $region28
        $region27: #{_lambda_.6} parent=15 // pred_region
          %s183 = sand.u32 %s18, 1
          %s184 = scalar_lea.sflag [#allocation6], %s183
          %s185 = sand.u32 %s80, 1
          %s186 = scalar_lea.vmem [#allocation7], %s185
          %s188 = ssub.s32 16, 16
          %189 = vsyncadd %s184, %s188
          %s190 = smul.addr %s18, 16
          %s191 = scalar_lea.hbm %s2, %s190
          %s193 = sshll.u32 %s186, 4
          %s194 = int_to_ptr.vmem [resolvable:$true] %s193
          %196 = dma.hbm_to_vmem [thread:$0]  %s191, 16, %s194, %s184
        $region28: #{_lambda_.6} parent=15 // pred_fallthru
          _
      $region16: #{_lambda_.6} parent=5 // pred_fallthru
        _
      %p197 = scmp.le.s32.totalorder 1, %s18
      %p198 = scmp.lt.s32.totalorder %s18, 3
      %p199 = pnand %p197, %p198
      %p200 = pneg %p199
      // Predicated region
      $region29: #{_lambda_.6} parent=5 // pred_check
        _
      $region30: #{_lambda_.6} parent=5 // pred_check_branch
        %202 = sbr.rel (%p199) target = $region32
      $region31: #{_lambda_.6} parent=5 // pred_region
        %s203 = ssub.s32 %s18, 1
        %s204 = sand.u32 %s31, 1
        %s205 = scalar_lea.sflag [#allocation3], %s204
        %s206 = sand.u32 %s31, 1
        %s207 = smul.addr %s206, 16
        %s208 = scalar_lea.vmem [#allocation2], %s207
        // Predicated region
        $region33: #{_lambda_.6} parent=31 // pred_check
          %p209 = pneg %p44
        $region34: #{_lambda_.6} parent=31 // pred_check_branch
          %211 = sbr.rel (%p209) target = $region36
        $region35: #{_lambda_.6} parent=31 // pred_region
          %212 = dma.done %s205, 256
        $region36: #{_lambda_.6} parent=31 // pred_fallthru
          _
        %s213 = sand.u32 %s23, 1
        %s214 = scalar_lea.sflag [#allocation6], %s213
        %s215 = sand.u32 %s57, 1
        %s216 = smul.addr %s215, 8
        %s217 = scalar_lea.vmem [#allocation5], %s216
        // Predicated region
        $region37: #{_lambda_.6} parent=31 // pred_check
          %p218 = pneg %p70
        $region38: #{_lambda_.6} parent=31 // pred_check_branch
          %220 = sbr.rel (%p218) target = $region40
        $region39: #{_lambda_.6} parent=31 // pred_region
          %221 = dma.done %s214, 128
        $region40: #{_lambda_.6} parent=31 // pred_fallthru
          _
        %s222 = sand.u32 %s23, 1
        %s223 = scalar_lea.sflag [#allocation6], %s222
        %s224 = sand.u32 %s83, 1
        %s225 = scalar_lea.vmem [#allocation7], %s224
        // Predicated region
        $region41: #{_lambda_.6} parent=31 // pred_check
          %p226 = pneg %p96
        $region42: #{_lambda_.6} parent=31 // pred_check_branch
          %228 = sbr.rel (%p226) target = $region44
        $region43: #{_lambda_.6} parent=31 // pred_region
          %229 = dma.done %s223, 16
        $region44: #{_lambda_.6} parent=31 // pred_fallthru
          _
        %s230 = sand.u32 %s31, 1
        %s231 = scalar_lea.sflag [#allocation3], %s230
        %s232 = sand.u32 %s31, 1
        %s233 = smul.addr %s232, 16
        %s234 = scalar_lea.vmem [#allocation2], %s233
        %p235 = pneg %p44
        %p236 = pneg %p41
        %s237 = sand.u32 %s23, 1
        %s238 = scalar_lea.sflag [#allocation6], %s237
        %s239 = sand.u32 %s57, 1
        %s240 = smul.addr %s239, 8
        %s241 = scalar_lea.vmem [#allocation5], %s240
        %p242 = pneg %p70
        %p243 = pneg %p67
        %s244 = sand.u32 %s23, 1
        %s245 = scalar_lea.sflag [#allocation6], %s244
        %s246 = sand.u32 %s83, 1
        %s247 = scalar_lea.vmem [#allocation7], %s246
        %p248 = pneg %p96
        %p249 = pneg %p93
        %p250 = pneg %p122
        %p251 = pneg %p119
        %s252 = sand.u32 %s109, 1
        %s253 = scalar_lea.sflag [#allocation4], %s252
        %s254 = sand.u32 %s109, 1
        %s255 = smul.addr %s254, 16
        %s256 = scalar_lea.vmem [#allocation8], %s255
        %v257 = vld [vmem:[%s217] sm:$0xff]
        %v258 = vld [vmem:[%s225] sm:$0x1]
        %s259 = smul.u32 %s23, 15
        %s260 = smul.u32 %s23, 2
        %s261 = ssub.s32 1, %s260
        %s262 = scalar_lea.vmem %s208, %s259 [#allocation2]
        %v263 = vld [vmem:[%s262] sm:$0x1]
        %v264 = vunpack.c.l.bf16 %v263
        %vm265 = vcmask 64512
        %v267 = vsel %vm265, 0.0, 0
        %269 = vmatprep.subr.mxu0 0.0
        %270 = vmatpush1.msra.mxu0 %v257
        %271 = vmatprep.subr.mxu0 0.0
        %272 = vmatpush1.msra.mxu0 0.0
        %273 = vmatprep.subr.mxu0 0.0
        %274 = vmatpush1.msra.mxu0 0.0
        %275 = vmatprep.subr.mxu0 0.0
        %276 = vmatpush1.msra.mxu0 0.0
        %277 = vmatprep.subr.mxu0 0.0
        %278 = vmatpush1.msra.mxu0 0.0
        %279 = vmatprep.subr.mxu0 0.0
        %280 = vmatpush1.msra.mxu0 0.0
        %281 = vmatprep.subr.mxu0 0.0
        %282 = vmatpush1.msra.mxu0 0.0
        %283 = vmatprep.subr.mxu0 0.0
        %284 = vmatpush1.msra.mxu0 0.0
        %285 = vmatprep.subr.mxu0 0.0
        %286 = vmatpush1.msra.mxu0 0.0
        %287 = vmatprep.subr.mxu0 0.0
        %288 = vmatpush1.msra.mxu0 0.0
        %289 = vmatprep.subr.mxu0 0.0
        %290 = vmatpush1.msra.mxu0 0.0
        %291 = vmatprep.subr.mxu0 0.0
        %292 = vmatpush1.msra.mxu0 0.0
        %293 = vmatprep.subr.mxu0 0.0
        %294 = vmatpush1.msra.mxu0 0.0
        %295 = vmatprep.subr.mxu0 0.0
        %296 = vmatpush1.msra.mxu0 0.0
        %297 = vmatprep.subr.mxu0 0.0
        %298 = vmatpush1.msra.mxu0 0.0
        %299 = vmatprep.subr.mxu0 0.0
        %300 = vmatpush1.msra.mxu0 0.0
        %301 = vmatprep.subr.mxu0 0.0
        %302 = vmatpush1.msra.mxu0 0.0
        %303 = vmatprep.subr.mxu0 0.0
        %304 = vmatpush1.msra.mxu0 0.0
        %305 = vmatprep.subr.mxu0 0.0
        %306 = vmatpush1.msra.mxu0 0.0
        %307 = vmatprep.subr.mxu0 0.0
        %308 = vmatpush1.msra.mxu0 0.0
        %309 = vmatprep.subr.mxu0 0.0
        %310 = vmatpush1.msra.mxu0 0.0
        %311 = vmatprep.subr.mxu0 0.0
        %312 = vmatpush1.msra.mxu0 0.0
        %313 = vmatprep.subr.mxu0 0.0
        %314 = vmatpush1.msra.mxu0 0.0
        %315 = vmatprep.subr.mxu0 0.0
        %316 = vmatpush1.msra.mxu0 0.0
        %317 = vmatprep.subr.mxu0 0.0
        %318 = vmatpush1.msra.mxu0 0.0
        %319 = vmatprep.subr.mxu0 0.0
        %320 = vmatpush1.msra.mxu0 0.0
        %321 = vmatprep.subr.mxu0 0.0
        %322 = vmatpush1.msra.mxu0 0.0
        %323 = vmatprep.subr.mxu0 0.0
        %324 = vmatpush1.msra.mxu0 0.0
        %325 = vmatprep.subr.mxu0 0.0
        %326 = vmatpush1.msra.mxu0 0.0
        %327 = vmatprep.subr.mxu0 0.0
        %328 = vmatpush1.msra.mxu0 0.0
        %329 = vmatprep.subr.mxu0 0.0
        %330 = vmatpush1.msra.mxu0 0.0
        %331 = vmatprep.subr.mxu0 0.0
        %332 = vmatpush1.msra.mxu0 0.0
        %333 = vmatprep.mubr.f32.mxu0 0.0
        %334 = vmatmul.mubr.f32.gmra.mrb[0].mxu0 %v267
        %v335 = vpop.f32.mrb[0].mxu0
        %v336 = vadd.f32 0.0, %v335
        %v337 = vpop.f32.mrb[0].mxu0
        %338 = vdwg.mxu0
        %v339 = vadd.f32 %v264, %v336
        %v340 = vxor.u32 %v339, 2147483648
        %v341 = vmul.f32 %v340, 1.442695
        %v342 = vpow.pop %v341
        %v343 = vadd.f32 %v342, 1.0
        %v344 = vrcp.pop %v343
        %v345 = vmul.f32 1.0, %v344
        %v347 = vlaneseq
        %v348 = vshrl.u32 %v347, 7
        %v349 = vsub.s32 0, %v348
        %v350 = vrot.slane %v258, %v349
        %351 = vrot.lane.b32.xlu0 %v350, 16
        %v352 = vpop.permute.xlu0 %351
        %v354 = vadd.f32 %v336, %v352
        %v357 = vunpack.c.l.s4 1983009808
        %v358 = vunpack.c.0.s8 %v357
        %v359 = vlaneseq
        %v360 = vshrl.u32 %v359, 7
        %v361 = vsub.s32 %v358, %v360
        %v362 = vrot.slane %v354, %v361
        %363 = vrot.lane.b32.xlu0 %v362, 112
        %v364 = vpop.permute.xlu0 %363
        %v366 = vmul.f32 %v345, %v364
        %368 = vrot.lane.b32.xlu0 %v366, 16
        %v369 = vpop.permute.xlu0 %368
        %v371 = vadd.f32 %v264, %v369
        %v372 = vtanh.pop %v371
        %v373 = vsub.f32 1.0, %v345
        %375 = vrot.lane.b32.xlu0 %v372, 120
        %v376 = vpop.permute.xlu0 %375
        %v378 = vmul.f32 %v373, %v376
        %v379 = vmul.f32 %v345, 0.0
        %v380 = vadd.f32 %v378, %v379
        %v381 = vpack.c.bf16 %v380, %v380
        %v384 = vunpack.c.l.s4 1966171168
        %v385 = vunpack.c.0.s8 %v384
        %v386 = vlaneseq
        %v387 = vshrl.u32 %v386, 7
        %v388 = vsub.s32 %v385, %v387
        %v389 = vrot.slane %v381, %v388
        %v391 = vunpack.c.l.s4 1966171168
        %v392 = vunpack.c.0.s8 %v391
        %v393 = vlaneseq
        %v394 = vshrl.u32 %v393, 7
        %v395 = vsub.s32 %v392, %v394
        %v396 = vrot.slane %v389, %v395
        %397 = vrot.lane.b32.xlu0 %v396, 120
        %v398 = vpop.permute.xlu0 %397
        %s400 = scalar_lea.vmem %s256, %s259 [#allocation8]
        %vm401 = vcmask 57344
        %402 = vst.msk [vmem:[%s400] sm:$0x1] %vm401, %v398
        %s403 = sadd.s32 %s259, %s261
        %s404 = scalar_lea.vmem %s208, %s403 [#allocation2]
        %v405 = vld [vmem:[%s404] sm:$0x1]
        %v406 = vunpack.c.l.bf16 %v405
        %v409 = vunpack.c.l.s4 1983009808
        %v410 = vunpack.c.0.s8 %v409
        %v411 = vlaneseq
        %v412 = vshrl.u32 %v411, 7
        %v413 = vsub.s32 %v410, %v412
        %v414 = vrot.slane %v380, %v413
        %415 = vrot.lane.b32.xlu0 %v414, 120
        %v416 = vpop.permute.xlu0 %415
        %v417 = vsel %vm265, %v416, 0
        %419 = vmatprep.subr.mxu0 0.0
        %420 = vmatpush1.msra.mxu0 %v257
        %421 = vmatprep.subr.mxu0 0.0
        %422 = vmatpush1.msra.mxu0 0.0
        %423 = vmatprep.subr.mxu0 0.0
        %424 = vmatpush1.msra.mxu0 0.0
        %425 = vmatprep.subr.mxu0 0.0
        %426 = vmatpush1.msra.mxu0 0.0
        %427 = vmatprep.subr.mxu0 0.0
        %428 = vmatpush1.msra.mxu0 0.0
        %429 = vmatprep.subr.mxu0 0.0
        %430 = vmatpush1.msra.mxu0 0.0
        %431 = vmatprep.subr.mxu0 0.0
        %432 = vmatpush1.msra.mxu0 0.0
        %433 = vmatprep.subr.mxu0 0.0
        %434 = vmatpush1.msra.mxu0 0.0
        %435 = vmatprep.subr.mxu0 0.0
        %436 = vmatpush1.msra.mxu0 0.0
        %437 = vmatprep.subr.mxu0 0.0
        %438 = vmatpush1.msra.mxu0 0.0
        %439 = vmatprep.subr.mxu0 0.0
        %440 = vmatpush1.msra.mxu0 0.0
        %441 = vmatprep.subr.mxu0 0.0
        %442 = vmatpush1.msra.mxu0 0.0
        %443 = vmatprep.subr.mxu0 0.0
        %444 = vmatpush1.msra.mxu0 0.0
        %445 = vmatprep.subr.mxu0 0.0
        %446 = vmatpush1.msra.mxu0 0.0
        %447 = vmatprep.subr.mxu0 0.0
        %448 = vmatpush1.msra.mxu0 0.0
        %449 = vmatprep.subr.mxu0 0.0
        %450 = vmatpush1.msra.mxu0 0.0
        %451 = vmatprep.subr.mxu0 0.0
        %452 = vmatpush1.msra.mxu0 0.0
        %453 = vmatprep.subr.mxu0 0.0
        %454 = vmatpush1.msra.mxu0 0.0
        %455 = vmatprep.subr.mxu0 0.0
        %456 = vmatpush1.msra.mxu0 0.0
        %457 = vmatprep.subr.mxu0 0.0
        %458 = vmatpush1.msra.mxu0 0.0
        %459 = vmatprep.subr.mxu0 0.0
        %460 = vmatpush1.msra.mxu0 0.0
        %461 = vmatprep.subr.mxu0 0.0
        %462 = vmatpush1.msra.mxu0 0.0
        %463 = vmatprep.subr.mxu0 0.0
        %464 = vmatpush1.msra.mxu0 0.0
        %465 = vmatprep.subr.mxu0 0.0
        %466 = vmatpush1.msra.mxu0 0.0
        %467 = vmatprep.subr.mxu0 0.0
        %468 = vmatpush1.msra.mxu0 0.0
        %469 = vmatprep.subr.mxu0 0.0
        %470 = vmatpush1.msra.mxu0 0.0
        %471 = vmatprep.subr.mxu0 0.0
        %472 = vmatpush1.msra.mxu0 0.0
        %473 = vmatprep.subr.mxu0 0.0
        %474 = vmatpush1.msra.mxu0 0.0
        %475 = vmatprep.subr.mxu0 0.0
        %476 = vmatpush1.msra.mxu0 0.0
        %477 = vmatprep.subr.mxu0 0.0
        %478 = vmatpush1.msra.mxu0 0.0
        %479 = vmatprep.subr.mxu0 0.0
        %480 = vmatpush1.msra.mxu0 0.0
        %481 = vmatprep.subr.mxu0 0.0
        %482 = vmatpush1.msra.mxu0 0.0
        %483 = vmatprep.mubr.f32.mxu0 0.0
        %484 = vmatmul.mubr.f32.gmra.mrb[0].mxu0 %v417
        %v485 = vpop.f32.mrb[0].mxu0
        %v486 = vadd.f32 0.0, %v485
        %v487 = vpop.f32.mrb[0].mxu0
        %488 = vdwg.mxu0
        %v489 = vadd.f32 %v406, %v486
        %v490 = vxor.u32 %v489, 2147483648
        %v491 = vmul.f32 %v490, 1.442695
        %v492 = vpow.pop %v491
        %v493 = vadd.f32 %v492, 1.0
        %v494 = vrcp.pop %v493
        %v495 = vmul.f32 1.0, %v494
        %v496 = vadd.f32 %v486, %v352
        %v499 = vunpack.c.l.s4 1983009808
        %v500 = vunpack.c.0.s8 %v499
        %v501 = vlaneseq
        %v502 = vshrl.u32 %v501, 7
        %v503 = vsub.s32 %v500, %v502
        %v504 = vrot.slane %v496, %v503
        %505 = vrot.lane.b32.xlu0 %v504, 112
        %v506 = vpop.permute.xlu0 %505
        %v508 = vmul.f32 %v495, %v506
        %510 = vrot.lane.b32.xlu0 %v508, 16
        %v511 = vpop.permute.xlu0 %510
        %v513 = vadd.f32 %v406, %v511
        %v514 = vtanh.pop %v513
        %v515 = vsub.f32 1.0, %v495
        %517 = vrot.lane.b32.xlu0 %v514, 120
        %v518 = vpop.permute.xlu0 %517
        %v520 = vmul.f32 %v515, %v518
        %v521 = vmul.f32 %v495, %v380
        %v522 = vadd.f32 %v520, %v521
        %v523 = vpack.c.bf16 %v522, %v522
        %v526 = vunpack.c.l.s4 1966171168
        %v527 = vunpack.c.0.s8 %v526
        %v528 = vlaneseq
        %v529 = vshrl.u32 %v528, 7
        %v530 = vsub.s32 %v527, %v529
        %v531 = vrot.slane %v523, %v530
        %v533 = vunpack.c.l.s4 1966171168
        %v534 = vunpack.c.0.s8 %v533
        %v535 = vlaneseq
        %v536 = vshrl.u32 %v535, 7
        %v537 = vsub.s32 %v534, %v536
        %v538 = vrot.slane %v531, %v537
        %539 = vrot.lane.b32.xlu0 %v538, 120
        %v540 = vpop.permute.xlu0 %539
        %s542 = scalar_lea.vmem %s256, %s403 [#allocation8]
        %543 = vst.msk [vmem:[%s542] sm:$0x1] %vm401, %v540
        %s544 = smul.u32 %s261, 2
        %s545 = sadd.s32 %s259, %s544
        %s546 = scalar_lea.vmem %s208, %s545 [#allocation2]
        %v547 = vld [vmem:[%s546] sm:$0x1]
        %v548 = vunpack.c.l.bf16 %v547
        %v551 = vunpack.c.l.s4 1983009808
        %v552 = vunpack.c.0.s8 %v551
        %v553 = vlaneseq
        %v554 = vshrl.u32 %v553, 7
        %v555 = vsub.s32 %v552, %v554
        %v556 = vrot.slane %v522, %v555
        %557 = vrot.lane.b32.xlu0 %v556, 120
        %v558 = vpop.permute.xlu0 %557
        %v559 = vsel %vm265, %v558, 0
        %561 = vmatprep.subr.mxu0 0.0
        %562 = vmatpush1.msra.mxu0 %v257
        %563 = vmatprep.subr.mxu0 0.0
        %564 = vmatpush1.msra.mxu0 0.0
        %565 = vmatprep.subr.mxu0 0.0
        %566 = vmatpush1.msra.mxu0 0.0
        %567 = vmatprep.subr.mxu0 0.0
        %568 = vmatpush1.msra.mxu0 0.0
        %569 = vmatprep.subr.mxu0 0.0
        %570 = vmatpush1.msra.mxu0 0.0
        %571 = vmatprep.subr.mxu0 0.0
        %572 = vmatpush1.msra.mxu0 0.0
        %573 = vmatprep.subr.mxu0 0.0
        %574 = vmatpush1.msra.mxu0 0.0
        %575 = vmatprep.subr.mxu0 0.0
        %576 = vmatpush1.msra.mxu0 0.0
        %577 = vmatprep.subr.mxu0 0.0
        %578 = vmatpush1.msra.mxu0 0.0
        %579 = vmatprep.subr.mxu0 0.0
        %580 = vmatpush1.msra.mxu0 0.0
        %581 = vmatprep.subr.mxu0 0.0
        %582 = vmatpush1.msra.mxu0 0.0
        %583 = vmatprep.subr.mxu0 0.0
        %584 = vmatpush1.msra.mxu0 0.0
        %585 = vmatprep.subr.mxu0 0.0
        %586 = vmatpush1.msra.mxu0 0.0
        %587 = vmatprep.subr.mxu0 0.0
        %588 = vmatpush1.msra.mxu0 0.0
        %589 = vmatprep.subr.mxu0 0.0
        %590 = vmatpush1.msra.mxu0 0.0
        %591 = vmatprep.subr.mxu0 0.0
        %592 = vmatpush1.msra.mxu0 0.0
        %593 = vmatprep.subr.mxu0 0.0
        %594 = vmatpush1.msra.mxu0 0.0
        %595 = vmatprep.subr.mxu0 0.0
        %596 = vmatpush1.msra.mxu0 0.0
        %597 = vmatprep.subr.mxu0 0.0
        %598 = vmatpush1.msra.mxu0 0.0
        %599 = vmatprep.subr.mxu0 0.0
        %600 = vmatpush1.msra.mxu0 0.0
        %601 = vmatprep.subr.mxu0 0.0
        %602 = vmatpush1.msra.mxu0 0.0
        %603 = vmatprep.subr.mxu0 0.0
        %604 = vmatpush1.msra.mxu0 0.0
        %605 = vmatprep.subr.mxu0 0.0
        %606 = vmatpush1.msra.mxu0 0.0
        %607 = vmatprep.subr.mxu0 0.0
        %608 = vmatpush1.msra.mxu0 0.0
        %609 = vmatprep.subr.mxu0 0.0
        %610 = vmatpush1.msra.mxu0 0.0
        %611 = vmatprep.subr.mxu0 0.0
        %612 = vmatpush1.msra.mxu0 0.0
        %613 = vmatprep.subr.mxu0 0.0
        %614 = vmatpush1.msra.mxu0 0.0
        %615 = vmatprep.subr.mxu0 0.0
        %616 = vmatpush1.msra.mxu0 0.0
        %617 = vmatprep.subr.mxu0 0.0
        %618 = vmatpush1.msra.mxu0 0.0
        %619 = vmatprep.subr.mxu0 0.0
        %620 = vmatpush1.msra.mxu0 0.0
        %621 = vmatprep.subr.mxu0 0.0
        %622 = vmatpush1.msra.mxu0 0.0
        %623 = vmatprep.subr.mxu0 0.0
        %624 = vmatpush1.msra.mxu0 0.0
        %625 = vmatprep.mubr.f32.mxu0 0.0
        %626 = vmatmul.mubr.f32.gmra.mrb[0].mxu0 %v559
        %v627 = vpop.f32.mrb[0].mxu0
        %v628 = vadd.f32 0.0, %v627
        %v629 = vpop.f32.mrb[0].mxu0
        %630 = vdwg.mxu0
        %v631 = vadd.f32 %v548, %v628
        %v632 = vxor.u32 %v631, 2147483648
        %v633 = vmul.f32 %v632, 1.442695
        %v634 = vpow.pop %v633
        %v635 = vadd.f32 %v634, 1.0
        %v636 = vrcp.pop %v635
        %v637 = vmul.f32 1.0, %v636
        %v638 = vadd.f32 %v628, %v352
        %v641 = vunpack.c.l.s4 1983009808
        %v642 = vunpack.c.0.s8 %v641
        %v643 = vlaneseq
        %v644 = vshrl.u32 %v643, 7
        %v645 = vsub.s32 %v642, %v644
        %v646 = vrot.slane %v638, %v645
        %647 = vrot.lane.b32.xlu0 %v646, 112
        %v648 = vpop.permute.xlu0 %647
        %v650 = vmul.f32 %v637, %v648
        %652 = vrot.lane.b32.xlu0 %v650, 16
        %v653 = vpop.permute.xlu0 %652
        %v655 = vadd.f32 %v548, %v653
        %v656 = vtanh.pop %v655
        %v657 = vsub.f32 1.0, %v637
        %659 = vrot.lane.b32.xlu0 %v656, 120
        %v660 = vpop.permute.xlu0 %659
        %v662 = vmul.f32 %v657, %v660
        %v663 = vmul.f32 %v637, %v522
        %v664 = vadd.f32 %v662, %v663
        %v665 = vpack.c.bf16 %v664, %v664
        %v668 = vunpack.c.l.s4 1966171168
        %v669 = vunpack.c.0.s8 %v668
        %v670 = vlaneseq
        %v671 = vshrl.u32 %v670, 7
        %v672 = vsub.s32 %v669, %v671
        %v673 = vrot.slane %v665, %v672
        %v675 = vunpack.c.l.s4 1966171168
        %v676 = vunpack.c.0.s8 %v675
        %v677 = vlaneseq
        %v678 = vshrl.u32 %v677, 7
        %v679 = vsub.s32 %v676, %v678
        %v680 = vrot.slane %v673, %v679
        %681 = vrot.lane.b32.xlu0 %v680, 120
        %v682 = vpop.permute.xlu0 %681
        %s684 = scalar_lea.vmem %s256, %s545 [#allocation8]
        %685 = vst.msk [vmem:[%s684] sm:$0x1] %vm401, %v682
        %s686 = smul.u32 %s261, 3
        %s687 = sadd.s32 %s259, %s686
        %s688 = scalar_lea.vmem %s208, %s687 [#allocation2]
        %v689 = vld [vmem:[%s688] sm:$0x1]
        %v690 = vunpack.c.l.bf16 %v689
        %v693 = vunpack.c.l.s4 1983009808
        %v694 = vunpack.c.0.s8 %v693
        %v695 = vlaneseq
        %v696 = vshrl.u32 %v695, 7
        %v697 = vsub.s32 %v694, %v696
        %v698 = vrot.slane %v664, %v697
        %699 = vrot.lane.b32.xlu0 %v698, 120
        %v700 = vpop.permute.xlu0 %699
        %v701 = vsel %vm265, %v700, 0
        %703 = vmatprep.subr.mxu0 0.0
        %704 = vmatpush1.msra.mxu0 %v257
        %705 = vmatprep.subr.mxu0 0.0
        %706 = vmatpush1.msra.mxu0 0.0
        %707 = vmatprep.subr.mxu0 0.0
        %708 = vmatpush1.msra.mxu0 0.0
        %709 = vmatprep.subr.mxu0 0.0
        %710 = vmatpush1.msra.mxu0 0.0
        %711 = vmatprep.subr.mxu0 0.0
        %712 = vmatpush1.msra.mxu0 0.0
        %713 = vmatprep.subr.mxu0 0.0
        %714 = vmatpush1.msra.mxu0 0.0
        %715 = vmatprep.subr.mxu0 0.0
        %716 = vmatpush1.msra.mxu0 0.0
        %717 = vmatprep.subr.mxu0 0.0
        %718 = vmatpush1.msra.mxu0 0.0
        %719 = vmatprep.subr.mxu0 0.0
        %720 = vmatpush1.msra.mxu0 0.0
        %721 = vmatprep.subr.mxu0 0.0
        %722 = vmatpush1.msra.mxu0 0.0
        %723 = vmatprep.subr.mxu0 0.0
        %724 = vmatpush1.msra.mxu0 0.0
        %725 = vmatprep.subr.mxu0 0.0
        %726 = vmatpush1.msra.mxu0 0.0
        %727 = vmatprep.subr.mxu0 0.0
        %728 = vmatpush1.msra.mxu0 0.0
        %729 = vmatprep.subr.mxu0 0.0
        %730 = vmatpush1.msra.mxu0 0.0
        %731 = vmatprep.subr.mxu0 0.0
        %732 = vmatpush1.msra.mxu0 0.0
        %733 = vmatprep.subr.mxu0 0.0
        %734 = vmatpush1.msra.mxu0 0.0
        %735 = vmatprep.subr.mxu0 0.0
        %736 = vmatpush1.msra.mxu0 0.0
        %737 = vmatprep.subr.mxu0 0.0
        %738 = vmatpush1.msra.mxu0 0.0
        %739 = vmatprep.subr.mxu0 0.0
        %740 = vmatpush1.msra.mxu0 0.0
        %741 = vmatprep.subr.mxu0 0.0
        %742 = vmatpush1.msra.mxu0 0.0
        %743 = vmatprep.subr.mxu0 0.0
        %744 = vmatpush1.msra.mxu0 0.0
        %745 = vmatprep.subr.mxu0 0.0
        %746 = vmatpush1.msra.mxu0 0.0
        %747 = vmatprep.subr.mxu0 0.0
        %748 = vmatpush1.msra.mxu0 0.0
        %749 = vmatprep.subr.mxu0 0.0
        %750 = vmatpush1.msra.mxu0 0.0
        %751 = vmatprep.subr.mxu0 0.0
        %752 = vmatpush1.msra.mxu0 0.0
        %753 = vmatprep.subr.mxu0 0.0
        %754 = vmatpush1.msra.mxu0 0.0
        %755 = vmatprep.subr.mxu0 0.0
        %756 = vmatpush1.msra.mxu0 0.0
        %757 = vmatprep.subr.mxu0 0.0
        %758 = vmatpush1.msra.mxu0 0.0
        %759 = vmatprep.subr.mxu0 0.0
        %760 = vmatpush1.msra.mxu0 0.0
        %761 = vmatprep.subr.mxu0 0.0
        %762 = vmatpush1.msra.mxu0 0.0
        %763 = vmatprep.subr.mxu0 0.0
        %764 = vmatpush1.msra.mxu0 0.0
        %765 = vmatprep.subr.mxu0 0.0
        %766 = vmatpush1.msra.mxu0 0.0
        %767 = vmatprep.mubr.f32.mxu0 0.0
        %768 = vmatmul.mubr.f32.gmra.mrb[0].mxu0 %v701
        %v769 = vpop.f32.mrb[0].mxu0
        %v770 = vadd.f32 0.0, %v769
        %v771 = vpop.f32.mrb[0].mxu0
        %772 = vdwg.mxu0
        %v773 = vadd.f32 %v690, %v770
        %v774 = vxor.u32 %v773, 2147483648
        %v775 = vmul.f32 %v774, 1.442695
        %v776 = vpow.pop %v775
        %v777 = vadd.f32 %v776, 1.0
        %v778 = vrcp.pop %v777
        %v779 = vmul.f32 1.0, %v778
        %v780 = vadd.f32 %v770, %v352
        %v783 = vunpack.c.l.s4 1983009808
        %v784 = vunpack.c.0.s8 %v783
        %v785 = vlaneseq
        %v786 = vshrl.u32 %v785, 7
        %v787 = vsub.s32 %v784, %v786
        %v788 = vrot.slane %v780, %v787
        %789 = vrot.lane.b32.xlu0 %v788, 112
        %v790 = vpop.permute.xlu0 %789
        %v792 = vmul.f32 %v779, %v790
        %794 = vrot.lane.b32.xlu0 %v792, 16
        %v795 = vpop.permute.xlu0 %794
        %v797 = vadd.f32 %v690, %v795
        %v798 = vtanh.pop %v797
        %v799 = vsub.f32 1.0, %v779
        %801 = vrot.lane.b32.xlu0 %v798, 120
        %v802 = vpop.permute.xlu0 %801
        %v804 = vmul.f32 %v799, %v802
        %v805 = vmul.f32 %v779, %v664
        %v806 = vadd.f32 %v804, %v805
        %v807 = vpack.c.bf16 %v806, %v806
        %v810 = vunpack.c.l.s4 1966171168
        %v811 = vunpack.c.0.s8 %v810
        %v812 = vlaneseq
        %v813 = vshrl.u32 %v812, 7
        %v814 = vsub.s32 %v811, %v813
        %v815 = vrot.slane %v807, %v814
        %v817 = vunpack.c.l.s4 1966171168
        %v818 = vunpack.c.0.s8 %v817
        %v819 = vlaneseq
        %v820 = vshrl.u32 %v819, 7
        %v821 = vsub.s32 %v818, %v820
        %v822 = vrot.slane %v815, %v821
        %823 = vrot.lane.b32.xlu0 %v822, 120
        %v824 = vpop.permute.xlu0 %823
        %s826 = scalar_lea.vmem %s256, %s687 [#allocation8]
        %827 = vst.msk [vmem:[%s826] sm:$0x1] %vm401, %v824
        %s828 = smul.u32 %s261, 4
        %s829 = sadd.s32 %s259, %s828
        %s830 = scalar_lea.vmem %s208, %s829 [#allocation2]
        %v831 = vld [vmem:[%s830] sm:$0x1]
        %v832 = vunpack.c.l.bf16 %v831
        %v835 = vunpack.c.l.s4 1983009808
        %v836 = vunpack.c.0.s8 %v835
        %v837 = vlaneseq
        %v838 = vshrl.u32 %v837, 7
        %v839 = vsub.s32 %v836, %v838
        %v840 = vrot.slane %v806, %v839
        %841 = vrot.lane.b32.xlu0 %v840, 120
        %v842 = vpop.permute.xlu0 %841
        %v843 = vsel %vm265, %v842, 0
        %845 = vmatprep.subr.mxu0 0.0
        %846 = vmatpush1.msra.mxu0 %v257
        %847 = vmatprep.subr.mxu0 0.0
        %848 = vmatpush1.msra.mxu0 0.0
        %849 = vmatprep.subr.mxu0 0.0
        %850 = vmatpush1.msra.mxu0 0.0
        %851 = vmatprep.subr.mxu0 0.0
        %852 = vmatpush1.msra.mxu0 0.0
        %853 = vmatprep.subr.mxu0 0.0
        %854 = vmatpush1.msra.mxu0 0.0
        %855 = vmatprep.subr.mxu0 0.0
        %856 = vmatpush1.msra.mxu0 0.0
        %857 = vmatprep.subr.mxu0 0.0
        %858 = vmatpush1.msra.mxu0 0.0
        %859 = vmatprep.subr.mxu0 0.0
        %860 = vmatpush1.msra.mxu0 0.0
        %861 = vmatprep.subr.mxu0 0.0
        %862 = vmatpush1.msra.mxu0 0.0
        %863 = vmatprep.subr.mxu0 0.0
        %864 = vmatpush1.msra.mxu0 0.0
        %865 = vmatprep.subr.mxu0 0.0
        %866 = vmatpush1.msra.mxu0 0.0
        %867 = vmatprep.subr.mxu0 0.0
        %868 = vmatpush1.msra.mxu0 0.0
        %869 = vmatprep.subr.mxu0 0.0
        %870 = vmatpush1.msra.mxu0 0.0
        %871 = vmatprep.subr.mxu0 0.0
        %872 = vmatpush1.msra.mxu0 0.0
        %873 = vmatprep.subr.mxu0 0.0
        %874 = vmatpush1.msra.mxu0 0.0
        %875 = vmatprep.subr.mxu0 0.0
        %876 = vmatpush1.msra.mxu0 0.0
        %877 = vmatprep.subr.mxu0 0.0
        %878 = vmatpush1.msra.mxu0 0.0
        %879 = vmatprep.subr.mxu0 0.0
        %880 = vmatpush1.msra.mxu0 0.0
        %881 = vmatprep.subr.mxu0 0.0
        %882 = vmatpush1.msra.mxu0 0.0
        %883 = vmatprep.subr.mxu0 0.0
        %884 = vmatpush1.msra.mxu0 0.0
        %885 = vmatprep.subr.mxu0 0.0
        %886 = vmatpush1.msra.mxu0 0.0
        %887 = vmatprep.subr.mxu0 0.0
        %888 = vmatpush1.msra.mxu0 0.0
        %889 = vmatprep.subr.mxu0 0.0
        %890 = vmatpush1.msra.mxu0 0.0
        %891 = vmatprep.subr.mxu0 0.0
        %892 = vmatpush1.msra.mxu0 0.0
        %893 = vmatprep.subr.mxu0 0.0
        %894 = vmatpush1.msra.mxu0 0.0
        %895 = vmatprep.subr.mxu0 0.0
        %896 = vmatpush1.msra.mxu0 0.0
        %897 = vmatprep.subr.mxu0 0.0
        %898 = vmatpush1.msra.mxu0 0.0
        %899 = vmatprep.subr.mxu0 0.0
        %900 = vmatpush1.msra.mxu0 0.0
        %901 = vmatprep.subr.mxu0 0.0
        %902 = vmatpush1.msra.mxu0 0.0
        %903 = vmatprep.subr.mxu0 0.0
        %904 = vmatpush1.msra.mxu0 0.0
        %905 = vmatprep.subr.mxu0 0.0
        %906 = vmatpush1.msra.mxu0 0.0
        %907 = vmatprep.subr.mxu0 0.0
        %908 = vmatpush1.msra.mxu0 0.0
        %909 = vmatprep.mubr.f32.mxu0 0.0
        %910 = vmatmul.mubr.f32.gmra.mrb[0].mxu0 %v843
        %v911 = vpop.f32.mrb[0].mxu0
        %v912 = vadd.f32 0.0, %v911
        %v913 = vpop.f32.mrb[0].mxu0
        %914 = vdwg.mxu0
        %v915 = vadd.f32 %v832, %v912
        %v916 = vxor.u32 %v915, 2147483648
        %v917 = vmul.f32 %v916, 1.442695
        %v918 = vpow.pop %v917
        %v919 = vadd.f32 %v918, 1.0
        %v920 = vrcp.pop %v919
        %v921 = vmul.f32 1.0, %v920
        %v922 = vadd.f32 %v912, %v352
        %v925 = vunpack.c.l.s4 1983009808
        %v926 = vunpack.c.0.s8 %v925
        %v927 = vlaneseq
        %v928 = vshrl.u32 %v927, 7
        %v929 = vsub.s32 %v926, %v928
        %v930 = vrot.slane %v922, %v929
        %931 = vrot.lane.b32.xlu0 %v930, 112
        %v932 = vpop.permute.xlu0 %931
        %v934 = vmul.f32 %v921, %v932
        %936 = vrot.lane.b32.xlu0 %v934, 16
        %v937 = vpop.permute.xlu0 %936
        %v939 = vadd.f32 %v832, %v937
        %v940 = vtanh.pop %v939
        %v941 = vsub.f32 1.0, %v921
        %943 = vrot.lane.b32.xlu0 %v940, 120
        %v944 = vpop.permute.xlu0 %943
        %v946 = vmul.f32 %v941, %v944
        %v947 = vmul.f32 %v921, %v806
        %v948 = vadd.f32 %v946, %v947
        %v949 = vpack.c.bf16 %v948, %v948
        %v952 = vunpack.c.l.s4 1966171168
        %v953 = vunpack.c.0.s8 %v952
        %v954 = vlaneseq
        %v955 = vshrl.u32 %v954, 7
        %v956 = vsub.s32 %v953, %v955
        %v957 = vrot.slane %v949, %v956
        %v959 = vunpack.c.l.s4 1966171168
        %v960 = vunpack.c.0.s8 %v959
        %v961 = vlaneseq
        %v962 = vshrl.u32 %v961, 7
        %v963 = vsub.s32 %v960, %v962
        %v964 = vrot.slane %v957, %v963
        %965 = vrot.lane.b32.xlu0 %v964, 120
        %v966 = vpop.permute.xlu0 %965
        %s968 = scalar_lea.vmem %s256, %s829 [#allocation8]
        %969 = vst.msk [vmem:[%s968] sm:$0x1] %vm401, %v966
        %s970 = smul.u32 %s261, 5
        %s971 = sadd.s32 %s259, %s970
        %s972 = scalar_lea.vmem %s208, %s971 [#allocation2]
        %v973 = vld [vmem:[%s972] sm:$0x1]
        %v974 = vunpack.c.l.bf16 %v973
        %v977 = vunpack.c.l.s4 1983009808
        %v978 = vunpack.c.0.s8 %v977
        %v979 = vlaneseq
        %v980 = vshrl.u32 %v979, 7
        %v981 = vsub.s32 %v978, %v980
        %v982 = vrot.slane %v948, %v981
        %983 = vrot.lane.b32.xlu0 %v982, 120
        %v984 = vpop.permute.xlu0 %983
        %v985 = vsel %vm265, %v984, 0
        %987 = vmatprep.subr.mxu0 0.0
        %988 = vmatpush1.msra.mxu0 %v257
        %989 = vmatprep.subr.mxu0 0.0
        %990 = vmatpush1.msra.mxu0 0.0
        %991 = vmatprep.subr.mxu0 0.0
        %992 = vmatpush1.msra.mxu0 0.0
        %993 = vmatprep.subr.mxu0 0.0
        %994 = vmatpush1.msra.mxu0 0.0
        %995 = vmatprep.subr.mxu0 0.0
        %996 = vmatpush1.msra.mxu0 0.0
        %997 = vmatprep.subr.mxu0 0.0
        %998 = vmatpush1.msra.mxu0 0.0
        %999 = vmatprep.subr.mxu0 0.0
        %1000 = vmatpush1.msra.mxu0 0.0
        %1001 = vmatprep.subr.mxu0 0.0
        %1002 = vmatpush1.msra.mxu0 0.0
        %1003 = vmatprep.subr.mxu0 0.0
        %1004 = vmatpush1.msra.mxu0 0.0
        %1005 = vmatprep.subr.mxu0 0.0
        %1006 = vmatpush1.msra.mxu0 0.0
        %1007 = vmatprep.subr.mxu0 0.0
        %1008 = vmatpush1.msra.mxu0 0.0
        %1009 = vmatprep.subr.mxu0 0.0
        %1010 = vmatpush1.msra.mxu0 0.0
        %1011 = vmatprep.subr.mxu0 0.0
        %1012 = vmatpush1.msra.mxu0 0.0
        %1013 = vmatprep.subr.mxu0 0.0
        %1014 = vmatpush1.msra.mxu0 0.0
        %1015 = vmatprep.subr.mxu0 0.0
        %1016 = vmatpush1.msra.mxu0 0.0
        %1017 = vmatprep.subr.mxu0 0.0
        %1018 = vmatpush1.msra.mxu0 0.0
        %1019 = vmatprep.subr.mxu0 0.0
        %1020 = vmatpush1.msra.mxu0 0.0
        %1021 = vmatprep.subr.mxu0 0.0
        %1022 = vmatpush1.msra.mxu0 0.0
        %1023 = vmatprep.subr.mxu0 0.0
        %1024 = vmatpush1.msra.mxu0 0.0
        %1025 = vmatprep.subr.mxu0 0.0
        %1026 = vmatpush1.msra.mxu0 0.0
        %1027 = vmatprep.subr.mxu0 0.0
        %1028 = vmatpush1.msra.mxu0 0.0
        %1029 = vmatprep.subr.mxu0 0.0
        %1030 = vmatpush1.msra.mxu0 0.0
        %1031 = vmatprep.subr.mxu0 0.0
        %1032 = vmatpush1.msra.mxu0 0.0
        %1033 = vmatprep.subr.mxu0 0.0
        %1034 = vmatpush1.msra.mxu0 0.0
        %1035 = vmatprep.subr.mxu0 0.0
        %1036 = vmatpush1.msra.mxu0 0.0
        %1037 = vmatprep.subr.mxu0 0.0
        %1038 = vmatpush1.msra.mxu0 0.0
        %1039 = vmatprep.subr.mxu0 0.0
        %1040 = vmatpush1.msra.mxu0 0.0
        %1041 = vmatprep.subr.mxu0 0.0
        %1042 = vmatpush1.msra.mxu0 0.0
        %1043 = vmatprep.subr.mxu0 0.0
        %1044 = vmatpush1.msra.mxu0 0.0
        %1045 = vmatprep.subr.mxu0 0.0
        %1046 = vmatpush1.msra.mxu0 0.0
        %1047 = vmatprep.subr.mxu0 0.0
        %1048 = vmatpush1.msra.mxu0 0.0
        %1049 = vmatprep.subr.mxu0 0.0
        %1050 = vmatpush1.msra.mxu0 0.0
        %1051 = vmatprep.mubr.f32.mxu0 0.0
        %1052 = vmatmul.mubr.f32.gmra.mrb[0].mxu0 %v985
        %v1053 = vpop.f32.mrb[0].mxu0
        %v1054 = vadd.f32 0.0, %v1053
        %v1055 = vpop.f32.mrb[0].mxu0
        %1056 = vdwg.mxu0
        %v1057 = vadd.f32 %v974, %v1054
        %v1058 = vxor.u32 %v1057, 2147483648
        %v1059 = vmul.f32 %v1058, 1.442695
        %v1060 = vpow.pop %v1059
        %v1061 = vadd.f32 %v1060, 1.0
        %v1062 = vrcp.pop %v1061
        %v1063 = vmul.f32 1.0, %v1062
        %v1064 = vadd.f32 %v1054, %v352
        %v1067 = vunpack.c.l.s4 1983009808
        %v1068 = vunpack.c.0.s8 %v1067
        %v1069 = vlaneseq
        %v1070 = vshrl.u32 %v1069, 7
        %v1071 = vsub.s32 %v1068, %v1070
        %v1072 = vrot.slane %v1064, %v1071
        %1073 = vrot.lane.b32.xlu0 %v1072, 112
        %v1074 = vpop.permute.xlu0 %1073
        %v1076 = vmul.f32 %v1063, %v1074
        %1078 = vrot.lane.b32.xlu0 %v1076, 16
        %v1079 = vpop.permute.xlu0 %1078
        %v1081 = vadd.f32 %v974, %v1079
        %v1082 = vtanh.pop %v1081
        %v1083 = vsub.f32 1.0, %v1063
        %1085 = vrot.lane.b32.xlu0 %v1082, 120
        %v1086 = vpop.permute.xlu0 %1085
        %v1088 = vmul.f32 %v1083, %v1086
        %v1089 = vmul.f32 %v1063, %v948
        %v1090 = vadd.f32 %v1088, %v1089
        %v1091 = vpack.c.bf16 %v1090, %v1090
        %v1094 = vunpack.c.l.s4 1966171168
        %v1095 = vunpack.c.0.s8 %v1094
        %v1096 = vlaneseq
        %v1097 = vshrl.u32 %v1096, 7
        %v1098 = vsub.s32 %v1095, %v1097
        %v1099 = vrot.slane %v1091, %v1098
        %v1101 = vunpack.c.l.s4 1966171168
        %v1102 = vunpack.c.0.s8 %v1101
        %v1103 = vlaneseq
        %v1104 = vshrl.u32 %v1103, 7
        %v1105 = vsub.s32 %v1102, %v1104
        %v1106 = vrot.slane %v1099, %v1105
        %1107 = vrot.lane.b32.xlu0 %v1106, 120
        %v1108 = vpop.permute.xlu0 %1107
        %s1110 = scalar_lea.vmem %s256, %s971 [#allocation8]
        %1111 = vst.msk [vmem:[%s1110] sm:$0x1] %vm401, %v1108
        %s1112 = smul.u32 %s261, 6
        %s1113 = sadd.s32 %s259, %s1112
        %s1114 = scalar_lea.vmem %s208, %s1113 [#allocation2]
        %v1115 = vld [vmem:[%s1114] sm:$0x1]
        %v1116 = vunpack.c.l.bf16 %v1115
        %v1119 = vunpack.c.l.s4 1983009808
        %v1120 = vunpack.c.0.s8 %v1119
        %v1121 = vlaneseq
        %v1122 = vshrl.u32 %v1121, 7
        %v1123 = vsub.s32 %v1120, %v1122
        %v1124 = vrot.slane %v1090, %v1123
        %1125 = vrot.lane.b32.xlu0 %v1124, 120
        %v1126 = vpop.permute.xlu0 %1125
        %v1127 = vsel %vm265, %v1126, 0
        %1129 = vmatprep.subr.mxu0 0.0
        %1130 = vmatpush1.msra.mxu0 %v257
        %1131 = vmatprep.subr.mxu0 0.0
        %1132 = vmatpush1.msra.mxu0 0.0
        %1133 = vmatprep.subr.mxu0 0.0
        %1134 = vmatpush1.msra.mxu0 0.0
        %1135 = vmatprep.subr.mxu0 0.0
        %1136 = vmatpush1.msra.mxu0 0.0
        %1137 = vmatprep.subr.mxu0 0.0
        %1138 = vmatpush1.msra.mxu0 0.0
        %1139 = vmatprep.subr.mxu0 0.0
        %1140 = vmatpush1.msra.mxu0 0.0
        %1141 = vmatprep.subr.mxu0 0.0
        %1142 = vmatpush1.msra.mxu0 0.0
        %1143 = vmatprep.subr.mxu0 0.0
        %1144 = vmatpush1.msra.mxu0 0.0
        %1145 = vmatprep.subr.mxu0 0.0
        %1146 = vmatpush1.msra.mxu0 0.0
        %1147 = vmatprep.subr.mxu0 0.0
        %1148 = vmatpush1.msra.mxu0 0.0
        %1149 = vmatprep.subr.mxu0 0.0
        %1150 = vmatpush1.msra.mxu0 0.0
        %1151 = vmatprep.subr.mxu0 0.0
        %1152 = vmatpush1.msra.mxu0 0.0
        %1153 = vmatprep.subr.mxu0 0.0
        %1154 = vmatpush1.msra.mxu0 0.0
        %1155 = vmatprep.subr.mxu0 0.0
        %1156 = vmatpush1.msra.mxu0 0.0
        %1157 = vmatprep.subr.mxu0 0.0
        %1158 = vmatpush1.msra.mxu0 0.0
        %1159 = vmatprep.subr.mxu0 0.0
        %1160 = vmatpush1.msra.mxu0 0.0
        %1161 = vmatprep.subr.mxu0 0.0
        %1162 = vmatpush1.msra.mxu0 0.0
        %1163 = vmatprep.subr.mxu0 0.0
        %1164 = vmatpush1.msra.mxu0 0.0
        %1165 = vmatprep.subr.mxu0 0.0
        %1166 = vmatpush1.msra.mxu0 0.0
        %1167 = vmatprep.subr.mxu0 0.0
        %1168 = vmatpush1.msra.mxu0 0.0
        %1169 = vmatprep.subr.mxu0 0.0
        %1170 = vmatpush1.msra.mxu0 0.0
        %1171 = vmatprep.subr.mxu0 0.0
        %1172 = vmatpush1.msra.mxu0 0.0
        %1173 = vmatprep.subr.mxu0 0.0
        %1174 = vmatpush1.msra.mxu0 0.0
        %1175 = vmatprep.subr.mxu0 0.0
        %1176 = vmatpush1.msra.mxu0 0.0
        %1177 = vmatprep.subr.mxu0 0.0
        %1178 = vmatpush1.msra.mxu0 0.0
        %1179 = vmatprep.subr.mxu0 0.0
        %1180 = vmatpush1.msra.mxu0 0.0
        %1181 = vmatprep.subr.mxu0 0.0
        %1182 = vmatpush1.msra.mxu0 0.0
        %1183 = vmatprep.subr.mxu0 0.0
        %1184 = vmatpush1.msra.mxu0 0.0
        %1185 = vmatprep.subr.mxu0 0.0
        %1186 = vmatpush1.msra.mxu0 0.0
        %1187 = vmatprep.subr.mxu0 0.0
        %1188 = vmatpush1.msra.mxu0 0.0
        %1189 = vmatprep.subr.mxu0 0.0
        %1190 = vmatpush1.msra.mxu0 0.0
        %1191 = vmatprep.subr.mxu0 0.0
        %1192 = vmatpush1.msra.mxu0 0.0
        %1193 = vmatprep.mubr.f32.mxu0 0.0
        %1194 = vmatmul.mubr.f32.gmra.mrb[0].mxu0 %v1127
        %v1195 = vpop.f32.mrb[0].mxu0
        %v1196 = vadd.f32 0.0, %v1195
        %v1197 = vpop.f32.mrb[0].mxu0
        %1198 = vdwg.mxu0
        %v1199 = vadd.f32 %v1116, %v1196
        %v1200 = vxor.u32 %v1199, 2147483648
        %v1201 = vmul.f32 %v1200, 1.442695
        %v1202 = vpow.pop %v1201
        %v1203 = vadd.f32 %v1202, 1.0
        %v1204 = vrcp.pop %v1203
        %v1205 = vmul.f32 1.0, %v1204
        %v1206 = vadd.f32 %v1196, %v352
        %v1209 = vunpack.c.l.s4 1983009808
        %v1210 = vunpack.c.0.s8 %v1209
        %v1211 = vlaneseq
        %v1212 = vshrl.u32 %v1211, 7
        %v1213 = vsub.s32 %v1210, %v1212
        %v1214 = vrot.slane %v1206, %v1213
        %1215 = vrot.lane.b32.xlu0 %v1214, 112
        %v1216 = vpop.permute.xlu0 %1215
        %v1218 = vmul.f32 %v1205, %v1216
        %1220 = vrot.lane.b32.xlu0 %v1218, 16
        %v1221 = vpop.permute.xlu0 %1220
        %v1223 = vadd.f32 %v1116, %v1221
        %v1224 = vtanh.pop %v1223
        %v1225 = vsub.f32 1.0, %v1205
        %1227 = vrot.lane.b32.xlu0 %v1224, 120
        %v1228 = vpop.permute.xlu0 %1227
        %v1230 = vmul.f32 %v1225, %v1228
        %v1231 = vmul.f32 %v1205, %v1090
        %v1232 = vadd.f32 %v1230, %v1231
        %v1233 = vpack.c.bf16 %v1232, %v1232
        %v1236 = vunpack.c.l.s4 1966171168
        %v1237 = vunpack.c.0.s8 %v1236
        %v1238 = vlaneseq
        %v1239 = vshrl.u32 %v1238, 7
        %v1240 = vsub.s32 %v1237, %v1239
        %v1241 = vrot.slane %v1233, %v1240
        %v1243 = vunpack.c.l.s4 1966171168
        %v1244 = vunpack.c.0.s8 %v1243
        %v1245 = vlaneseq
        %v1246 = vshrl.u32 %v1245, 7
        %v1247 = vsub.s32 %v1244, %v1246
        %v1248 = vrot.slane %v1241, %v1247
        %1249 = vrot.lane.b32.xlu0 %v1248, 120
        %v1250 = vpop.permute.xlu0 %1249
        %s1252 = scalar_lea.vmem %s256, %s1113 [#allocation8]
        %1253 = vst.msk [vmem:[%s1252] sm:$0x1] %vm401, %v1250
        %s1254 = smul.u32 %s261, 7
        %s1255 = sadd.s32 %s259, %s1254
        %s1256 = scalar_lea.vmem %s208, %s1255 [#allocation2]
        %v1257 = vld [vmem:[%s1256] sm:$0x1]
        %v1258 = vunpack.c.l.bf16 %v1257
        %v1261 = vunpack.c.l.s4 1983009808
        %v1262 = vunpack.c.0.s8 %v1261
        %v1263 = vlaneseq
        %v1264 = vshrl.u32 %v1263, 7
        %v1265 = vsub.s32 %v1262, %v1264
        %v1266 = vrot.slane %v1232, %v1265
        %1267 = vrot.lane.b32.xlu0 %v1266, 120
        %v1268 = vpop.permute.xlu0 %1267
        %v1269 = vsel %vm265, %v1268, 0
        %1271 = vmatprep.subr.mxu0 0.0
        %1272 = vmatpush1.msra.mxu0 %v257
        %1273 = vmatprep.subr.mxu0 0.0
        %1274 = vmatpush1.msra.mxu0 0.0
        %1275 = vmatprep.subr.mxu0 0.0
        %1276 = vmatpush1.msra.mxu0 0.0
        %1277 = vmatprep.subr.mxu0 0.0
        %1278 = vmatpush1.msra.mxu0 0.0
        %1279 = vmatprep.subr.mxu0 0.0
        %1280 = vmatpush1.msra.mxu0 0.0
        %1281 = vmatprep.subr.mxu0 0.0
        %1282 = vmatpush1.msra.mxu0 0.0
        %1283 = vmatprep.subr.mxu0 0.0
        %1284 = vmatpush1.msra.mxu0 0.0
        %1285 = vmatprep.subr.mxu0 0.0
        %1286 = vmatpush1.msra.mxu0 0.0
        %1287 = vmatprep.subr.mxu0 0.0
        %1288 = vmatpush1.msra.mxu0 0.0
        %1289 = vmatprep.subr.mxu0 0.0
        %1290 = vmatpush1.msra.mxu0 0.0
        %1291 = vmatprep.subr.mxu0 0.0
        %1292 = vmatpush1.msra.mxu0 0.0
        %1293 = vmatprep.subr.mxu0 0.0
        %1294 = vmatpush1.msra.mxu0 0.0
        %1295 = vmatprep.subr.mxu0 0.0
        %1296 = vmatpush1.msra.mxu0 0.0
        %1297 = vmatprep.subr.mxu0 0.0
        %1298 = vmatpush1.msra.mxu0 0.0
        %1299 = vmatprep.subr.mxu0 0.0
        %1300 = vmatpush1.msra.mxu0 0.0
        %1301 = vmatprep.subr.mxu0 0.0
        %1302 = vmatpush1.msra.mxu0 0.0
        %1303 = vmatprep.subr.mxu0 0.0
        %1304 = vmatpush1.msra.mxu0 0.0
        %1305 = vmatprep.subr.mxu0 0.0
        %1306 = vmatpush1.msra.mxu0 0.0
        %1307 = vmatprep.subr.mxu0 0.0
        %1308 = vmatpush1.msra.mxu0 0.0
        %1309 = vmatprep.subr.mxu0 0.0
        %1310 = vmatpush1.msra.mxu0 0.0
        %1311 = vmatprep.subr.mxu0 0.0
        %1312 = vmatpush1.msra.mxu0 0.0
        %1313 = vmatprep.subr.mxu0 0.0
        %1314 = vmatpush1.msra.mxu0 0.0
        %1315 = vmatprep.subr.mxu0 0.0
        %1316 = vmatpush1.msra.mxu0 0.0
        %1317 = vmatprep.subr.mxu0 0.0
        %1318 = vmatpush1.msra.mxu0 0.0
        %1319 = vmatprep.subr.mxu0 0.0
        %1320 = vmatpush1.msra.mxu0 0.0
        %1321 = vmatprep.subr.mxu0 0.0
        %1322 = vmatpush1.msra.mxu0 0.0
        %1323 = vmatprep.subr.mxu0 0.0
        %1324 = vmatpush1.msra.mxu0 0.0
        %1325 = vmatprep.subr.mxu0 0.0
        %1326 = vmatpush1.msra.mxu0 0.0
        %1327 = vmatprep.subr.mxu0 0.0
        %1328 = vmatpush1.msra.mxu0 0.0
        %1329 = vmatprep.subr.mxu0 0.0
        %1330 = vmatpush1.msra.mxu0 0.0
        %1331 = vmatprep.subr.mxu0 0.0
        %1332 = vmatpush1.msra.mxu0 0.0
        %1333 = vmatprep.subr.mxu0 0.0
        %1334 = vmatpush1.msra.mxu0 0.0
        %1335 = vmatprep.mubr.f32.mxu0 0.0
        %1336 = vmatmul.mubr.f32.gmra.mrb[0].mxu0 %v1269
        %v1337 = vpop.f32.mrb[0].mxu0
        %v1338 = vadd.f32 0.0, %v1337
        %v1339 = vpop.f32.mrb[0].mxu0
        %1340 = vdwg.mxu0
        %v1341 = vadd.f32 %v1258, %v1338
        %v1342 = vxor.u32 %v1341, 2147483648
        %v1343 = vmul.f32 %v1342, 1.442695
        %v1344 = vpow.pop %v1343
        %v1345 = vadd.f32 %v1344, 1.0
        %v1346 = vrcp.pop %v1345
        %v1347 = vmul.f32 1.0, %v1346
        %v1348 = vadd.f32 %v1338, %v352
        %v1351 = vunpack.c.l.s4 1983009808
        %v1352 = vunpack.c.0.s8 %v1351
        %v1353 = vlaneseq
        %v1354 = vshrl.u32 %v1353, 7
        %v1355 = vsub.s32 %v1352, %v1354
        %v1356 = vrot.slane %v1348, %v1355
        %1357 = vrot.lane.b32.xlu0 %v1356, 112
        %v1358 = vpop.permute.xlu0 %1357
        %v1360 = vmul.f32 %v1347, %v1358
        %1362 = vrot.lane.b32.xlu0 %v1360, 16
        %v1363 = vpop.permute.xlu0 %1362
        %v1365 = vadd.f32 %v1258, %v1363
        %v1366 = vtanh.pop %v1365
        %v1367 = vsub.f32 1.0, %v1347
        %1369 = vrot.lane.b32.xlu0 %v1366, 120
        %v1370 = vpop.permute.xlu0 %1369
        %v1372 = vmul.f32 %v1367, %v1370
        %v1373 = vmul.f32 %v1347, %v1232
        %v1374 = vadd.f32 %v1372, %v1373
        %v1375 = vpack.c.bf16 %v1374, %v1374
        %v1378 = vunpack.c.l.s4 1966171168
        %v1379 = vunpack.c.0.s8 %v1378
        %v1380 = vlaneseq
        %v1381 = vshrl.u32 %v1380, 7
        %v1382 = vsub.s32 %v1379, %v1381
        %v1383 = vrot.slane %v1375, %v1382
        %v1385 = vunpack.c.l.s4 1966171168
        %v1386 = vunpack.c.0.s8 %v1385
        %v1387 = vlaneseq
        %v1388 = vshrl.u32 %v1387, 7
        %v1389 = vsub.s32 %v1386, %v1388
        %v1390 = vrot.slane %v1383, %v1389
        %1391 = vrot.lane.b32.xlu0 %v1390, 120
        %v1392 = vpop.permute.xlu0 %1391
        %s1394 = scalar_lea.vmem %s256, %s1255 [#allocation8]
        %1395 = vst.msk [vmem:[%s1394] sm:$0x1] %vm401, %v1392
        %s1396 = smul.u32 %s261, 8
        %s1397 = sadd.s32 %s259, %s1396
        %s1398 = scalar_lea.vmem %s208, %s1397 [#allocation2]
        %v1399 = vld [vmem:[%s1398] sm:$0x1]
        %v1400 = vunpack.c.l.bf16 %v1399
        %v1403 = vunpack.c.l.s4 1983009808
        %v1404 = vunpack.c.0.s8 %v1403
        %v1405 = vlaneseq
        %v1406 = vshrl.u32 %v1405, 7
        %v1407 = vsub.s32 %v1404, %v1406
        %v1408 = vrot.slane %v1374, %v1407
        %1409 = vrot.lane.b32.xlu0 %v1408, 120
        %v1410 = vpop.permute.xlu0 %1409
        %v1411 = vsel %vm265, %v1410, 0
        %1413 = vmatprep.subr.mxu0 0.0
        %1414 = vmatpush1.msra.mxu0 %v257
        %1415 = vmatprep.subr.mxu0 0.0
        %1416 = vmatpush1.msra.mxu0 0.0
        %1417 = vmatprep.subr.mxu0 0.0
        %1418 = vmatpush1.msra.mxu0 0.0
        %1419 = vmatprep.subr.mxu0 0.0
        %1420 = vmatpush1.msra.mxu0 0.0
        %1421 = vmatprep.subr.mxu0 0.0
        %1422 = vmatpush1.msra.mxu0 0.0
        %1423 = vmatprep.subr.mxu0 0.0
        %1424 = vmatpush1.msra.mxu0 0.0
        %1425 = vmatprep.subr.mxu0 0.0
        %1426 = vmatpush1.msra.mxu0 0.0
        %1427 = vmatprep.subr.mxu0 0.0
        %1428 = vmatpush1.msra.mxu0 0.0
        %1429 = vmatprep.subr.mxu0 0.0
        %1430 = vmatpush1.msra.mxu0 0.0
        %1431 = vmatprep.subr.mxu0 0.0
        %1432 = vmatpush1.msra.mxu0 0.0
        %1433 = vmatprep.subr.mxu0 0.0
        %1434 = vmatpush1.msra.mxu0 0.0
        %1435 = vmatprep.subr.mxu0 0.0
        %1436 = vmatpush1.msra.mxu0 0.0
        %1437 = vmatprep.subr.mxu0 0.0
        %1438 = vmatpush1.msra.mxu0 0.0
        %1439 = vmatprep.subr.mxu0 0.0
        %1440 = vmatpush1.msra.mxu0 0.0
        %1441 = vmatprep.subr.mxu0 0.0
        %1442 = vmatpush1.msra.mxu0 0.0
        %1443 = vmatprep.subr.mxu0 0.0
        %1444 = vmatpush1.msra.mxu0 0.0
        %1445 = vmatprep.subr.mxu0 0.0
        %1446 = vmatpush1.msra.mxu0 0.0
        %1447 = vmatprep.subr.mxu0 0.0
        %1448 = vmatpush1.msra.mxu0 0.0
        %1449 = vmatprep.subr.mxu0 0.0
        %1450 = vmatpush1.msra.mxu0 0.0
        %1451 = vmatprep.subr.mxu0 0.0
        %1452 = vmatpush1.msra.mxu0 0.0
        %1453 = vmatprep.subr.mxu0 0.0
        %1454 = vmatpush1.msra.mxu0 0.0
        %1455 = vmatprep.subr.mxu0 0.0
        %1456 = vmatpush1.msra.mxu0 0.0
        %1457 = vmatprep.subr.mxu0 0.0
        %1458 = vmatpush1.msra.mxu0 0.0
        %1459 = vmatprep.subr.mxu0 0.0
        %1460 = vmatpush1.msra.mxu0 0.0
        %1461 = vmatprep.subr.mxu0 0.0
        %1462 = vmatpush1.msra.mxu0 0.0
        %1463 = vmatprep.subr.mxu0 0.0
        %1464 = vmatpush1.msra.mxu0 0.0
        %1465 = vmatprep.subr.mxu0 0.0
        %1466 = vmatpush1.msra.mxu0 0.0
        %1467 = vmatprep.subr.mxu0 0.0
        %1468 = vmatpush1.msra.mxu0 0.0
        %1469 = vmatprep.subr.mxu0 0.0
        %1470 = vmatpush1.msra.mxu0 0.0
        %1471 = vmatprep.subr.mxu0 0.0
        %1472 = vmatpush1.msra.mxu0 0.0
        %1473 = vmatprep.subr.mxu0 0.0
        %1474 = vmatpush1.msra.mxu0 0.0
        %1475 = vmatprep.subr.mxu0 0.0
        %1476 = vmatpush1.msra.mxu0 0.0
        %1477 = vmatprep.mubr.f32.mxu0 0.0
        %1478 = vmatmul.mubr.f32.gmra.mrb[0].mxu0 %v1411
        %v1479 = vpop.f32.mrb[0].mxu0
        %v1480 = vadd.f32 0.0, %v1479
        %v1481 = vpop.f32.mrb[0].mxu0
        %1482 = vdwg.mxu0
        %v1483 = vadd.f32 %v1400, %v1480
        %v1484 = vxor.u32 %v1483, 2147483648
        %v1485 = vmul.f32 %v1484, 1.442695
        %v1486 = vpow.pop %v1485
        %v1487 = vadd.f32 %v1486, 1.0
        %v1488 = vrcp.pop %v1487
        %v1489 = vmul.f32 1.0, %v1488
        %v1490 = vadd.f32 %v1480, %v352
        %v1493 = vunpack.c.l.s4 1983009808
        %v1494 = vunpack.c.0.s8 %v1493
        %v1495 = vlaneseq
        %v1496 = vshrl.u32 %v1495, 7
        %v1497 = vsub.s32 %v1494, %v1496
        %v1498 = vrot.slane %v1490, %v1497
        %1499 = vrot.lane.b32.xlu0 %v1498, 112
        %v1500 = vpop.permute.xlu0 %1499
        %v1502 = vmul.f32 %v1489, %v1500
        %1504 = vrot.lane.b32.xlu0 %v1502, 16
        %v1505 = vpop.permute.xlu0 %1504
        %v1507 = vadd.f32 %v1400, %v1505
        %v1508 = vtanh.pop %v1507
        %v1509 = vsub.f32 1.0, %v1489
        %1511 = vrot.lane.b32.xlu0 %v1508, 120
        %v1512 = vpop.permute.xlu0 %1511
        %v1514 = vmul.f32 %v1509, %v1512
        %v1515 = vmul.f32 %v1489, %v1374
        %v1516 = vadd.f32 %v1514, %v1515
        %v1517 = vpack.c.bf16 %v1516, %v1516
        %v1520 = vunpack.c.l.s4 1966171168
        %v1521 = vunpack.c.0.s8 %v1520
        %v1522 = vlaneseq
        %v1523 = vshrl.u32 %v1522, 7
        %v1524 = vsub.s32 %v1521, %v1523
        %v1525 = vrot.slane %v1517, %v1524
        %v1527 = vunpack.c.l.s4 1966171168
        %v1528 = vunpack.c.0.s8 %v1527
        %v1529 = vlaneseq
        %v1530 = vshrl.u32 %v1529, 7
        %v1531 = vsub.s32 %v1528, %v1530
        %v1532 = vrot.slane %v1525, %v1531
        %1533 = vrot.lane.b32.xlu0 %v1532, 120
        %v1534 = vpop.permute.xlu0 %1533
        %s1536 = scalar_lea.vmem %s256, %s1397 [#allocation8]
        %1537 = vst.msk [vmem:[%s1536] sm:$0x1] %vm401, %v1534
        %s1538 = smul.u32 %s261, 9
        %s1539 = sadd.s32 %s259, %s1538
        %s1540 = scalar_lea.vmem %s208, %s1539 [#allocation2]
        %v1541 = vld [vmem:[%s1540] sm:$0x1]
        %v1542 = vunpack.c.l.bf16 %v1541
        %v1545 = vunpack.c.l.s4 1983009808
        %v1546 = vunpack.c.0.s8 %v1545
        %v1547 = vlaneseq
        %v1548 = vshrl.u32 %v1547, 7
        %v1549 = vsub.s32 %v1546, %v1548
        %v1550 = vrot.slane %v1516, %v1549
        %1551 = vrot.lane.b32.xlu0 %v1550, 120
        %v1552 = vpop.permute.xlu0 %1551
        %v1553 = vsel %vm265, %v1552, 0
        %1555 = vmatprep.subr.mxu0 0.0
        %1556 = vmatpush1.msra.mxu0 %v257
        %1557 = vmatprep.subr.mxu0 0.0
        %1558 = vmatpush1.msra.mxu0 0.0
        %1559 = vmatprep.subr.mxu0 0.0
        %1560 = vmatpush1.msra.mxu0 0.0
        %1561 = vmatprep.subr.mxu0 0.0
        %1562 = vmatpush1.msra.mxu0 0.0
        %1563 = vmatprep.subr.mxu0 0.0
        %1564 = vmatpush1.msra.mxu0 0.0
        %1565 = vmatprep.subr.mxu0 0.0
        %1566 = vmatpush1.msra.mxu0 0.0
        %1567 = vmatprep.subr.mxu0 0.0
        %1568 = vmatpush1.msra.mxu0 0.0
        %1569 = vmatprep.subr.mxu0 0.0
        %1570 = vmatpush1.msra.mxu0 0.0
        %1571 = vmatprep.subr.mxu0 0.0
        %1572 = vmatpush1.msra.mxu0 0.0
        %1573 = vmatprep.subr.mxu0 0.0
        %1574 = vmatpush1.msra.mxu0 0.0
        %1575 = vmatprep.subr.mxu0 0.0
        %1576 = vmatpush1.msra.mxu0 0.0
        %1577 = vmatprep.subr.mxu0 0.0
        %1578 = vmatpush1.msra.mxu0 0.0
        %1579 = vmatprep.subr.mxu0 0.0
        %1580 = vmatpush1.msra.mxu0 0.0
        %1581 = vmatprep.subr.mxu0 0.0
        %1582 = vmatpush1.msra.mxu0 0.0
        %1583 = vmatprep.subr.mxu0 0.0
        %1584 = vmatpush1.msra.mxu0 0.0
        %1585 = vmatprep.subr.mxu0 0.0
        %1586 = vmatpush1.msra.mxu0 0.0
        %1587 = vmatprep.subr.mxu0 0.0
        %1588 = vmatpush1.msra.mxu0 0.0
        %1589 = vmatprep.subr.mxu0 0.0
        %1590 = vmatpush1.msra.mxu0 0.0
        %1591 = vmatprep.subr.mxu0 0.0
        %1592 = vmatpush1.msra.mxu0 0.0
        %1593 = vmatprep.subr.mxu0 0.0
        %1594 = vmatpush1.msra.mxu0 0.0
        %1595 = vmatprep.subr.mxu0 0.0
        %1596 = vmatpush1.msra.mxu0 0.0
        %1597 = vmatprep.subr.mxu0 0.0
        %1598 = vmatpush1.msra.mxu0 0.0
        %1599 = vmatprep.subr.mxu0 0.0
        %1600 = vmatpush1.msra.mxu0 0.0
        %1601 = vmatprep.subr.mxu0 0.0
        %1602 = vmatpush1.msra.mxu0 0.0
        %1603 = vmatprep.subr.mxu0 0.0
        %1604 = vmatpush1.msra.mxu0 0.0
        %1605 = vmatprep.subr.mxu0 0.0
        %1606 = vmatpush1.msra.mxu0 0.0
        %1607 = vmatprep.subr.mxu0 0.0
        %1608 = vmatpush1.msra.mxu0 0.0
        %1609 = vmatprep.subr.mxu0 0.0
        %1610 = vmatpush1.msra.mxu0 0.0
        %1611 = vmatprep.subr.mxu0 0.0
        %1612 = vmatpush1.msra.mxu0 0.0
        %1613 = vmatprep.subr.mxu0 0.0
        %1614 = vmatpush1.msra.mxu0 0.0
        %1615 = vmatprep.subr.mxu0 0.0
        %1616 = vmatpush1.msra.mxu0 0.0
        %1617 = vmatprep.subr.mxu0 0.0
        %1618 = vmatpush1.msra.mxu0 0.0
        %1619 = vmatprep.mubr.f32.mxu0 0.0
        %1620 = vmatmul.mubr.f32.gmra.mrb[0].mxu0 %v1553
        %v1621 = vpop.f32.mrb[0].mxu0
        %v1622 = vadd.f32 0.0, %v1621
        %v1623 = vpop.f32.mrb[0].mxu0
        %1624 = vdwg.mxu0
        %v1625 = vadd.f32 %v1542, %v1622
        %v1626 = vxor.u32 %v1625, 2147483648
        %v1627 = vmul.f32 %v1626, 1.442695
        %v1628 = vpow.pop %v1627
        %v1629 = vadd.f32 %v1628, 1.0
        %v1630 = vrcp.pop %v1629
        %v1631 = vmul.f32 1.0, %v1630
        %v1632 = vadd.f32 %v1622, %v352
        %v1635 = vunpack.c.l.s4 1983009808
        %v1636 = vunpack.c.0.s8 %v1635
        %v1637 = vlaneseq
        %v1638 = vshrl.u32 %v1637, 7
        %v1639 = vsub.s32 %v1636, %v1638
        %v1640 = vrot.slane %v1632, %v1639
        %1641 = vrot.lane.b32.xlu0 %v1640, 112
        %v1642 = vpop.permute.xlu0 %1641
        %v1644 = vmul.f32 %v1631, %v1642
        %1646 = vrot.lane.b32.xlu0 %v1644, 16
        %v1647 = vpop.permute.xlu0 %1646
        %v1649 = vadd.f32 %v1542, %v1647
        %v1650 = vtanh.pop %v1649
        %v1651 = vsub.f32 1.0, %v1631
        %1653 = vrot.lane.b32.xlu0 %v1650, 120
        %v1654 = vpop.permute.xlu0 %1653
        %v1656 = vmul.f32 %v1651, %v1654
        %v1657 = vmul.f32 %v1631, %v1516
        %v1658 = vadd.f32 %v1656, %v1657
        %v1659 = vpack.c.bf16 %v1658, %v1658
        %v1662 = vunpack.c.l.s4 1966171168
        %v1663 = vunpack.c.0.s8 %v1662
        %v1664 = vlaneseq
        %v1665 = vshrl.u32 %v1664, 7
        %v1666 = vsub.s32 %v1663, %v1665
        %v1667 = vrot.slane %v1659, %v1666
        %v1669 = vunpack.c.l.s4 1966171168
        %v1670 = vunpack.c.0.s8 %v1669
        %v1671 = vlaneseq
        %v1672 = vshrl.u32 %v1671, 7
        %v1673 = vsub.s32 %v1670, %v1672
        %v1674 = vrot.slane %v1667, %v1673
        %1675 = vrot.lane.b32.xlu0 %v1674, 120
        %v1676 = vpop.permute.xlu0 %1675
        %s1678 = scalar_lea.vmem %s256, %s1539 [#allocation8]
        %1679 = vst.msk [vmem:[%s1678] sm:$0x1] %vm401, %v1676
        %s1680 = smul.u32 %s261, 10
        %s1681 = sadd.s32 %s259, %s1680
        %s1682 = scalar_lea.vmem %s208, %s1681 [#allocation2]
        %v1683 = vld [vmem:[%s1682] sm:$0x1]
        %v1684 = vunpack.c.l.bf16 %v1683
        %v1687 = vunpack.c.l.s4 1983009808
        %v1688 = vunpack.c.0.s8 %v1687
        %v1689 = vlaneseq
        %v1690 = vshrl.u32 %v1689, 7
        %v1691 = vsub.s32 %v1688, %v1690
        %v1692 = vrot.slane %v1658, %v1691
        %1693 = vrot.lane.b32.xlu0 %v1692, 120
        %v1694 = vpop.permute.xlu0 %1693
        %v1695 = vsel %vm265, %v1694, 0
        %1697 = vmatprep.subr.mxu0 0.0
        %1698 = vmatpush1.msra.mxu0 %v257
        %1699 = vmatprep.subr.mxu0 0.0
        %1700 = vmatpush1.msra.mxu0 0.0
        %1701 = vmatprep.subr.mxu0 0.0
        %1702 = vmatpush1.msra.mxu0 0.0
        %1703 = vmatprep.subr.mxu0 0.0
        %1704 = vmatpush1.msra.mxu0 0.0
        %1705 = vmatprep.subr.mxu0 0.0
        %1706 = vmatpush1.msra.mxu0 0.0
        %1707 = vmatprep.subr.mxu0 0.0
        %1708 = vmatpush1.msra.mxu0 0.0
        %1709 = vmatprep.subr.mxu0 0.0
        %1710 = vmatpush1.msra.mxu0 0.0
        %1711 = vmatprep.subr.mxu0 0.0
        %1712 = vmatpush1.msra.mxu0 0.0
        %1713 = vmatprep.subr.mxu0 0.0
        %1714 = vmatpush1.msra.mxu0 0.0
        %1715 = vmatprep.subr.mxu0 0.0
        %1716 = vmatpush1.msra.mxu0 0.0
        %1717 = vmatprep.subr.mxu0 0.0
        %1718 = vmatpush1.msra.mxu0 0.0
        %1719 = vmatprep.subr.mxu0 0.0
        %1720 = vmatpush1.msra.mxu0 0.0
        %1721 = vmatprep.subr.mxu0 0.0
        %1722 = vmatpush1.msra.mxu0 0.0
        %1723 = vmatprep.subr.mxu0 0.0
        %1724 = vmatpush1.msra.mxu0 0.0
        %1725 = vmatprep.subr.mxu0 0.0
        %1726 = vmatpush1.msra.mxu0 0.0
        %1727 = vmatprep.subr.mxu0 0.0
        %1728 = vmatpush1.msra.mxu0 0.0
        %1729 = vmatprep.subr.mxu0 0.0
        %1730 = vmatpush1.msra.mxu0 0.0
        %1731 = vmatprep.subr.mxu0 0.0
        %1732 = vmatpush1.msra.mxu0 0.0
        %1733 = vmatprep.subr.mxu0 0.0
        %1734 = vmatpush1.msra.mxu0 0.0
        %1735 = vmatprep.subr.mxu0 0.0
        %1736 = vmatpush1.msra.mxu0 0.0
        %1737 = vmatprep.subr.mxu0 0.0
        %1738 = vmatpush1.msra.mxu0 0.0
        %1739 = vmatprep.subr.mxu0 0.0
        %1740 = vmatpush1.msra.mxu0 0.0
        %1741 = vmatprep.subr.mxu0 0.0
        %1742 = vmatpush1.msra.mxu0 0.0
        %1743 = vmatprep.subr.mxu0 0.0
        %1744 = vmatpush1.msra.mxu0 0.0
        %1745 = vmatprep.subr.mxu0 0.0
        %1746 = vmatpush1.msra.mxu0 0.0
        %1747 = vmatprep.subr.mxu0 0.0
        %1748 = vmatpush1.msra.mxu0 0.0
        %1749 = vmatprep.subr.mxu0 0.0
        %1750 = vmatpush1.msra.mxu0 0.0
        %1751 = vmatprep.subr.mxu0 0.0
        %1752 = vmatpush1.msra.mxu0 0.0
        %1753 = vmatprep.subr.mxu0 0.0
        %1754 = vmatpush1.msra.mxu0 0.0
        %1755 = vmatprep.subr.mxu0 0.0
        %1756 = vmatpush1.msra.mxu0 0.0
        %1757 = vmatprep.subr.mxu0 0.0
        %1758 = vmatpush1.msra.mxu0 0.0
        %1759 = vmatprep.subr.mxu0 0.0
        %1760 = vmatpush1.msra.mxu0 0.0
        %1761 = vmatprep.mubr.f32.mxu0 0.0
        %1762 = vmatmul.mubr.f32.gmra.mrb[0].mxu0 %v1695
        %v1763 = vpop.f32.mrb[0].mxu0
        %v1764 = vadd.f32 0.0, %v1763
        %v1765 = vpop.f32.mrb[0].mxu0
        %1766 = vdwg.mxu0
        %v1767 = vadd.f32 %v1684, %v1764
        %v1768 = vxor.u32 %v1767, 2147483648
        %v1769 = vmul.f32 %v1768, 1.442695
        %v1770 = vpow.pop %v1769
        %v1771 = vadd.f32 %v1770, 1.0
        %v1772 = vrcp.pop %v1771
        %v1773 = vmul.f32 1.0, %v1772
        %v1774 = vadd.f32 %v1764, %v352
        %v1777 = vunpack.c.l.s4 1983009808
        %v1778 = vunpack.c.0.s8 %v1777
        %v1779 = vlaneseq
        %v1780 = vshrl.u32 %v1779, 7
        %v1781 = vsub.s32 %v1778, %v1780
        %v1782 = vrot.slane %v1774, %v1781
        %1783 = vrot.lane.b32.xlu0 %v1782, 112
        %v1784 = vpop.permute.xlu0 %1783
        %v1786 = vmul.f32 %v1773, %v1784
        %1788 = vrot.lane.b32.xlu0 %v1786, 16
        %v1789 = vpop.permute.xlu0 %1788
        %v1791 = vadd.f32 %v1684, %v1789
        %v1792 = vtanh.pop %v1791
        %v1793 = vsub.f32 1.0, %v1773
        %1795 = vrot.lane.b32.xlu0 %v1792, 120
        %v1796 = vpop.permute.xlu0 %1795
        %v1798 = vmul.f32 %v1793, %v1796
        %v1799 = vmul.f32 %v1773, %v1658
        %v1800 = vadd.f32 %v1798, %v1799
        %v1801 = vpack.c.bf16 %v1800, %v1800
        %v1804 = vunpack.c.l.s4 1966171168
        %v1805 = vunpack.c.0.s8 %v1804
        %v1806 = vlaneseq
        %v1807 = vshrl.u32 %v1806, 7
        %v1808 = vsub.s32 %v1805, %v1807
        %v1809 = vrot.slane %v1801, %v1808
        %v1811 = vunpack.c.l.s4 1966171168
        %v1812 = vunpack.c.0.s8 %v1811
        %v1813 = vlaneseq
        %v1814 = vshrl.u32 %v1813, 7
        %v1815 = vsub.s32 %v1812, %v1814
        %v1816 = vrot.slane %v1809, %v1815
        %1817 = vrot.lane.b32.xlu0 %v1816, 120
        %v1818 = vpop.permute.xlu0 %1817
        %s1820 = scalar_lea.vmem %s256, %s1681 [#allocation8]
        %1821 = vst.msk [vmem:[%s1820] sm:$0x1] %vm401, %v1818
        %s1822 = smul.u32 %s261, 11
        %s1823 = sadd.s32 %s259, %s1822
        %s1824 = scalar_lea.vmem %s208, %s1823 [#allocation2]
        %v1825 = vld [vmem:[%s1824] sm:$0x1]
        %v1826 = vunpack.c.l.bf16 %v1825
        %v1829 = vunpack.c.l.s4 1983009808
        %v1830 = vunpack.c.0.s8 %v1829
        %v1831 = vlaneseq
        %v1832 = vshrl.u32 %v1831, 7
        %v1833 = vsub.s32 %v1830, %v1832
        %v1834 = vrot.slane %v1800, %v1833
        %1835 = vrot.lane.b32.xlu0 %v1834, 120
        %v1836 = vpop.permute.xlu0 %1835
        %v1837 = vsel %vm265, %v1836, 0
        %1839 = vmatprep.subr.mxu0 0.0
        %1840 = vmatpush1.msra.mxu0 %v257
        %1841 = vmatprep.subr.mxu0 0.0
        %1842 = vmatpush1.msra.mxu0 0.0
        %1843 = vmatprep.subr.mxu0 0.0
        %1844 = vmatpush1.msra.mxu0 0.0
        %1845 = vmatprep.subr.mxu0 0.0
        %1846 = vmatpush1.msra.mxu0 0.0
        %1847 = vmatprep.subr.mxu0 0.0
        %1848 = vmatpush1.msra.mxu0 0.0
        %1849 = vmatprep.subr.mxu0 0.0
        %1850 = vmatpush1.msra.mxu0 0.0
        %1851 = vmatprep.subr.mxu0 0.0
        %1852 = vmatpush1.msra.mxu0 0.0
        %1853 = vmatprep.subr.mxu0 0.0
        %1854 = vmatpush1.msra.mxu0 0.0
        %1855 = vmatprep.subr.mxu0 0.0
        %1856 = vmatpush1.msra.mxu0 0.0
        %1857 = vmatprep.subr.mxu0 0.0
        %1858 = vmatpush1.msra.mxu0 0.0
        %1859 = vmatprep.subr.mxu0 0.0
        %1860 = vmatpush1.msra.mxu0 0.0
        %1861 = vmatprep.subr.mxu0 0.0
        %1862 = vmatpush1.msra.mxu0 0.0
        %1863 = vmatprep.subr.mxu0 0.0
        %1864 = vmatpush1.msra.mxu0 0.0
        %1865 = vmatprep.subr.mxu0 0.0
        %1866 = vmatpush1.msra.mxu0 0.0
        %1867 = vmatprep.subr.mxu0 0.0
        %1868 = vmatpush1.msra.mxu0 0.0
        %1869 = vmatprep.subr.mxu0 0.0
        %1870 = vmatpush1.msra.mxu0 0.0
        %1871 = vmatprep.subr.mxu0 0.0
        %1872 = vmatpush1.msra.mxu0 0.0
        %1873 = vmatprep.subr.mxu0 0.0
        %1874 = vmatpush1.msra.mxu0 0.0
        %1875 = vmatprep.subr.mxu0 0.0
        %1876 = vmatpush1.msra.mxu0 0.0
        %1877 = vmatprep.subr.mxu0 0.0
        %1878 = vmatpush1.msra.mxu0 0.0
        %1879 = vmatprep.subr.mxu0 0.0
        %1880 = vmatpush1.msra.mxu0 0.0
        %1881 = vmatprep.subr.mxu0 0.0
        %1882 = vmatpush1.msra.mxu0 0.0
        %1883 = vmatprep.subr.mxu0 0.0
        %1884 = vmatpush1.msra.mxu0 0.0
        %1885 = vmatprep.subr.mxu0 0.0
        %1886 = vmatpush1.msra.mxu0 0.0
        %1887 = vmatprep.subr.mxu0 0.0
        %1888 = vmatpush1.msra.mxu0 0.0
        %1889 = vmatprep.subr.mxu0 0.0
        %1890 = vmatpush1.msra.mxu0 0.0
        %1891 = vmatprep.subr.mxu0 0.0
        %1892 = vmatpush1.msra.mxu0 0.0
        %1893 = vmatprep.subr.mxu0 0.0
        %1894 = vmatpush1.msra.mxu0 0.0
        %1895 = vmatprep.subr.mxu0 0.0
        %1896 = vmatpush1.msra.mxu0 0.0
        %1897 = vmatprep.subr.mxu0 0.0
        %1898 = vmatpush1.msra.mxu0 0.0
        %1899 = vmatprep.subr.mxu0 0.0
        %1900 = vmatpush1.msra.mxu0 0.0
        %1901 = vmatprep.subr.mxu0 0.0
        %1902 = vmatpush1.msra.mxu0 0.0
        %1903 = vmatprep.mubr.f32.mxu0 0.0
        %1904 = vmatmul.mubr.f32.gmra.mrb[0].mxu0 %v1837
        %v1905 = vpop.f32.mrb[0].mxu0
        %v1906 = vadd.f32 0.0, %v1905
        %v1907 = vpop.f32.mrb[0].mxu0
        %1908 = vdwg.mxu0
        %v1909 = vadd.f32 %v1826, %v1906
        %v1910 = vxor.u32 %v1909, 2147483648
        %v1911 = vmul.f32 %v1910, 1.442695
        %v1912 = vpow.pop %v1911
        %v1913 = vadd.f32 %v1912, 1.0
        %v1914 = vrcp.pop %v1913
        %v1915 = vmul.f32 1.0, %v1914
        %v1916 = vadd.f32 %v1906, %v352
        %v1919 = vunpack.c.l.s4 1983009808
        %v1920 = vunpack.c.0.s8 %v1919
        %v1921 = vlaneseq
        %v1922 = vshrl.u32 %v1921, 7
        %v1923 = vsub.s32 %v1920, %v1922
        %v1924 = vrot.slane %v1916, %v1923
        %1925 = vrot.lane.b32.xlu0 %v1924, 112
        %v1926 = vpop.permute.xlu0 %1925
        %v1928 = vmul.f32 %v1915, %v1926
        %1930 = vrot.lane.b32.xlu0 %v1928, 16
        %v1931 = vpop.permute.xlu0 %1930
        %v1933 = vadd.f32 %v1826, %v1931
        %v1934 = vtanh.pop %v1933
        %v1935 = vsub.f32 1.0, %v1915
        %1937 = vrot.lane.b32.xlu0 %v1934, 120
        %v1938 = vpop.permute.xlu0 %1937
        %v1940 = vmul.f32 %v1935, %v1938
        %v1941 = vmul.f32 %v1915, %v1800
        %v1942 = vadd.f32 %v1940, %v1941
        %v1943 = vpack.c.bf16 %v1942, %v1942
        %v1946 = vunpack.c.l.s4 1966171168
        %v1947 = vunpack.c.0.s8 %v1946
        %v1948 = vlaneseq
        %v1949 = vshrl.u32 %v1948, 7
        %v1950 = vsub.s32 %v1947, %v1949
        %v1951 = vrot.slane %v1943, %v1950
        %v1953 = vunpack.c.l.s4 1966171168
        %v1954 = vunpack.c.0.s8 %v1953
        %v1955 = vlaneseq
        %v1956 = vshrl.u32 %v1955, 7
        %v1957 = vsub.s32 %v1954, %v1956
        %v1958 = vrot.slane %v1951, %v1957
        %1959 = vrot.lane.b32.xlu0 %v1958, 120
        %v1960 = vpop.permute.xlu0 %1959
        %s1962 = scalar_lea.vmem %s256, %s1823 [#allocation8]
        %1963 = vst.msk [vmem:[%s1962] sm:$0x1] %vm401, %v1960
        %s1964 = smul.u32 %s261, 12
        %s1965 = sadd.s32 %s259, %s1964
        %s1966 = scalar_lea.vmem %s208, %s1965 [#allocation2]
        %v1967 = vld [vmem:[%s1966] sm:$0x1]
        %v1968 = vunpack.c.l.bf16 %v1967
        %v1971 = vunpack.c.l.s4 1983009808
        %v1972 = vunpack.c.0.s8 %v1971
        %v1973 = vlaneseq
        %v1974 = vshrl.u32 %v1973, 7
        %v1975 = vsub.s32 %v1972, %v1974
        %v1976 = vrot.slane %v1942, %v1975
        %1977 = vrot.lane.b32.xlu0 %v1976, 120
        %v1978 = vpop.permute.xlu0 %1977
        %v1979 = vsel %vm265, %v1978, 0
        %1981 = vmatprep.subr.mxu0 0.0
        %1982 = vmatpush1.msra.mxu0 %v257
        %1983 = vmatprep.subr.mxu0 0.0
        %1984 = vmatpush1.msra.mxu0 0.0
        %1985 = vmatprep.subr.mxu0 0.0
        %1986 = vmatpush1.msra.mxu0 0.0
        %1987 = vmatprep.subr.mxu0 0.0
        %1988 = vmatpush1.msra.mxu0 0.0
        %1989 = vmatprep.subr.mxu0 0.0
        %1990 = vmatpush1.msra.mxu0 0.0
        %1991 = vmatprep.subr.mxu0 0.0
        %1992 = vmatpush1.msra.mxu0 0.0
        %1993 = vmatprep.subr.mxu0 0.0
        %1994 = vmatpush1.msra.mxu0 0.0
        %1995 = vmatprep.subr.mxu0 0.0
        %1996 = vmatpush1.msra.mxu0 0.0
        %1997 = vmatprep.subr.mxu0 0.0
        %1998 = vmatpush1.msra.mxu0 0.0
        %1999 = vmatprep.subr.mxu0 0.0
        %2000 = vmatpush1.msra.mxu0 0.0
        %2001 = vmatprep.subr.mxu0 0.0
        %2002 = vmatpush1.msra.mxu0 0.0
        %2003 = vmatprep.subr.mxu0 0.0
        %2004 = vmatpush1.msra.mxu0 0.0
        %2005 = vmatprep.subr.mxu0 0.0
        %2006 = vmatpush1.msra.mxu0 0.0
        %2007 = vmatprep.subr.mxu0 0.0
        %2008 = vmatpush1.msra.mxu0 0.0
        %2009 = vmatprep.subr.mxu0 0.0
        %2010 = vmatpush1.msra.mxu0 0.0
        %2011 = vmatprep.subr.mxu0 0.0
        %2012 = vmatpush1.msra.mxu0 0.0
        %2013 = vmatprep.subr.mxu0 0.0
        %2014 = vmatpush1.msra.mxu0 0.0
        %2015 = vmatprep.subr.mxu0 0.0
        %2016 = vmatpush1.msra.mxu0 0.0
        %2017 = vmatprep.subr.mxu0 0.0
        %2018 = vmatpush1.msra.mxu0 0.0
        %2019 = vmatprep.subr.mxu0 0.0
        %2020 = vmatpush1.msra.mxu0 0.0
        %2021 = vmatprep.subr.mxu0 0.0
        %2022 = vmatpush1.msra.mxu0 0.0
        %2023 = vmatprep.subr.mxu0 0.0
        %2024 = vmatpush1.msra.mxu0 0.0
        %2025 = vmatprep.subr.mxu0 0.0
        %2026 = vmatpush1.msra.mxu0 0.0
        %2027 = vmatprep.subr.mxu0 0.0
        %2028 = vmatpush1.msra.mxu0 0.0
        %2029 = vmatprep.subr.mxu0 0.0
        %2030 = vmatpush1.msra.mxu0 0.0
        %2031 = vmatprep.subr.mxu0 0.0
        %2032 = vmatpush1.msra.mxu0 0.0
        %2033 = vmatprep.subr.mxu0 0.0
        %2034 = vmatpush1.msra.mxu0 0.0
        %2035 = vmatprep.subr.mxu0 0.0
        %2036 = vmatpush1.msra.mxu0 0.0
        %2037 = vmatprep.subr.mxu0 0.0
        %2038 = vmatpush1.msra.mxu0 0.0
        %2039 = vmatprep.subr.mxu0 0.0
        %2040 = vmatpush1.msra.mxu0 0.0
        %2041 = vmatprep.subr.mxu0 0.0
        %2042 = vmatpush1.msra.mxu0 0.0
        %2043 = vmatprep.subr.mxu0 0.0
        %2044 = vmatpush1.msra.mxu0 0.0
        %2045 = vmatprep.mubr.f32.mxu0 0.0
        %2046 = vmatmul.mubr.f32.gmra.mrb[0].mxu0 %v1979
        %v2047 = vpop.f32.mrb[0].mxu0
        %v2048 = vadd.f32 0.0, %v2047
        %v2049 = vpop.f32.mrb[0].mxu0
        %2050 = vdwg.mxu0
        %v2051 = vadd.f32 %v1968, %v2048
        %v2052 = vxor.u32 %v2051, 2147483648
        %v2053 = vmul.f32 %v2052, 1.442695
        %v2054 = vpow.pop %v2053
        %v2055 = vadd.f32 %v2054, 1.0
        %v2056 = vrcp.pop %v2055
        %v2057 = vmul.f32 1.0, %v2056
        %v2058 = vadd.f32 %v2048, %v352
        %v2061 = vunpack.c.l.s4 1983009808
        %v2062 = vunpack.c.0.s8 %v2061
        %v2063 = vlaneseq
        %v2064 = vshrl.u32 %v2063, 7
        %v2065 = vsub.s32 %v2062, %v2064
        %v2066 = vrot.slane %v2058, %v2065
        %2067 = vrot.lane.b32.xlu0 %v2066, 112
        %v2068 = vpop.permute.xlu0 %2067
        %v2070 = vmul.f32 %v2057, %v2068
        %2072 = vrot.lane.b32.xlu0 %v2070, 16
        %v2073 = vpop.permute.xlu0 %2072
        %v2075 = vadd.f32 %v1968, %v2073
        %v2076 = vtanh.pop %v2075
        %v2077 = vsub.f32 1.0, %v2057
        %2079 = vrot.lane.b32.xlu0 %v2076, 120
        %v2080 = vpop.permute.xlu0 %2079
        %v2082 = vmul.f32 %v2077, %v2080
        %v2083 = vmul.f32 %v2057, %v1942
        %v2084 = vadd.f32 %v2082, %v2083
        %v2085 = vpack.c.bf16 %v2084, %v2084
        %v2088 = vunpack.c.l.s4 1966171168
        %v2089 = vunpack.c.0.s8 %v2088
        %v2090 = vlaneseq
        %v2091 = vshrl.u32 %v2090, 7
        %v2092 = vsub.s32 %v2089, %v2091
        %v2093 = vrot.slane %v2085, %v2092
        %v2095 = vunpack.c.l.s4 1966171168
        %v2096 = vunpack.c.0.s8 %v2095
        %v2097 = vlaneseq
        %v2098 = vshrl.u32 %v2097, 7
        %v2099 = vsub.s32 %v2096, %v2098
        %v2100 = vrot.slane %v2093, %v2099
        %2101 = vrot.lane.b32.xlu0 %v2100, 120
        %v2102 = vpop.permute.xlu0 %2101
        %s2104 = scalar_lea.vmem %s256, %s1965 [#allocation8]
        %2105 = vst.msk [vmem:[%s2104] sm:$0x1] %vm401, %v2102
        %s2106 = smul.u32 %s261, 13
        %s2107 = sadd.s32 %s259, %s2106
        %s2108 = scalar_lea.vmem %s208, %s2107 [#allocation2]
        %v2109 = vld [vmem:[%s2108] sm:$0x1]
        %v2110 = vunpack.c.l.bf16 %v2109
        %v2113 = vunpack.c.l.s4 1983009808
        %v2114 = vunpack.c.0.s8 %v2113
        %v2115 = vlaneseq
        %v2116 = vshrl.u32 %v2115, 7
        %v2117 = vsub.s32 %v2114, %v2116
        %v2118 = vrot.slane %v2084, %v2117
        %2119 = vrot.lane.b32.xlu0 %v2118, 120
        %v2120 = vpop.permute.xlu0 %2119
        %v2121 = vsel %vm265, %v2120, 0
        %2123 = vmatprep.subr.mxu0 0.0
        %2124 = vmatpush1.msra.mxu0 %v257
        %2125 = vmatprep.subr.mxu0 0.0
        %2126 = vmatpush1.msra.mxu0 0.0
        %2127 = vmatprep.subr.mxu0 0.0
        %2128 = vmatpush1.msra.mxu0 0.0
        %2129 = vmatprep.subr.mxu0 0.0
        %2130 = vmatpush1.msra.mxu0 0.0
        %2131 = vmatprep.subr.mxu0 0.0
        %2132 = vmatpush1.msra.mxu0 0.0
        %2133 = vmatprep.subr.mxu0 0.0
        %2134 = vmatpush1.msra.mxu0 0.0
        %2135 = vmatprep.subr.mxu0 0.0
        %2136 = vmatpush1.msra.mxu0 0.0
        %2137 = vmatprep.subr.mxu0 0.0
        %2138 = vmatpush1.msra.mxu0 0.0
        %2139 = vmatprep.subr.mxu0 0.0
        %2140 = vmatpush1.msra.mxu0 0.0
        %2141 = vmatprep.subr.mxu0 0.0
        %2142 = vmatpush1.msra.mxu0 0.0
        %2143 = vmatprep.subr.mxu0 0.0
        %2144 = vmatpush1.msra.mxu0 0.0
        %2145 = vmatprep.subr.mxu0 0.0
        %2146 = vmatpush1.msra.mxu0 0.0
        %2147 = vmatprep.subr.mxu0 0.0
        %2148 = vmatpush1.msra.mxu0 0.0
        %2149 = vmatprep.subr.mxu0 0.0
        %2150 = vmatpush1.msra.mxu0 0.0
        %2151 = vmatprep.subr.mxu0 0.0
        %2152 = vmatpush1.msra.mxu0 0.0
        %2153 = vmatprep.subr.mxu0 0.0
        %2154 = vmatpush1.msra.mxu0 0.0
        %2155 = vmatprep.subr.mxu0 0.0
        %2156 = vmatpush1.msra.mxu0 0.0
        %2157 = vmatprep.subr.mxu0 0.0
        %2158 = vmatpush1.msra.mxu0 0.0
        %2159 = vmatprep.subr.mxu0 0.0
        %2160 = vmatpush1.msra.mxu0 0.0
        %2161 = vmatprep.subr.mxu0 0.0
        %2162 = vmatpush1.msra.mxu0 0.0
        %2163 = vmatprep.subr.mxu0 0.0
        %2164 = vmatpush1.msra.mxu0 0.0
        %2165 = vmatprep.subr.mxu0 0.0
        %2166 = vmatpush1.msra.mxu0 0.0
        %2167 = vmatprep.subr.mxu0 0.0
        %2168 = vmatpush1.msra.mxu0 0.0
        %2169 = vmatprep.subr.mxu0 0.0
        %2170 = vmatpush1.msra.mxu0 0.0
        %2171 = vmatprep.subr.mxu0 0.0
        %2172 = vmatpush1.msra.mxu0 0.0
        %2173 = vmatprep.subr.mxu0 0.0
        %2174 = vmatpush1.msra.mxu0 0.0
        %2175 = vmatprep.subr.mxu0 0.0
        %2176 = vmatpush1.msra.mxu0 0.0
        %2177 = vmatprep.subr.mxu0 0.0
        %2178 = vmatpush1.msra.mxu0 0.0
        %2179 = vmatprep.subr.mxu0 0.0
        %2180 = vmatpush1.msra.mxu0 0.0
        %2181 = vmatprep.subr.mxu0 0.0
        %2182 = vmatpush1.msra.mxu0 0.0
        %2183 = vmatprep.subr.mxu0 0.0
        %2184 = vmatpush1.msra.mxu0 0.0
        %2185 = vmatprep.subr.mxu0 0.0
        %2186 = vmatpush1.msra.mxu0 0.0
        %2187 = vmatprep.mubr.f32.mxu0 0.0
        %2188 = vmatmul.mubr.f32.gmra.mrb[0].mxu0 %v2121
        %v2189 = vpop.f32.mrb[0].mxu0
        %v2190 = vadd.f32 0.0, %v2189
        %v2191 = vpop.f32.mrb[0].mxu0
        %2192 = vdwg.mxu0
        %v2193 = vadd.f32 %v2110, %v2190
        %v2194 = vxor.u32 %v2193, 2147483648
        %v2195 = vmul.f32 %v2194, 1.442695
        %v2196 = vpow.pop %v2195
        %v2197 = vadd.f32 %v2196, 1.0
        %v2198 = vrcp.pop %v2197
        %v2199 = vmul.f32 1.0, %v2198
        %v2200 = vadd.f32 %v2190, %v352
        %v2203 = vunpack.c.l.s4 1983009808
        %v2204 = vunpack.c.0.s8 %v2203
        %v2205 = vlaneseq
        %v2206 = vshrl.u32 %v2205, 7
        %v2207 = vsub.s32 %v2204, %v2206
        %v2208 = vrot.slane %v2200, %v2207
        %2209 = vrot.lane.b32.xlu0 %v2208, 112
        %v2210 = vpop.permute.xlu0 %2209
        %v2212 = vmul.f32 %v2199, %v2210
        %2214 = vrot.lane.b32.xlu0 %v2212, 16
        %v2215 = vpop.permute.xlu0 %2214
        %v2217 = vadd.f32 %v2110, %v2215
        %v2218 = vtanh.pop %v2217
        %v2219 = vsub.f32 1.0, %v2199
        %2221 = vrot.lane.b32.xlu0 %v2218, 120
        %v2222 = vpop.permute.xlu0 %2221
        %v2224 = vmul.f32 %v2219, %v2222
        %v2225 = vmul.f32 %v2199, %v2084
        %v2226 = vadd.f32 %v2224, %v2225
        %v2227 = vpack.c.bf16 %v2226, %v2226
        %v2230 = vunpack.c.l.s4 1966171168
        %v2231 = vunpack.c.0.s8 %v2230
        %v2232 = vlaneseq
        %v2233 = vshrl.u32 %v2232, 7
        %v2234 = vsub.s32 %v2231, %v2233
        %v2235 = vrot.slane %v2227, %v2234
        %v2237 = vunpack.c.l.s4 1966171168
        %v2238 = vunpack.c.0.s8 %v2237
        %v2239 = vlaneseq
        %v2240 = vshrl.u32 %v2239, 7
        %v2241 = vsub.s32 %v2238, %v2240
        %v2242 = vrot.slane %v2235, %v2241
        %2243 = vrot.lane.b32.xlu0 %v2242, 120
        %v2244 = vpop.permute.xlu0 %2243
        %s2246 = scalar_lea.vmem %s256, %s2107 [#allocation8]
        %2247 = vst.msk [vmem:[%s2246] sm:$0x1] %vm401, %v2244
        %s2248 = smul.u32 %s261, 14
        %s2249 = sadd.s32 %s259, %s2248
        %s2250 = scalar_lea.vmem %s208, %s2249 [#allocation2]
        %v2251 = vld [vmem:[%s2250] sm:$0x1]
        %v2252 = vunpack.c.l.bf16 %v2251
        %v2255 = vunpack.c.l.s4 1983009808
        %v2256 = vunpack.c.0.s8 %v2255
        %v2257 = vlaneseq
        %v2258 = vshrl.u32 %v2257, 7
        %v2259 = vsub.s32 %v2256, %v2258
        %v2260 = vrot.slane %v2226, %v2259
        %2261 = vrot.lane.b32.xlu0 %v2260, 120
        %v2262 = vpop.permute.xlu0 %2261
        %v2263 = vsel %vm265, %v2262, 0
        %2265 = vmatprep.subr.mxu0 0.0
        %2266 = vmatpush1.msra.mxu0 %v257
        %2267 = vmatprep.subr.mxu0 0.0
        %2268 = vmatpush1.msra.mxu0 0.0
        %2269 = vmatprep.subr.mxu0 0.0
        %2270 = vmatpush1.msra.mxu0 0.0
        %2271 = vmatprep.subr.mxu0 0.0
        %2272 = vmatpush1.msra.mxu0 0.0
        %2273 = vmatprep.subr.mxu0 0.0
        %2274 = vmatpush1.msra.mxu0 0.0
        %2275 = vmatprep.subr.mxu0 0.0
        %2276 = vmatpush1.msra.mxu0 0.0
        %2277 = vmatprep.subr.mxu0 0.0
        %2278 = vmatpush1.msra.mxu0 0.0
        %2279 = vmatprep.subr.mxu0 0.0
        %2280 = vmatpush1.msra.mxu0 0.0
        %2281 = vmatprep.subr.mxu0 0.0
        %2282 = vmatpush1.msra.mxu0 0.0
        %2283 = vmatprep.subr.mxu0 0.0
        %2284 = vmatpush1.msra.mxu0 0.0
        %2285 = vmatprep.subr.mxu0 0.0
        %2286 = vmatpush1.msra.mxu0 0.0
        %2287 = vmatprep.subr.mxu0 0.0
        %2288 = vmatpush1.msra.mxu0 0.0
        %2289 = vmatprep.subr.mxu0 0.0
        %2290 = vmatpush1.msra.mxu0 0.0
        %2291 = vmatprep.subr.mxu0 0.0
        %2292 = vmatpush1.msra.mxu0 0.0
        %2293 = vmatprep.subr.mxu0 0.0
        %2294 = vmatpush1.msra.mxu0 0.0
        %2295 = vmatprep.subr.mxu0 0.0
        %2296 = vmatpush1.msra.mxu0 0.0
        %2297 = vmatprep.subr.mxu0 0.0
        %2298 = vmatpush1.msra.mxu0 0.0
        %2299 = vmatprep.subr.mxu0 0.0
        %2300 = vmatpush1.msra.mxu0 0.0
        %2301 = vmatprep.subr.mxu0 0.0
        %2302 = vmatpush1.msra.mxu0 0.0
        %2303 = vmatprep.subr.mxu0 0.0
        %2304 = vmatpush1.msra.mxu0 0.0
        %2305 = vmatprep.subr.mxu0 0.0
        %2306 = vmatpush1.msra.mxu0 0.0
        %2307 = vmatprep.subr.mxu0 0.0
        %2308 = vmatpush1.msra.mxu0 0.0
        %2309 = vmatprep.subr.mxu0 0.0
        %2310 = vmatpush1.msra.mxu0 0.0
        %2311 = vmatprep.subr.mxu0 0.0
        %2312 = vmatpush1.msra.mxu0 0.0
        %2313 = vmatprep.subr.mxu0 0.0
        %2314 = vmatpush1.msra.mxu0 0.0
        %2315 = vmatprep.subr.mxu0 0.0
        %2316 = vmatpush1.msra.mxu0 0.0
        %2317 = vmatprep.subr.mxu0 0.0
        %2318 = vmatpush1.msra.mxu0 0.0
        %2319 = vmatprep.subr.mxu0 0.0
        %2320 = vmatpush1.msra.mxu0 0.0
        %2321 = vmatprep.subr.mxu0 0.0
        %2322 = vmatpush1.msra.mxu0 0.0
        %2323 = vmatprep.subr.mxu0 0.0
        %2324 = vmatpush1.msra.mxu0 0.0
        %2325 = vmatprep.subr.mxu0 0.0
        %2326 = vmatpush1.msra.mxu0 0.0
        %2327 = vmatprep.subr.mxu0 0.0
        %2328 = vmatpush1.msra.mxu0 0.0
        %2329 = vmatprep.mubr.f32.mxu0 0.0
        %2330 = vmatmul.mubr.f32.gmra.mrb[0].mxu0 %v2263
        %v2331 = vpop.f32.mrb[0].mxu0
        %v2332 = vadd.f32 0.0, %v2331
        %v2333 = vpop.f32.mrb[0].mxu0
        %2334 = vdwg.mxu0
        %v2335 = vadd.f32 %v2252, %v2332
        %v2336 = vxor.u32 %v2335, 2147483648
        %v2337 = vmul.f32 %v2336, 1.442695
        %v2338 = vpow.pop %v2337
        %v2339 = vadd.f32 %v2338, 1.0
        %v2340 = vrcp.pop %v2339
        %v2341 = vmul.f32 1.0, %v2340
        %v2342 = vadd.f32 %v2332, %v352
        %v2345 = vunpack.c.l.s4 1983009808
        %v2346 = vunpack.c.0.s8 %v2345
        %v2347 = vlaneseq
        %v2348 = vshrl.u32 %v2347, 7
        %v2349 = vsub.s32 %v2346, %v2348
        %v2350 = vrot.slane %v2342, %v2349
        %2351 = vrot.lane.b32.xlu0 %v2350, 112
        %v2352 = vpop.permute.xlu0 %2351
        %v2354 = vmul.f32 %v2341, %v2352
        %2356 = vrot.lane.b32.xlu0 %v2354, 16
        %v2357 = vpop.permute.xlu0 %2356
        %v2359 = vadd.f32 %v2252, %v2357
        %v2360 = vtanh.pop %v2359
        %v2361 = vsub.f32 1.0, %v2341
        %2363 = vrot.lane.b32.xlu0 %v2360, 120
        %v2364 = vpop.permute.xlu0 %2363
        %v2366 = vmul.f32 %v2361, %v2364
        %v2367 = vmul.f32 %v2341, %v2226
        %v2368 = vadd.f32 %v2366, %v2367
        %v2369 = vpack.c.bf16 %v2368, %v2368
        %v2372 = vunpack.c.l.s4 1966171168
        %v2373 = vunpack.c.0.s8 %v2372
        %v2374 = vlaneseq
        %v2375 = vshrl.u32 %v2374, 7
        %v2376 = vsub.s32 %v2373, %v2375
        %v2377 = vrot.slane %v2369, %v2376
        %v2379 = vunpack.c.l.s4 1966171168
        %v2380 = vunpack.c.0.s8 %v2379
        %v2381 = vlaneseq
        %v2382 = vshrl.u32 %v2381, 7
        %v2383 = vsub.s32 %v2380, %v2382
        %v2384 = vrot.slane %v2377, %v2383
        %2385 = vrot.lane.b32.xlu0 %v2384, 120
        %v2386 = vpop.permute.xlu0 %2385
        %s2388 = scalar_lea.vmem %s256, %s2249 [#allocation8]
        %2389 = vst.msk [vmem:[%s2388] sm:$0x1] %vm401, %v2386
        %s2390 = smul.u32 %s261, 15
        %s2391 = sadd.s32 %s259, %s2390
        %s2392 = scalar_lea.vmem %s208, %s2391 [#allocation2]
        %v2393 = vld [vmem:[%s2392] sm:$0x1]
        %v2394 = vunpack.c.l.bf16 %v2393
        %v2397 = vunpack.c.l.s4 1983009808
        %v2398 = vunpack.c.0.s8 %v2397
        %v2399 = vlaneseq
        %v2400 = vshrl.u32 %v2399, 7
        %v2401 = vsub.s32 %v2398, %v2400
        %v2402 = vrot.slane %v2368, %v2401
        %2403 = vrot.lane.b32.xlu0 %v2402, 120
        %v2404 = vpop.permute.xlu0 %2403
        %v2405 = vsel %vm265, %v2404, 0
        %2407 = vmatprep.subr.mxu0 0.0
        %2408 = vmatpush1.msra.mxu0 %v257
        %2409 = vmatprep.subr.mxu0 0.0
        %2410 = vmatpush1.msra.mxu0 0.0
        %2411 = vmatprep.subr.mxu0 0.0
        %2412 = vmatpush1.msra.mxu0 0.0
        %2413 = vmatprep.subr.mxu0 0.0
        %2414 = vmatpush1.msra.mxu0 0.0
        %2415 = vmatprep.subr.mxu0 0.0
        %2416 = vmatpush1.msra.mxu0 0.0
        %2417 = vmatprep.subr.mxu0 0.0
        %2418 = vmatpush1.msra.mxu0 0.0
        %2419 = vmatprep.subr.mxu0 0.0
        %2420 = vmatpush1.msra.mxu0 0.0
        %2421 = vmatprep.subr.mxu0 0.0
        %2422 = vmatpush1.msra.mxu0 0.0
        %2423 = vmatprep.subr.mxu0 0.0
        %2424 = vmatpush1.msra.mxu0 0.0
        %2425 = vmatprep.subr.mxu0 0.0
        %2426 = vmatpush1.msra.mxu0 0.0
        %2427 = vmatprep.subr.mxu0 0.0
        %2428 = vmatpush1.msra.mxu0 0.0
        %2429 = vmatprep.subr.mxu0 0.0
        %2430 = vmatpush1.msra.mxu0 0.0
        %2431 = vmatprep.subr.mxu0 0.0
        %2432 = vmatpush1.msra.mxu0 0.0
        %2433 = vmatprep.subr.mxu0 0.0
        %2434 = vmatpush1.msra.mxu0 0.0
        %2435 = vmatprep.subr.mxu0 0.0
        %2436 = vmatpush1.msra.mxu0 0.0
        %2437 = vmatprep.subr.mxu0 0.0
        %2438 = vmatpush1.msra.mxu0 0.0
        %2439 = vmatprep.subr.mxu0 0.0
        %2440 = vmatpush1.msra.mxu0 0.0
        %2441 = vmatprep.subr.mxu0 0.0
        %2442 = vmatpush1.msra.mxu0 0.0
        %2443 = vmatprep.subr.mxu0 0.0
        %2444 = vmatpush1.msra.mxu0 0.0
        %2445 = vmatprep.subr.mxu0 0.0
        %2446 = vmatpush1.msra.mxu0 0.0
        %2447 = vmatprep.subr.mxu0 0.0
        %2448 = vmatpush1.msra.mxu0 0.0
        %2449 = vmatprep.subr.mxu0 0.0
        %2450 = vmatpush1.msra.mxu0 0.0
        %2451 = vmatprep.subr.mxu0 0.0
        %2452 = vmatpush1.msra.mxu0 0.0
        %2453 = vmatprep.subr.mxu0 0.0
        %2454 = vmatpush1.msra.mxu0 0.0
        %2455 = vmatprep.subr.mxu0 0.0
        %2456 = vmatpush1.msra.mxu0 0.0
        %2457 = vmatprep.subr.mxu0 0.0
        %2458 = vmatpush1.msra.mxu0 0.0
        %2459 = vmatprep.subr.mxu0 0.0
        %2460 = vmatpush1.msra.mxu0 0.0
        %2461 = vmatprep.subr.mxu0 0.0
        %2462 = vmatpush1.msra.mxu0 0.0
        %2463 = vmatprep.subr.mxu0 0.0
        %2464 = vmatpush1.msra.mxu0 0.0
        %2465 = vmatprep.subr.mxu0 0.0
        %2466 = vmatpush1.msra.mxu0 0.0
        %2467 = vmatprep.subr.mxu0 0.0
        %2468 = vmatpush1.msra.mxu0 0.0
        %2469 = vmatprep.subr.mxu0 0.0
        %2470 = vmatpush1.msra.mxu0 0.0
        %2471 = vmatprep.mubr.f32.mxu0 0.0
        %2472 = vmatmul.mubr.f32.gmra.mrb[0].mxu0 %v2405
        %v2473 = vpop.f32.mrb[0].mxu0
        %v2474 = vadd.f32 0.0, %v2473
        %v2475 = vpop.f32.mrb[0].mxu0
        %2476 = vdwg.mxu0
        %v2477 = vadd.f32 %v2394, %v2474
        %v2478 = vxor.u32 %v2477, 2147483648
        %v2479 = vmul.f32 %v2478, 1.442695
        %v2480 = vpow.pop %v2479
        %v2481 = vadd.f32 %v2480, 1.0
        %v2482 = vrcp.pop %v2481
        %v2483 = vmul.f32 1.0, %v2482
        %v2484 = vadd.f32 %v2474, %v352
        %v2487 = vunpack.c.l.s4 1983009808
        %v2488 = vunpack.c.0.s8 %v2487
        %v2489 = vlaneseq
        %v2490 = vshrl.u32 %v2489, 7
        %v2491 = vsub.s32 %v2488, %v2490
        %v2492 = vrot.slane %v2484, %v2491
        %2493 = vrot.lane.b32.xlu0 %v2492, 112
        %v2494 = vpop.permute.xlu0 %2493
        %v2496 = vmul.f32 %v2483, %v2494
        %2498 = vrot.lane.b32.xlu0 %v2496, 16
        %v2499 = vpop.permute.xlu0 %2498
        %v2501 = vadd.f32 %v2394, %v2499
        %v2502 = vtanh.pop %v2501
        %v2503 = vsub.f32 1.0, %v2483
        %2505 = vrot.lane.b32.xlu0 %v2502, 120
        %v2506 = vpop.permute.xlu0 %2505
        %v2508 = vmul.f32 %v2503, %v2506
        %v2509 = vmul.f32 %v2483, %v2368
        %v2510 = vadd.f32 %v2508, %v2509
        %v2511 = vpack.c.bf16 %v2510, %v2510
        %v2514 = vunpack.c.l.s4 1966171168
        %v2515 = vunpack.c.0.s8 %v2514
        %v2516 = vlaneseq
        %v2517 = vshrl.u32 %v2516, 7
        %v2518 = vsub.s32 %v2515, %v2517
        %v2519 = vrot.slane %v2511, %v2518
        %v2521 = vunpack.c.l.s4 1966171168
        %v2522 = vunpack.c.0.s8 %v2521
        %v2523 = vlaneseq
        %v2524 = vshrl.u32 %v2523, 7
        %v2525 = vsub.s32 %v2522, %v2524
        %v2526 = vrot.slane %v2519, %v2525
        %2527 = vrot.lane.b32.xlu0 %v2526, 120
        %v2528 = vpop.permute.xlu0 %2527
        %s2530 = scalar_lea.vmem %s256, %s2391 [#allocation8]
        %2531 = vst.msk [vmem:[%s2530] sm:$0x1] %vm401, %v2528
        %s2532 = sand.u32 %s109, 1
        %s2533 = scalar_lea.sflag [#allocation4], %s2532
        %s2534 = sand.u32 %s109, 1
        %s2535 = smul.addr %s2534, 16
        %s2536 = scalar_lea.vmem [#allocation8], %s2535
        // Predicated region
        $region45: #{_lambda_.6} parent=31 // pred_check
          %p2537 = pneg %p119
        $region46: #{_lambda_.6} parent=31 // pred_check_branch
          %2539 = sbr.rel (%p2537) target = $region48
        $region47: #{_lambda_.6} parent=31 // pred_region
          %s2541 = ssub.s32 256, 256
          %2542 = vsyncadd %s2533, %s2541
          %s2543 = smul.addr %s23, 16
          %s2544 = smul.addr %s2543, 16
          %s2545 = scalar_lea.hbm %s3, %s2544
          %s2546 = sshll.u32 %s2536, 4
          %s2547 = int_to_ptr.vmem [resolvable:$true] %s2546
          %2552 = dma.vmem_to_hbm [thread:$0]  %s2547, 256, %s2545, %s2533, 16, 16, 1
        $region48: #{_lambda_.6} parent=31 // pred_fallthru
          _
      $region32: #{_lambda_.6} parent=5 // pred_fallthru
        _
      %p2553 = scmp.le.s32.totalorder 2, %s18
      // Predicated region
      $region49: #{_lambda_.6} parent=5 // pred_check
        %p2554 = pneg %p2553
      $region50: #{_lambda_.6} parent=5 // pred_check_branch
        %2556 = sbr.rel (%p2554) target = $region52
      $region51: #{_lambda_.6} parent=5 // pred_region
        %s2557 = ssub.s32 %s18, 2
        // Predicated region
        $region53: #{_lambda_.6} parent=51 // pred_check
          %p2558 = pneg %p125
        $region54: #{_lambda_.6} parent=51 // pred_check_branch
          %2560 = sbr.rel (%p2558) target = $region56
        $region55: #{_lambda_.6} parent=51 // pred_region
          %s2561 = sand.u32 %s110, 1
          %s2562 = scalar_lea.sflag [#allocation4], %s2561
          %s2563 = sand.u32 %s110, 1
          %s2564 = smul.addr %s2563, 16
          %s2565 = scalar_lea.vmem [#allocation8], %s2564
          %2566 = dma.done %s2562, 256
        $region56: #{_lambda_.6} parent=51 // pred_fallthru
          _
      $region52: #{_lambda_.6} parent=5 // pred_fallthru
        _
    $region6: #{_lambda_.6} parent=1 // loop_footer
      %s22 = sadd.s32 1, %s18
    $region7: #{_lambda_.6} parent=1 // loop_footer_branch
      %17 = sbr.rel target = $region3
    $region8: #{_lambda_.6} parent=1 // loop_exit
      _
    %2567 = vsyncpa [#allocation3], 1
    %s2568 = scalar_lea.sflag [#allocation3], 1
    %2569 = vsyncpa %s2568, 1
    %2570 = vsyncpa [#allocation6], 1
    %s2571 = scalar_lea.sflag [#allocation6], 1
    %2572 = vsyncpa %s2571, 1
    %2573 = vsyncpa [#allocation4], 1
    %s2574 = scalar_lea.sflag [#allocation4], 1
    %2575 = vsyncpa %s2574, 1

</llo_original>
